<compile_context>
chip_gen: v7x
topology: tpu7x:2x2x1
jax: 0.10.0
libtpu: 0.0.40
codegen_flags: <defaults>
</compile_context>

<pallas_src>
import functools

import jax
import jax.numpy as jnp
from jax import lax
from jax.experimental import pallas as pl
from jax.experimental.pallas import tpu as pltpu


def _decoder_block_kernel(H, nt, x_ref, w1_ref, b1_ref, w2_ref, b2_ref,
                          o_ref, y_ref, acc1_ref, acc2_ref):
    # x_ref  : (1, TH+4, W+2, Ci) bf16  halo'd, zero-padded input row-tile (NHWC)
    # w1_ref : (3, 3*Ci, Co)      bf16  conv1 weights (BN1 scale folded), tap-row major
    # b1_ref : (1, Co)            f32   folded BN1 bias
    # w2_ref : (3, 3*Co, Cop)     bf16  conv2 weights (BN2 scale folded, Cout padded)
    # b2_ref : (1, Cop)           f32   folded BN2 bias (padded)
    # o_ref  : (1, TH, W, Cop)    f32   lane-dense output tile
    # y_ref  : VMEM (TH+2, W+2, Co) bf16  width-padded conv1 activation (conv2 input)
    # acc1_ref: VMEM ((TH+2)*W, Co)  f32
    # acc2_ref: VMEM (TH*W, Cop)     f32
    TH = o_ref.shape[1]
    W = o_ref.shape[2]
    Cop = o_ref.shape[3]
    Ci = x_ref.shape[3]
    Co = w1_ref.shape[2]
    HP = TH + 2                     # conv1 output rows (incl. 1-row halo for conv2)

    # ---- conv1 (+ folded bn1) + relu : 3 matmuls, K = 3*Ci ------------------
    xt = x_ref[0]                                               # (TH+4, W+2, Ci)
    slab1 = jnp.concatenate(
        [xt[:, 0:W, :], xt[:, 1:W + 1, :], xt[:, 2:W + 2, :]], axis=-1)
    slab1 = slab1.reshape((TH + 4) * W, 3 * Ci)                 # width-im2col
    acc1_ref[...] = jnp.dot(slab1[0:HP * W, :], w1_ref[0],
                            preferred_element_type=jnp.float32)
    for ky in range(1, 3):
        acc1_ref[...] += jnp.dot(slab1[ky * W:(ky + HP) * W, :], w1_ref[ky],
                                 preferred_element_type=jnp.float32)
    y = jnp.maximum(acc1_ref[...] + b1_ref[0], 0.0).reshape(HP, W, Co)

    # rows of the conv2 halo that fall outside the image must be exactly zero
    tile = pl.program_id(0) % nt
    grow = tile * TH - 1 + lax.broadcasted_iota(jnp.int32, (HP, 1, 1), 0)
    y = jnp.where((grow >= 0) & (grow < H), y, 0.0)

    # stage conv2 input in VMEM; only the 1-pixel width border is zeroed (cheap),
    # the interior is fully rewritten every grid step.
    zcol = jnp.zeros((HP, 1, Co), jnp.bfloat16)
    y_ref[:, 0:1, :] = zcol
    y_ref[:, W + 1:W + 2, :] = zcol
    y_ref[:, 1:W + 1, :] = y.astype(jnp.bfloat16)

    # ---- conv2 (+ folded bn2) + relu : 3 matmuls, K = 3*Co ------------------
    yt = y_ref[...]                                             # (TH+2, W+2, Co)
    slab2 = jnp.concatenate(
        [yt[:, 0:W, :], yt[:, 1:W + 1, :], yt[:, 2:W + 2, :]], axis=-1)
    slab2 = slab2.reshape(HP * W, 3 * Co)
    acc2_ref[...] = jnp.dot(slab2[0:TH * W, :], w2_ref[0],
                            preferred_element_type=jnp.float32)
    for ky in range(1, 3):
        acc2_ref[...] += jnp.dot(slab2[ky * W:(ky + TH) * W, :], w2_ref[ky],
                                 preferred_element_type=jnp.float32)
    z = jnp.maximum(acc2_ref[...] + b2_ref[0], 0.0)
    o_ref[0] = z.reshape(TH, W, Cop).astype(o_ref.dtype)


def _pick_row_tile(H):
    """Largest row-tile <= 64 dividing H (bounds VMEM per grid step)."""
    for th in (64, 32, 16, 8):
        if th <= H and H % th == 0:
            return th
    return H


@jax.jit
def decoder_block_forward(x, skip, params):
    """x, skip: NCHW float32.  Returns NCHW float32 (matches the PyTorch module)."""
    N, Cx, H, W = x.shape
    Cs = skip.shape[1]
    Ci = Cx + Cs
    Co = params["w1"].shape[0]
    Cop = ((Co + 127) // 128) * 128          # lane-dense output channel count
    eps = 1e-5
    TH = _pick_row_tile(H)
    nt = H // TH

    # -- glue: concat + NCHW->NHWC, pad (2-row/1-col halo), row-tile, cast bf16 --
    xcat = jnp.transpose(jnp.concatenate([x, skip], axis=1), (0, 2, 3, 1))   # (N,H,W,Ci)
    xpad = jnp.pad(xcat, ((0, 0), (2, 2), (1, 1), (0, 0)))                   # (N,H+4,W+2,Ci)
    xt = jnp.stack([xpad[:, i * TH:i * TH + TH + 4] for i in range(nt)], axis=1)
    xt = xt.reshape(N * nt, TH + 4, W + 2, Ci).astype(jnp.bfloat16)

    # -- glue: fold eval-mode BN scale into conv weights, keep only the bias --
    inv1 = params["g1"] / jnp.sqrt(params["v1"] + eps)                       # (Co,)
    inv2 = params["g2"] / jnp.sqrt(params["v2"] + eps)
    b1 = (params["b1"] - params["m1"] * inv1).reshape(1, Co).astype(jnp.float32)
    b2 = (params["b2"] - params["m2"] * inv2)
    b2 = jnp.pad(b2, (0, Cop - Co)).reshape(1, Cop).astype(jnp.float32)

    # OIHW -> (ky, kx*Cin + cin, cout), matching the kernel's width-im2col packing
    w1 = params["w1"] * inv1[:, None, None, None]
    w1 = jnp.transpose(w1, (2, 3, 1, 0)).reshape(3, 3 * Ci, Co).astype(jnp.bfloat16)
    w2 = params["w2"] * inv2[:, None, None, None]
    w2 = jnp.transpose(w2, (2, 3, 1, 0)).reshape(3, 3 * Co, Co)
    w2 = jnp.pad(w2, ((0, 0), (0, 0), (0, Cop - Co))).astype(jnp.bfloat16)

    kernel = functools.partial(_decoder_block_kernel, H, nt)
    out = pl.pallas_call(
        kernel,
        out_shape=jax.ShapeDtypeStruct((N * nt, TH, W, Cop), jnp.float32),
        grid_spec=pltpu.PrefetchScalarGridSpec(
            num_scalar_prefetch=0,
            grid=(N * nt,),
            in_specs=[
                pl.BlockSpec((1, TH + 4, W + 2, Ci), lambda b: (b, 0, 0, 0)),
                pl.BlockSpec((3, 3 * Ci, Co), lambda b: (0, 0, 0)),
                pl.BlockSpec((1, Co), lambda b: (0, 0)),
                pl.BlockSpec((3, 3 * Co, Cop), lambda b: (0, 0, 0)),
                pl.BlockSpec((1, Cop), lambda b: (0, 0)),
            ],
            out_specs=pl.BlockSpec((1, TH, W, Cop), lambda b: (b, 0, 0, 0)),
            scratch_shapes=[
                pltpu.VMEM((TH + 2, W + 2, Co), jnp.bfloat16),
                pltpu.VMEM(((TH + 2) * W, Co), jnp.float32),
                pltpu.VMEM((TH * W, Cop), jnp.float32),
            ],
        ),
        compiler_params=pltpu.CompilerParams(dimension_semantics=("parallel",)),
    )(xt, w1, b1, w2, b2)

    out = out[..., :Co].reshape(N, H, W, Co)         # drop lane padding, un-tile rows
    return jnp.transpose(out, (0, 3, 1, 2))          # back to NCHW


def _reference_forward(x, skip, params):
    """Pure-JAX f32 reference matching the PyTorch module (eval-mode BN)."""
    eps = 1e-5

    def conv3x3(inp, w):
        return lax.conv_general_dilated(
            inp, w, window_strides=(1, 1), padding=[(1, 1), (1, 1)],
            dimension_numbers=("NCHW", "OIHW", "NCHW"))

    def bn(inp, g, b, m, v):
        return (inp - m[None, :, None, None]) / jnp.sqrt(v[None, :, None, None] + eps) \
            * g[None, :, None, None] + b[None, :, None, None]

    h = jnp.concatenate([x, skip], axis=1)
    h = jnp.maximum(bn(conv3x3(h, params["w1"]),
                       params["g1"], params["b1"], params["m1"], params["v1"]), 0.0)
    h = jnp.maximum(bn(conv3x3(h, params["w2"]),
                       params["g2"], params["b2"], params["m2"], params["v2"]), 0.0)
    return h


def _init_params(key, in_channels, skip_channels, out_channels):
    ci = in_channels + skip_channels
    ks = jax.random.split(key, 8)
    return {
        "w1": jax.random.normal(ks[0], (out_channels, ci, 3, 3), jnp.float32) * 0.1,
        "w2": jax.random.normal(ks[1], (out_channels, out_channels, 3, 3), jnp.float32) * 0.1,
        "g1": jax.random.uniform(ks[2], (out_channels,), jnp.float32, 0.5, 1.5),
        "b1": jax.random.normal(ks[3], (out_channels,), jnp.float32) * 0.1,
        "m1": jax.random.normal(ks[4], (out_channels,), jnp.float32) * 0.1,
        "v1": jax.random.uniform(ks[5], (out_channels,), jnp.float32, 0.5, 1.5),
        "g2": jax.random.uniform(ks[6], (out_channels,), jnp.float32, 0.5, 1.5),
        "b2": jax.random.normal(ks[7], (out_channels,), jnp.float32) * 0.1,
        "m2": jnp.zeros((out_channels,), jnp.float32),
        "v2": jnp.ones((out_channels,), jnp.float32),
    }


if __name__ == "__main__":
    key = jax.random.PRNGKey(0)
    kx, ks, kp = jax.random.split(key, 3)

    N, C_in, C_skip, C_out, H, W = 2, 4, 4, 8, 16, 16
    x = jax.random.normal(kx, (N, C_in, H, W), jnp.float32)
    skip = jax.random.normal(ks, (N, C_skip, H, W), jnp.float32)
    params = _init_params(kp, C_in, C_skip, C_out)

    out = jax.block_until_ready(decoder_block_forward(x, skip, params))
    ref = jax.block_until_ready(_reference_forward(x, skip, params))

    assert out.shape == (N, C_out, H, W)
    err = jnp.max(jnp.abs(out - ref))
    # bf16 MXU inputs with f32 accumulation -> loosened tolerance vs pure-f32 reference
    assert jnp.allclose(out, ref, rtol=5e-2, atol=5e-2), f"max abs diff = {err}"

    print("KERNEL_OK")
</pallas_src>

<mosaic_0001>
module attributes {stable_mosaic.version = 11 : i64} {
  func.func @_decoder_block_kernel(%arg0: i32, %arg1: memref<1x20x18x8xbf16, #tpu.memory_space<vmem>>, %arg2: memref<3x24x8xbf16, #tpu.memory_space<vmem>>, %arg3: memref<1x8xf32, #tpu.memory_space<vmem>>, %arg4: memref<3x24x128xbf16, #tpu.memory_space<vmem>>, %arg5: memref<1x128xf32, #tpu.memory_space<vmem>>, %arg6: memref<1x16x16x128xf32, #tpu.memory_space<vmem>>, %arg7: memref<18x18x8xbf16, #tpu.memory_space<vmem>>, %arg8: memref<288x8xf32, #tpu.memory_space<vmem>>, %arg9: memref<256x128xf32, #tpu.memory_space<vmem>>) attributes {dimension_semantics = [#tpu.dimension_semantics<parallel>], iteration_bounds = array<i64: 2>, scalar_prefetch = 0 : i64, scratch_operands = 3 : i64, tpu.core_type = #tpu.core_type<tc>, window_params = [{transform_indices = @transform_0, window_bounds = array<i64: 1, 20, 18, 8>}, {pipeline_mode = #tpu.pipeline_mode<synchronous>, transform_indices = @transform_1, window_bounds = array<i64: 3, 24, 8>}, {pipeline_mode = #tpu.pipeline_mode<synchronous>, transform_indices = @transform_2, window_bounds = array<i64: 1, 8>}, {pipeline_mode = #tpu.pipeline_mode<synchronous>, transform_indices = @transform_3, window_bounds = array<i64: 3, 24, 128>}, {pipeline_mode = #tpu.pipeline_mode<synchronous>, transform_indices = @transform_4, window_bounds = array<i64: 1, 128>}, {transform_indices = @transform_5, window_bounds = array<i64: 1, 16, 16, 128>}]} {
    %c0 = arith.constant 0 : index
    %c0_0 = arith.constant 0 : index
    %c0_1 = arith.constant 0 : index
    %c0_2 = arith.constant 0 : index
    %0 = vector.load %arg1[%c0, %c0_0, %c0_1, %c0_2] : memref<1x20x18x8xbf16, #tpu.memory_space<vmem>>, vector<1x20x18x8xbf16>
    %1 = vector.shape_cast %0 : vector<1x20x18x8xbf16> to vector<20x18x8xbf16>
    %2 = vector.extract_strided_slice %1 {offsets = [0, 0, 0], sizes = [20, 16, 8], strides = [1, 1, 1]} : vector<20x18x8xbf16> to vector<20x16x8xbf16>
    %3 = vector.extract_strided_slice %1 {offsets = [0, 1, 0], sizes = [20, 16, 8], strides = [1, 1, 1]} : vector<20x18x8xbf16> to vector<20x16x8xbf16>
    %4 = vector.extract_strided_slice %1 {offsets = [0, 2, 0], sizes = [20, 16, 8], strides = [1, 1, 1]} : vector<20x18x8xbf16> to vector<20x16x8xbf16>
    %5 = tpu.concatenate %2, %3, %4 in 2 : vector<20x16x8xbf16>, vector<20x16x8xbf16>, vector<20x16x8xbf16> -> vector<20x16x24xbf16>
    %6 = vector.shape_cast %5 : vector<20x16x24xbf16> to vector<320x24xbf16>
    %7 = vector.extract_strided_slice %6 {offsets = [0, 0], sizes = [288, 24], strides = [1, 1]} : vector<320x24xbf16> to vector<288x24xbf16>
    %c0_3 = arith.constant 0 : index
    %c0_4 = arith.constant 0 : index
    %c0_5 = arith.constant 0 : index
    %8 = vector.load %arg2[%c0_3, %c0_4, %c0_5] : memref<3x24x8xbf16, #tpu.memory_space<vmem>>, vector<1x24x8xbf16>
    %9 = vector.shape_cast %8 : vector<1x24x8xbf16> to vector<24x8xbf16>
    %cst = arith.constant dense<0.000000e+00> : vector<288x8xf32>
    %10 = tpu.matmul %7, %9, %cst {dimension_numbers = #tpu.dot_dimension_numbers<[1], [0], [0], [1], [0, 0, 1, 1], [], []>} : vector<288x24xbf16>, vector<24x8xbf16>, vector<288x8xf32> -> vector<288x8xf32>
    %c0_6 = arith.constant 0 : index
    %c0_7 = arith.constant 0 : index
    %11 = vector.load %arg8[%c0_6, %c0_7] : memref<288x8xf32, #tpu.memory_space<vmem>>, vector<288x8xf32>
    tpu.vector_store %arg8[%c0_6, %c0_7], %10 {strides = array<i32>} : memref<288x8xf32, #tpu.memory_space<vmem>>, vector<288x8xf32>,
    %c0_8 = arith.constant 0 : index
    %c0_9 = arith.constant 0 : index
    %12 = vector.load %arg8[%c0_8, %c0_9] : memref<288x8xf32, #tpu.memory_space<vmem>>, vector<288x8xf32>
    %13 = vector.extract_strided_slice %6 {offsets = [16, 0], sizes = [288, 24], strides = [1, 1]} : vector<320x24xbf16> to vector<288x24xbf16>
    %c1 = arith.constant 1 : index
    %c0_10 = arith.constant 0 : index
    %c0_11 = arith.constant 0 : index
    %14 = vector.load %arg2[%c1, %c0_10, %c0_11] : memref<3x24x8xbf16, #tpu.memory_space<vmem>>, vector<1x24x8xbf16>
    %15 = vector.shape_cast %14 : vector<1x24x8xbf16> to vector<24x8xbf16>
    %cst_12 = arith.constant dense<0.000000e+00> : vector<288x8xf32>
    %16 = tpu.matmul %13, %15, %cst_12 {dimension_numbers = #tpu.dot_dimension_numbers<[1], [0], [0], [1], [0, 0, 1, 1], [], []>} : vector<288x24xbf16>, vector<24x8xbf16>, vector<288x8xf32> -> vector<288x8xf32>
    %17 = arith.addf %12, %16 : vector<288x8xf32>
    %c0_13 = arith.constant 0 : index
    %c0_14 = arith.constant 0 : index
    %18 = vector.load %arg8[%c0_13, %c0_14] : memref<288x8xf32, #tpu.memory_space<vmem>>, vector<288x8xf32>
    tpu.vector_store %arg8[%c0_13, %c0_14], %17 {strides = array<i32>} : memref<288x8xf32, #tpu.memory_space<vmem>>, vector<288x8xf32>,
    %c0_15 = arith.constant 0 : index
    %c0_16 = arith.constant 0 : index
    %19 = vector.load %arg8[%c0_15, %c0_16] : memref<288x8xf32, #tpu.memory_space<vmem>>, vector<288x8xf32>
    %20 = vector.extract_strided_slice %6 {offsets = [32, 0], sizes = [288, 24], strides = [1, 1]} : vector<320x24xbf16> to vector<288x24xbf16>
    %c2 = arith.constant 2 : index
    %c0_17 = arith.constant 0 : index
    %c0_18 = arith.constant 0 : index
    %21 = vector.load %arg2[%c2, %c0_17, %c0_18] : memref<3x24x8xbf16, #tpu.memory_space<vmem>>, vector<1x24x8xbf16>
    %22 = vector.shape_cast %21 : vector<1x24x8xbf16> to vector<24x8xbf16>
    %cst_19 = arith.constant dense<0.000000e+00> : vector<288x8xf32>
    %23 = tpu.matmul %20, %22, %cst_19 {dimension_numbers = #tpu.dot_dimension_numbers<[1], [0], [0], [1], [0, 0, 1, 1], [], []>} : vector<288x24xbf16>, vector<24x8xbf16>, vector<288x8xf32> -> vector<288x8xf32>
    %24 = arith.addf %19, %23 : vector<288x8xf32>
    %c0_20 = arith.constant 0 : index
    %c0_21 = arith.constant 0 : index
    %25 = vector.load %arg8[%c0_20, %c0_21] : memref<288x8xf32, #tpu.memory_space<vmem>>, vector<288x8xf32>
    tpu.vector_store %arg8[%c0_20, %c0_21], %24 {strides = array<i32>} : memref<288x8xf32, #tpu.memory_space<vmem>>, vector<288x8xf32>,
    %c0_22 = arith.constant 0 : index
    %c0_23 = arith.constant 0 : index
    %26 = vector.load %arg8[%c0_22, %c0_23] : memref<288x8xf32, #tpu.memory_space<vmem>>, vector<288x8xf32>
    %c0_24 = arith.constant 0 : index
    %c0_25 = arith.constant 0 : index
    %27 = vector.load %arg3[%c0_24, %c0_25] : memref<1x8xf32, #tpu.memory_space<vmem>>, vector<1x8xf32>
    %28 = vector.shape_cast %27 : vector<1x8xf32> to vector<8xf32>
    %29 = vector.shape_cast %28 : vector<8xf32> to vector<1x8xf32>
    %30 = vector.broadcast %29 : vector<1x8xf32> to vector<288x8xf32>
    %31 = arith.addf %26, %30 : vector<288x8xf32>
    %cst_26 = arith.constant 0.000000e+00 : f32
    %32 = vector.broadcast %cst_26 : f32 to vector<288x8xf32>
    %33 = arith.maximumf %31, %32 : vector<288x8xf32>
    %34 = vector.shape_cast %33 : vector<288x8xf32> to vector<18x16x8xf32>
    %c1_i32 = arith.constant 1 : i32
    %c0_i32 = arith.constant 0 : i32
    %35 = arith.cmpi eq, %c1_i32, %c0_i32 : i32
    %c1_i32_27 = arith.constant 1 : i32
    %36 = arith.select %35, %c1_i32_27, %c1_i32 : i32
    %37 = arith.remsi %arg0, %36 : i32
    %c0_i32_28 = arith.constant 0 : i32
    %38 = arith.cmpi ne, %37, %c0_i32_28 : i32
    %c0_i32_29 = arith.constant 0 : i32
    %39 = arith.cmpi slt, %37, %c0_i32_29 : i32
    %c0_i32_30 = arith.constant 0 : i32
    %40 = arith.cmpi slt, %36, %c0_i32_30 : i32
    %41 = arith.xori %39, %40 : i1
    %42 = arith.andi %41, %38 : i1
    %43 = arith.addi %37, %36 : i32
    %44 = arith.select %42, %43, %37 : i32
    %c16_i32 = arith.constant 16 : i32
    %45 = arith.muli %44, %c16_i32 : i32
    %c1_i32_31 = arith.constant 1 : i32
    %46 = arith.subi %45, %c1_i32_31 : i32
    %47 = tpu.iota {dimensions = array<i32: 0>} : vector<18x1x1xi32>
    %48 = vector.broadcast %46 : i32 to vector<18x1x1xi32>
    %49 = arith.addi %48, %47 : vector<18x1x1xi32>
    %c0_i32_32 = arith.constant 0 : i32
    %50 = vector.broadcast %c0_i32_32 : i32 to vector<18x1x1xi32>
    %51 = arith.cmpi sge, %49, %50 : vector<18x1x1xi32>
    %c16_i32_33 = arith.constant 16 : i32
    %52 = vector.broadcast %c16_i32_33 : i32 to vector<18x1x1xi32>
    %53 = arith.cmpi slt, %49, %52 : vector<18x1x1xi32>
    %54 = arith.andi %51, %53 : vector<18x1x1xi1>
    %cst_34 = arith.constant 0.000000e+00 : f32
    %55 = vector.shape_cast %54 : vector<18x1x1xi1> to vector<18x1x1xi1>
    %56 = vector.broadcast %55 : vector<18x1x1xi1> to vector<18x16x8xi1>
    %57 = vector.broadcast %cst_34 : f32 to vector<18x16x8xf32>
    %58 = arith.select %56, %34, %57 : vector<18x16x8xi1>, vector<18x16x8xf32>
    %cst_35 = arith.constant 0.000000e+00 : bf16
    %59 = vector.broadcast %cst_35 : bf16 to vector<18x1x8xbf16>
    %c0_36 = arith.constant 0 : index
    %c0_37 = arith.constant 0 : index
    %c0_38 = arith.constant 0 : index
    %60 = vector.load %arg7[%c0_36, %c0_37, %c0_38] : memref<18x18x8xbf16, #tpu.memory_space<vmem>>, vector<18x1x8xbf16>
    tpu.vector_store %arg7[%c0_36, %c0_37, %c0_38], %59 {strides = array<i32>} : memref<18x18x8xbf16, #tpu.memory_space<vmem>>, vector<18x1x8xbf16>,
    %c0_39 = arith.constant 0 : index
    %c17 = arith.constant 17 : index
    %c0_40 = arith.constant 0 : index
    %61 = vector.load %arg7[%c0_39, %c17, %c0_40] : memref<18x18x8xbf16, #tpu.memory_space<vmem>>, vector<18x1x8xbf16>
    tpu.vector_store %arg7[%c0_39, %c17, %c0_40], %59 {strides = array<i32>} : memref<18x18x8xbf16, #tpu.memory_space<vmem>>, vector<18x1x8xbf16>,
    %62 = arith.truncf %58 : vector<18x16x8xf32> to vector<18x16x8xbf16>
    %c0_41 = arith.constant 0 : index
    %c1_42 = arith.constant 1 : index
    %c0_43 = arith.constant 0 : index
    %63 = vector.load %arg7[%c0_41, %c1_42, %c0_43] : memref<18x18x8xbf16, #tpu.memory_space<vmem>>, vector<18x16x8xbf16>
    tpu.vector_store %arg7[%c0_41, %c1_42, %c0_43], %62 {strides = array<i32>} : memref<18x18x8xbf16, #tpu.memory_space<vmem>>, vector<18x16x8xbf16>,
    %c0_44 = arith.constant 0 : index
    %c0_45 = arith.constant 0 : index
    %c0_46 = arith.constant 0 : index
    %64 = vector.load %arg7[%c0_44, %c0_45, %c0_46] : memref<18x18x8xbf16, #tpu.memory_space<vmem>>, vector<18x18x8xbf16>
    %65 = vector.extract_strided_slice %64 {offsets = [0, 0, 0], sizes = [18, 16, 8], strides = [1, 1, 1]} : vector<18x18x8xbf16> to vector<18x16x8xbf16>
    %66 = vector.extract_strided_slice %64 {offsets = [0, 1, 0], sizes = [18, 16, 8], strides = [1, 1, 1]} : vector<18x18x8xbf16> to vector<18x16x8xbf16>
    %67 = vector.extract_strided_slice %64 {offsets = [0, 2, 0], sizes = [18, 16, 8], strides = [1, 1, 1]} : vector<18x18x8xbf16> to vector<18x16x8xbf16>
    %68 = tpu.concatenate %65, %66, %67 in 2 : vector<18x16x8xbf16>, vector<18x16x8xbf16>, vector<18x16x8xbf16> -> vector<18x16x24xbf16>
    %69 = vector.shape_cast %68 : vector<18x16x24xbf16> to vector<288x24xbf16>
    %70 = vector.extract_strided_slice %69 {offsets = [0, 0], sizes = [256, 24], strides = [1, 1]} : vector<288x24xbf16> to vector<256x24xbf16>
    %c0_47 = arith.constant 0 : index
    %c0_48 = arith.constant 0 : index
    %c0_49 = arith.constant 0 : index
    %71 = vector.load %arg4[%c0_47, %c0_48, %c0_49] : memref<3x24x128xbf16, #tpu.memory_space<vmem>>, vector<1x24x128xbf16>
    %72 = vector.shape_cast %71 : vector<1x24x128xbf16> to vector<24x128xbf16>
    %cst_50 = arith.constant dense<0.000000e+00> : vector<256x128xf32>
    %73 = tpu.matmul %70, %72, %cst_50 {dimension_numbers = #tpu.dot_dimension_numbers<[1], [0], [0], [1], [0, 0, 1, 1], [], []>} : vector<256x24xbf16>, vector<24x128xbf16>, vector<256x128xf32> -> vector<256x128xf32>
    %c0_51 = arith.constant 0 : index
    %c0_52 = arith.constant 0 : index
    %74 = vector.load %arg9[%c0_51, %c0_52] : memref<256x128xf32, #tpu.memory_space<vmem>>, vector<256x128xf32>
    tpu.vector_store %arg9[%c0_51, %c0_52], %73 {strides = array<i32>} : memref<256x128xf32, #tpu.memory_space<vmem>>, vector<256x128xf32>,
    %c0_53 = arith.constant 0 : index
    %c0_54 = arith.constant 0 : index
    %75 = vector.load %arg9[%c0_53, %c0_54] : memref<256x128xf32, #tpu.memory_space<vmem>>, vector<256x128xf32>
    %76 = vector.extract_strided_slice %69 {offsets = [16, 0], sizes = [256, 24], strides = [1, 1]} : vector<288x24xbf16> to vector<256x24xbf16>
    %c1_55 = arith.constant 1 : index
    %c0_56 = arith.constant 0 : index
    %c0_57 = arith.constant 0 : index
    %77 = vector.load %arg4[%c1_55, %c0_56, %c0_57] : memref<3x24x128xbf16, #tpu.memory_space<vmem>>, vector<1x24x128xbf16>
    %78 = vector.shape_cast %77 : vector<1x24x128xbf16> to vector<24x128xbf16>
    %cst_58 = arith.constant dense<0.000000e+00> : vector<256x128xf32>
    %79 = tpu.matmul %76, %78, %cst_58 {dimension_numbers = #tpu.dot_dimension_numbers<[1], [0], [0], [1], [0, 0, 1, 1], [], []>} : vector<256x24xbf16>, vector<24x128xbf16>, vector<256x128xf32> -> vector<256x128xf32>
    %80 = arith.addf %75, %79 : vector<256x128xf32>
    %c0_59 = arith.constant 0 : index
    %c0_60 = arith.constant 0 : index
    %81 = vector.load %arg9[%c0_59, %c0_60] : memref<256x128xf32, #tpu.memory_space<vmem>>, vector<256x128xf32>
    tpu.vector_store %arg9[%c0_59, %c0_60], %80 {strides = array<i32>} : memref<256x128xf32, #tpu.memory_space<vmem>>, vector<256x128xf32>,
    %c0_61 = arith.constant 0 : index
    %c0_62 = arith.constant 0 : index
    %82 = vector.load %arg9[%c0_61, %c0_62] : memref<256x128xf32, #tpu.memory_space<vmem>>, vector<256x128xf32>
    %83 = vector.extract_strided_slice %69 {offsets = [32, 0], sizes = [256, 24], strides = [1, 1]} : vector<288x24xbf16> to vector<256x24xbf16>
    %c2_63 = arith.constant 2 : index
    %c0_64 = arith.constant 0 : index
    %c0_65 = arith.constant 0 : index
    %84 = vector.load %arg4[%c2_63, %c0_64, %c0_65] : memref<3x24x128xbf16, #tpu.memory_space<vmem>>, vector<1x24x128xbf16>
    %85 = vector.shape_cast %84 : vector<1x24x128xbf16> to vector<24x128xbf16>
    %cst_66 = arith.constant dense<0.000000e+00> : vector<256x128xf32>
    %86 = tpu.matmul %83, %85, %cst_66 {dimension_numbers = #tpu.dot_dimension_numbers<[1], [0], [0], [1], [0, 0, 1, 1], [], []>} : vector<256x24xbf16>, vector<24x128xbf16>, vector<256x128xf32> -> vector<256x128xf32>
    %87 = arith.addf %82, %86 : vector<256x128xf32>
    %c0_67 = arith.constant 0 : index
    %c0_68 = arith.constant 0 : index
    %88 = vector.load %arg9[%c0_67, %c0_68] : memref<256x128xf32, #tpu.memory_space<vmem>>, vector<256x128xf32>
    tpu.vector_store %arg9[%c0_67, %c0_68], %87 {strides = array<i32>} : memref<256x128xf32, #tpu.memory_space<vmem>>, vector<256x128xf32>,
    %c0_69 = arith.constant 0 : index
    %c0_70 = arith.constant 0 : index
    %89 = vector.load %arg9[%c0_69, %c0_70] : memref<256x128xf32, #tpu.memory_space<vmem>>, vector<256x128xf32>
    %c0_71 = arith.constant 0 : index
    %c0_72 = arith.constant 0 : index
    %90 = vector.load %arg5[%c0_71, %c0_72] : memref<1x128xf32, #tpu.memory_space<vmem>>, vector<1x128xf32>
    %91 = vector.shape_cast %90 : vector<1x128xf32> to vector<128xf32>
    %92 = vector.shape_cast %91 : vector<128xf32> to vector<1x128xf32>
    %93 = vector.broadcast %92 : vector<1x128xf32> to vector<256x128xf32>
    %94 = arith.addf %89, %93 : vector<256x128xf32>
    %cst_73 = arith.constant 0.000000e+00 : f32
    %95 = vector.broadcast %cst_73 : f32 to vector<256x128xf32>
    %96 = arith.maximumf %94, %95 : vector<256x128xf32>
    %97 = vector.shape_cast %96 : vector<256x128xf32> to vector<16x16x128xf32>
    %c0_74 = arith.constant 0 : index
    %c0_75 = arith.constant 0 : index
    %c0_76 = arith.constant 0 : index
    %c0_77 = arith.constant 0 : index
    %98 = vector.load %arg6[%c0_74, %c0_75, %c0_76, %c0_77] : memref<1x16x16x128xf32, #tpu.memory_space<vmem>>, vector<1x16x16x128xf32>
    %99 = vector.shape_cast %98 : vector<1x16x16x128xf32> to vector<16x16x128xf32>
    %100 = vector.shape_cast %97 : vector<16x16x128xf32> to vector<1x16x16x128xf32>
    tpu.vector_store %arg6[%c0_74, %c0_75, %c0_76, %c0_77], %100 {strides = array<i32>} : memref<1x16x16x128xf32, #tpu.memory_space<vmem>>, vector<1x16x16x128xf32>,
    return
  }
  func.func @transform_0(%arg0: i32) -> (i32, i32, i32, i32) {
    %c0_i32 = arith.constant 0 : i32
    %c0_i32_0 = arith.constant 0 : i32
    %c0_i32_1 = arith.constant 0 : i32
    %c0_i32_2 = arith.constant 0 : i32
    return %arg0, %c0_i32, %c0_i32_0, %c0_i32_1 : i32, i32, i32, i32
  }
  func.func @transform_1(%arg0: i32) -> (i32, i32, i32) {
    %c0_i32 = arith.constant 0 : i32
    %c0_i32_0 = arith.constant 0 : i32
    %c0_i32_1 = arith.constant 0 : i32
    %c0_i32_2 = arith.constant 0 : i32
    return %c0_i32, %c0_i32_0, %c0_i32_1 : i32, i32, i32
  }
  func.func @transform_2(%arg0: i32) -> (i32, i32) {
    %c0_i32 = arith.constant 0 : i32
    %c0_i32_0 = arith.constant 0 : i32
    %c0_i32_1 = arith.constant 0 : i32
    return %c0_i32, %c0_i32_0 : i32, i32
  }
  func.func @transform_3(%arg0: i32) -> (i32, i32, i32) {
    %c0_i32 = arith.constant 0 : i32
    %c0_i32_0 = arith.constant 0 : i32
    %c0_i32_1 = arith.constant 0 : i32
    %c0_i32_2 = arith.constant 0 : i32
    return %c0_i32, %c0_i32_0, %c0_i32_1 : i32, i32, i32
  }
  func.func @transform_4(%arg0: i32) -> (i32, i32) {
    %c0_i32 = arith.constant 0 : i32
    %c0_i32_0 = arith.constant 0 : i32
    %c0_i32_1 = arith.constant 0 : i32
    return %c0_i32, %c0_i32_0 : i32, i32
  }
  func.func @transform_5(%arg0: i32) -> (i32, i32, i32, i32) {
    %c0_i32 = arith.constant 0 : i32
    %c0_i32_0 = arith.constant 0 : i32
    %c0_i32_1 = arith.constant 0 : i32
    %c0_i32_2 = arith.constant 0 : i32
    return %arg0, %c0_i32, %c0_i32_0, %c0_i32_1 : i32, i32, i32, i32
  }
}

</mosaic_0001>

<llo_original>
// kernel: decoder_block_forward.1
$region0: #{decoder_block_forward.1}
  #allocation0 [shape = 'u32[]', space=smem, size = 0x4, offset = 0x4, fixed_abs, tag = 'smem constant byte address 0x4 - core index']
  #allocation1 [shape = 'u32[144,128]{1,0:T(1,128)}', space=vmem, size = 0x12000, scoped, tag = 'internal scratch']
  #allocation2 [shape = 'bf16[18,18,8]{2,1,0:T(8,128)(2,1)}', space=vmem, size = 0x1b000, scoped, tag = 'scratch operand']
  #allocation3 [shape = 'f32[288,8]{1,0:T(8,128)}', space=vmem, size = 0x24000, scoped, tag = 'scratch operand']
  #allocation4 [shape = 'f32[256,128]{1,0:T(8,128)}', space=vmem, size = 0x20000, scoped, tag = 'scratch operand']
  %s0 = inlined_call_operand.vmem [shape: bf16[2,20,18,8], index: 0, kind: input, shape index: {}]
  %s1 = inlined_call_operand.vmem [shape: bf16[3,24,8], index: 1, kind: input, shape index: {}]
  %s2 = inlined_call_operand.vmem [shape: f32[1,8], index: 2, kind: input, shape index: {}]
  %s3 = inlined_call_operand.vmem [shape: bf16[3,24,128], index: 3, kind: input, shape index: {}]
  %s4 = inlined_call_operand.vmem [shape: f32[1,128], index: 4, kind: input, shape index: {}]
  %s5 = inlined_call_operand.vmem [shape: f32[2,16,16,128], index: 5, kind: output, shape index: {}]
  %s6 = sld [smem:[#allocation0]]
  $region53: #{decoder_block_forward.1} parent=0
    _
  %s8 = ssub.s32 1, %s6
  %s9 = scalar_select 0, %s8, %s6
  loop: start=0, step=1, limit=4
  $region2: #{decoder_block_forward.1} parent=0 // loop_pre_header
    _
  $region3: #{decoder_block_forward.1} parent=0 // loop_header
    %s11 = sphi 0, %s15
    %p12 = scmp.ge.s32.totalorder %s11, 4
    %s21 = sphi 0, %s23
    %s24 = sphi 0, %s21
    %s25 = sphi 0, %s24
    %s41 = sphi 0, %s25
    %s45 = sphi 0, %s45
    %s47 = sphi 0, %s45
    %s48 = sphi 0, %s47
    %s62 = sphi 0, %s48
    %s66 = sphi 0, %s66
    %s68 = sphi 0, %s66
    %s69 = sphi 0, %s68
    %s83 = sphi 0, %s69
    %s87 = sphi 0, %s87
    %s89 = sphi 0, %s87
    %s90 = sphi 0, %s89
    %s104 = sphi 0, %s90
    %s108 = sphi 0, %s108
    %s110 = sphi 0, %s108
    %s111 = sphi 0, %s110
    %s125 = sphi 0, %s111
    %s131 = sphi 0, %s133
    %s134 = sphi 0, %s131
    %s135 = sphi 0, %s134
    %s151 = sphi 0, %s135
  $region4: #{decoder_block_forward.1} parent=0 // loop_header_branch
    %14 = sbr.rel (%p12) target = $region8
  $region5: #{decoder_block_forward.1} parent=0 // loop_body
    %s16 = ssub.s32 %s11, 1
    %s17 = ssub.s32 %s11, 2
    %s18 = sadd.s32 %s11, 1
    %s19 = ssub.s32 %s11, %s18
    %p20 = scmp.eq.s32.totalorder %s19, 0
    %s22 = sadd.s32 %s21, 1
    %s23 = scalar_select %p20, %s21, %s22
    %p26 = pneg %p20
    %p27 = scmp.eq.s32.totalorder %s11, 1
    %p28 = por %p26, %p27
    %p29 = scmp.ne.s32.totalorder %s21, %s24
    %p30 = scmp.eq.s32.totalorder %s11, 0
    %p31 = por %p29, %p30
    %p32 = scmp.ne.s32.totalorder %s21, %s24
    %p33 = scmp.eq.s32.totalorder %s16, 1
    %p34 = por %p32, %p33
    %p35 = scmp.ne.s32.totalorder %s24, %s25
    %p36 = scmp.eq.s32.totalorder %s16, 0
    %p37 = por %p35, %p36
    %p38 = scmp.ne.s32.totalorder %s24, %s25
    %p39 = scmp.eq.s32.totalorder %s17, 1
    %p40 = por %p38, %p39
    %p42 = scmp.ne.s32.totalorder %s25, %s41
    %p43 = scmp.eq.s32.totalorder %s17, 0
    %p44 = por %p42, %p43
    %s46 = sadd.s32 %s45, 1
    %p49 = scmp.eq.s32.totalorder %s11, 1
    %p50 = scmp.ne.s32.totalorder %s45, %s47
    %p51 = scmp.eq.s32.totalorder %s11, 0
    %p52 = por %p50, %p51
    %p53 = scmp.ne.s32.totalorder %s45, %s47
    %p54 = scmp.eq.s32.totalorder %s16, 1
    %p55 = por %p53, %p54
    %p56 = scmp.ne.s32.totalorder %s47, %s48
    %p57 = scmp.eq.s32.totalorder %s16, 0
    %p58 = por %p56, %p57
    %p59 = scmp.ne.s32.totalorder %s47, %s48
    %p60 = scmp.eq.s32.totalorder %s17, 1
    %p61 = por %p59, %p60
    %p63 = scmp.ne.s32.totalorder %s48, %s62
    %p64 = scmp.eq.s32.totalorder %s17, 0
    %p65 = por %p63, %p64
    %s67 = sadd.s32 %s66, 1
    %p70 = scmp.eq.s32.totalorder %s11, 1
    %p71 = scmp.ne.s32.totalorder %s66, %s68
    %p72 = scmp.eq.s32.totalorder %s11, 0
    %p73 = por %p71, %p72
    %p74 = scmp.ne.s32.totalorder %s66, %s68
    %p75 = scmp.eq.s32.totalorder %s16, 1
    %p76 = por %p74, %p75
    %p77 = scmp.ne.s32.totalorder %s68, %s69
    %p78 = scmp.eq.s32.totalorder %s16, 0
    %p79 = por %p77, %p78
    %p80 = scmp.ne.s32.totalorder %s68, %s69
    %p81 = scmp.eq.s32.totalorder %s17, 1
    %p82 = por %p80, %p81
    %p84 = scmp.ne.s32.totalorder %s69, %s83
    %p85 = scmp.eq.s32.totalorder %s17, 0
    %p86 = por %p84, %p85
    %s88 = sadd.s32 %s87, 1
    %p91 = scmp.eq.s32.totalorder %s11, 1
    %p92 = scmp.ne.s32.totalorder %s87, %s89
    %p93 = scmp.eq.s32.totalorder %s11, 0
    %p94 = por %p92, %p93
    %p95 = scmp.ne.s32.totalorder %s87, %s89
    %p96 = scmp.eq.s32.totalorder %s16, 1
    %p97 = por %p95, %p96
    %p98 = scmp.ne.s32.totalorder %s89, %s90
    %p99 = scmp.eq.s32.totalorder %s16, 0
    %p100 = por %p98, %p99
    %p101 = scmp.ne.s32.totalorder %s89, %s90
    %p102 = scmp.eq.s32.totalorder %s17, 1
    %p103 = por %p101, %p102
    %p105 = scmp.ne.s32.totalorder %s90, %s104
    %p106 = scmp.eq.s32.totalorder %s17, 0
    %p107 = por %p105, %p106
    %s109 = sadd.s32 %s108, 1
    %p112 = scmp.eq.s32.totalorder %s11, 1
    %p113 = scmp.ne.s32.totalorder %s108, %s110
    %p114 = scmp.eq.s32.totalorder %s11, 0
    %p115 = por %p113, %p114
    %p116 = scmp.ne.s32.totalorder %s108, %s110
    %p117 = scmp.eq.s32.totalorder %s16, 1
    %p118 = por %p116, %p117
    %p119 = scmp.ne.s32.totalorder %s110, %s111
    %p120 = scmp.eq.s32.totalorder %s16, 0
    %p121 = por %p119, %p120
    %p122 = scmp.ne.s32.totalorder %s110, %s111
    %p123 = scmp.eq.s32.totalorder %s17, 1
    %p124 = por %p122, %p123
    %p126 = scmp.ne.s32.totalorder %s111, %s125
    %p127 = scmp.eq.s32.totalorder %s17, 0
    %p128 = por %p126, %p127
    %s129 = ssub.s32 %s11, %s18
    %p130 = scmp.eq.s32.totalorder %s129, 0
    %s132 = sadd.s32 %s131, 1
    %s133 = scalar_select %p130, %s131, %s132
    %p136 = pneg %p130
    %p137 = scmp.eq.s32.totalorder %s11, 1
    %p138 = por %p136, %p137
    %p139 = scmp.ne.s32.totalorder %s131, %s134
    %p140 = scmp.eq.s32.totalorder %s11, 0
    %p141 = por %p139, %p140
    %p142 = scmp.ne.s32.totalorder %s131, %s134
    %p143 = scmp.eq.s32.totalorder %s16, 1
    %p144 = por %p142, %p143
    %p145 = scmp.ne.s32.totalorder %s134, %s135
    %p146 = scmp.eq.s32.totalorder %s16, 0
    %p147 = por %p145, %p146
    %p148 = scmp.ne.s32.totalorder %s134, %s135
    %p149 = scmp.eq.s32.totalorder %s17, 1
    %p150 = por %p148, %p149
    %p152 = scmp.ne.s32.totalorder %s135, %s151
    %p153 = scmp.eq.s32.totalorder %s17, 0
    %p154 = por %p152, %p153
    %p155 = scmp.le.s32.totalorder 1, %s11
    %p156 = scmp.lt.s32.totalorder %s11, 3
    %p157 = pnand %p155, %p156
    %p158 = pneg %p157
    // Predicated region
    $region9: #{decoder_block_forward.1} parent=5 // pred_check
      _
    $region10: #{decoder_block_forward.1} parent=5 // pred_check_branch
      %160 = sbr.rel (%p157) target = $region12
    $region11: #{decoder_block_forward.1} parent=5 // pred_region
      %s161 = ssub.s32 %s11, 1
      // Predicated region
      $region13: #{decoder_block_forward.1} parent=11 // pred_check
        %p162 = pneg %p58
      $region14: #{decoder_block_forward.1} parent=11 // pred_check_branch
        %164 = sbr.rel (%p162) target = $region16
      $region15: #{decoder_block_forward.1} parent=11 // pred_region
        _
      $region16: #{decoder_block_forward.1} parent=11 // pred_fallthru
        _
      // Predicated region
      $region17: #{decoder_block_forward.1} parent=11 // pred_check
        %p165 = pneg %p79
      $region18: #{decoder_block_forward.1} parent=11 // pred_check_branch
        %167 = sbr.rel (%p165) target = $region20
      $region19: #{decoder_block_forward.1} parent=11 // pred_region
        _
      $region20: #{decoder_block_forward.1} parent=11 // pred_fallthru
        _
      // Predicated region
      $region21: #{decoder_block_forward.1} parent=11 // pred_check
        %p168 = pneg %p100
      $region22: #{decoder_block_forward.1} parent=11 // pred_check_branch
        %170 = sbr.rel (%p168) target = $region24
      $region23: #{decoder_block_forward.1} parent=11 // pred_region
        _
      $region24: #{decoder_block_forward.1} parent=11 // pred_fallthru
        _
      // Predicated region
      $region25: #{decoder_block_forward.1} parent=11 // pred_check
        %p171 = pneg %p121
      $region26: #{decoder_block_forward.1} parent=11 // pred_check_branch
        %173 = sbr.rel (%p171) target = $region28
      $region27: #{decoder_block_forward.1} parent=11 // pred_region
        _
      $region28: #{decoder_block_forward.1} parent=11 // pred_fallthru
        _
    $region12: #{decoder_block_forward.1} parent=5 // pred_fallthru
      _
    %p174 = scmp.lt.s32.totalorder %s11, 2
    // Predicated region
    $region29: #{decoder_block_forward.1} parent=5 // pred_check
      %p175 = pneg %p174
    $region30: #{decoder_block_forward.1} parent=5 // pred_check_branch
      %177 = sbr.rel (%p175) target = $region32
    $region31: #{decoder_block_forward.1} parent=5 // pred_region
      // Predicated region
      $region33: #{decoder_block_forward.1} parent=31 // pred_check
        %p178 = pneg %p31
      $region34: #{decoder_block_forward.1} parent=31 // pred_check_branch
        %180 = sbr.rel (%p178) target = $region36
      $region35: #{decoder_block_forward.1} parent=31 // pred_region
        %p181 = scmp.lt.s32.totalorder %s11, 1
        %s182 = scalar_select %p181, %s11, 1
        %s183 = smul.addr %s182, 60
        %s184 = smul.addr %s183, 4
        %s185 = scalar_lea.vmem %s0, %s184
      $region36: #{decoder_block_forward.1} parent=31 // pred_fallthru
        _
    $region32: #{decoder_block_forward.1} parent=5 // pred_fallthru
      _
    %p186 = scmp.le.s32.totalorder 1, %s11
    %p187 = scmp.lt.s32.totalorder %s11, 3
    %p188 = pnand %p186, %p187
    %p189 = pneg %p188
    // Predicated region
    $region37: #{decoder_block_forward.1} parent=5 // pred_check
      _
    $region38: #{decoder_block_forward.1} parent=5 // pred_check_branch
      %191 = sbr.rel (%p188) target = $region40
    $region39: #{decoder_block_forward.1} parent=5 // pred_region
      %s192 = ssub.s32 %s11, 1
      %p193 = scmp.lt.s32.totalorder %s16, 1
      %s194 = scalar_select %p193, %s16, 1
      %s195 = smul.addr %s194, 60
      %s196 = smul.addr %s195, 4
      %s197 = scalar_lea.vmem %s0, %s196
      %p198 = pneg %p37
      %p199 = pneg %p34
      %p200 = pneg %p58
      %p201 = pneg %p55
      %p202 = pneg %p79
      %p203 = pneg %p76
      %p204 = pneg %p100
      %p205 = pneg %p97
      %p206 = pneg %p121
      %p207 = pneg %p118
      %p208 = pneg %p147
      %p209 = pneg %p144
      %p210 = scmp.lt.s32.totalorder %s16, 1
      %s211 = scalar_select %p210, %s16, 1
      %s212 = smul.addr %s211, 32
      %s213 = smul.addr %s212, 8
      %s214 = scalar_lea.vmem %s5, %s213
      %p215 = scmp.lt.s32.totalorder %s16, 1
      %s216 = scalar_select %p215, %s16, 1
      %s217 = smul.addr %s216, 60
      %s218 = smul.addr %s217, 4
      %s219 = scalar_lea.vmem %s0, %s218
      %p220 = scmp.lt.s32.totalorder %s16, 1
      %s221 = scalar_select %p220, %s16, 1
      %s222 = smul.addr %s221, 32
      %s223 = smul.addr %s222, 8
      %s224 = scalar_lea.vmem %s5, %s223
      %v226 = vld [vmem:[%s219] sm:$0xf]
      %v227 = vld [vmem:[%s219 + $0x4] sm:$0xf]
      %v228 = vld [vmem:[%s219 + $0x8] sm:$0x1]
      %v229 = vld [vmem:[%s219 + $0xc] sm:$0xf]
      %v230 = vld [vmem:[%s219 + $0x10] sm:$0xf]
      %v231 = vld [vmem:[%s219 + $0x14] sm:$0x1]
      %v232 = vld [vmem:[%s219 + $0x18] sm:$0xf]
      %v233 = vld [vmem:[%s219 + $0x1c] sm:$0xf]
      %v234 = vld [vmem:[%s219 + $0x20] sm:$0x1]
      %v235 = vld [vmem:[%s219 + $0x24] sm:$0xf]
      %v236 = vld [vmem:[%s219 + $0x28] sm:$0xf]
      %v237 = vld [vmem:[%s219 + $0x2c] sm:$0x1]
      %v238 = vld [vmem:[%s219 + $0x30] sm:$0xf]
      %v239 = vld [vmem:[%s219 + $0x34] sm:$0xf]
      %v240 = vld [vmem:[%s219 + $0x38] sm:$0x1]
      %v241 = vld [vmem:[%s219 + $0x3c] sm:$0xf]
      %v242 = vld [vmem:[%s219 + $0x40] sm:$0xf]
      %v243 = vld [vmem:[%s219 + $0x44] sm:$0x1]
      %v244 = vld [vmem:[%s219 + $0x48] sm:$0xf]
      %v245 = vld [vmem:[%s219 + $0x4c] sm:$0xf]
      %v246 = vld [vmem:[%s219 + $0x50] sm:$0x1]
      %v247 = vld [vmem:[%s219 + $0x54] sm:$0xf]
      %v248 = vld [vmem:[%s219 + $0x58] sm:$0xf]
      %v249 = vld [vmem:[%s219 + $0x5c] sm:$0x1]
      %v250 = vld [vmem:[%s219 + $0x60] sm:$0xf]
      %v251 = vld [vmem:[%s219 + $0x64] sm:$0xf]
      %v252 = vld [vmem:[%s219 + $0x68] sm:$0x1]
      %v253 = vld [vmem:[%s219 + $0x6c] sm:$0xf]
      %v254 = vld [vmem:[%s219 + $0x70] sm:$0xf]
      %v255 = vld [vmem:[%s219 + $0x74] sm:$0x1]
      %v256 = vld [vmem:[%s219 + $0x78] sm:$0xf]
      %v257 = vld [vmem:[%s219 + $0x7c] sm:$0xf]
      %v258 = vld [vmem:[%s219 + $0x80] sm:$0x1]
      %v259 = vld [vmem:[%s219 + $0x84] sm:$0xf]
      %v260 = vld [vmem:[%s219 + $0x88] sm:$0xf]
      %v261 = vld [vmem:[%s219 + $0x8c] sm:$0x1]
      %v262 = vld [vmem:[%s219 + $0x90] sm:$0xf]
      %v263 = vld [vmem:[%s219 + $0x94] sm:$0xf]
      %v264 = vld [vmem:[%s219 + $0x98] sm:$0x1]
      %v265 = vld [vmem:[%s219 + $0x9c] sm:$0xf]
      %v266 = vld [vmem:[%s219 + $0xa0] sm:$0xf]
      %v267 = vld [vmem:[%s219 + $0xa4] sm:$0x1]
      %v268 = vld [vmem:[%s219 + $0xa8] sm:$0xf]
      %v269 = vld [vmem:[%s219 + $0xac] sm:$0xf]
      %v270 = vld [vmem:[%s219 + $0xb0] sm:$0x1]
      %v271 = vld [vmem:[%s219 + $0xb4] sm:$0xf]
      %v272 = vld [vmem:[%s219 + $0xb8] sm:$0xf]
      %v273 = vld [vmem:[%s219 + $0xbc] sm:$0x1]
      %v274 = vld [vmem:[%s219 + $0xc0] sm:$0xf]
      %v275 = vld [vmem:[%s219 + $0xc4] sm:$0xf]
      %v276 = vld [vmem:[%s219 + $0xc8] sm:$0x1]
      %v277 = vld [vmem:[%s219 + $0xcc] sm:$0xf]
      %v278 = vld [vmem:[%s219 + $0xd0] sm:$0xf]
      %v279 = vld [vmem:[%s219 + $0xd4] sm:$0x1]
      %v280 = vld [vmem:[%s219 + $0xd8] sm:$0xf]
      %v281 = vld [vmem:[%s219 + $0xdc] sm:$0xf]
      %v282 = vld [vmem:[%s219 + $0xe0] sm:$0x1]
      %v283 = vld [vmem:[%s219 + $0xe4] sm:$0xf]
      %v284 = vld [vmem:[%s219 + $0xe8] sm:$0xf]
      %v285 = vld [vmem:[%s219 + $0xec] sm:$0x1]
      %v326 = vunpack.c.l.b16 %v226
      %v327 = vunpack.c.l.b16 %v227
      %v328 = vunpack.c.l.b16 %v229
      %v329 = vunpack.c.l.b16 %v230
      %v330 = vunpack.c.l.b16 %v232
      %v331 = vunpack.c.l.b16 %v233
      %v332 = vunpack.c.l.b16 %v235
      %v333 = vunpack.c.l.b16 %v236
      %v334 = vunpack.c.l.b16 %v238
      %v335 = vunpack.c.l.b16 %v239
      %v336 = vunpack.c.l.b16 %v241
      %v337 = vunpack.c.l.b16 %v242
      %v338 = vunpack.c.l.b16 %v244
      %v339 = vunpack.c.l.b16 %v245
      %v340 = vunpack.c.l.b16 %v247
      %v341 = vunpack.c.l.b16 %v248
      %v342 = vunpack.c.l.b16 %v250
      %v343 = vunpack.c.l.b16 %v251
      %v344 = vunpack.c.l.b16 %v253
      %v345 = vunpack.c.l.b16 %v254
      %v346 = vunpack.c.l.b16 %v256
      %v347 = vunpack.c.l.b16 %v257
      %v348 = vunpack.c.l.b16 %v259
      %v349 = vunpack.c.l.b16 %v260
      %v350 = vunpack.c.l.b16 %v262
      %v351 = vunpack.c.l.b16 %v263
      %v352 = vunpack.c.l.b16 %v265
      %v353 = vunpack.c.l.b16 %v266
      %v354 = vunpack.c.l.b16 %v268
      %v355 = vunpack.c.l.b16 %v269
      %v356 = vunpack.c.l.b16 %v271
      %v357 = vunpack.c.l.b16 %v272
      %v358 = vunpack.c.l.b16 %v274
      %v359 = vunpack.c.l.b16 %v275
      %v360 = vunpack.c.l.b16 %v277
      %v361 = vunpack.c.l.b16 %v278
      %v362 = vunpack.c.l.b16 %v280
      %v363 = vunpack.c.l.b16 %v281
      %v364 = vunpack.c.l.b16 %v283
      %v365 = vunpack.c.l.b16 %v284
      %v366 = vpack.c.b16 %v327, %v326
      %v367 = vpack.c.b16 %v329, %v328
      %v368 = vpack.c.b16 %v331, %v330
      %v369 = vpack.c.b16 %v333, %v332
      %v370 = vpack.c.b16 %v335, %v334
      %v371 = vpack.c.b16 %v337, %v336
      %v372 = vpack.c.b16 %v339, %v338
      %v373 = vpack.c.b16 %v341, %v340
      %v374 = vpack.c.b16 %v343, %v342
      %v375 = vpack.c.b16 %v345, %v344
      %v376 = vpack.c.b16 %v347, %v346
      %v377 = vpack.c.b16 %v349, %v348
      %v378 = vpack.c.b16 %v351, %v350
      %v379 = vpack.c.b16 %v353, %v352
      %v380 = vpack.c.b16 %v355, %v354
      %v381 = vpack.c.b16 %v357, %v356
      %v382 = vpack.c.b16 %v359, %v358
      %v383 = vpack.c.b16 %v361, %v360
      %v384 = vpack.c.b16 %v363, %v362
      %v385 = vpack.c.b16 %v365, %v364
      %v406 = vunpack.c.l.b16 %v228
      %v407 = vunpack.c.l.b16 %v231
      %v408 = vunpack.c.l.b16 %v234
      %v409 = vunpack.c.l.b16 %v237
      %v410 = vunpack.c.l.b16 %v240
      %v411 = vunpack.c.l.b16 %v243
      %v412 = vunpack.c.l.b16 %v246
      %v413 = vunpack.c.l.b16 %v249
      %v414 = vunpack.c.l.b16 %v252
      %v415 = vunpack.c.l.b16 %v255
      %v416 = vunpack.c.l.b16 %v258
      %v417 = vunpack.c.l.b16 %v261
      %v418 = vunpack.c.l.b16 %v264
      %v419 = vunpack.c.l.b16 %v267
      %v420 = vunpack.c.l.b16 %v270
      %v421 = vunpack.c.l.b16 %v273
      %v422 = vunpack.c.l.b16 %v276
      %v423 = vunpack.c.l.b16 %v279
      %v424 = vunpack.c.l.b16 %v282
      %v425 = vunpack.c.l.b16 %v285
      %v426 = vpack.c.b16 %v406, %v406
      %v427 = vpack.c.b16 %v407, %v407
      %v428 = vpack.c.b16 %v408, %v408
      %v429 = vpack.c.b16 %v409, %v409
      %v430 = vpack.c.b16 %v410, %v410
      %v431 = vpack.c.b16 %v411, %v411
      %v432 = vpack.c.b16 %v412, %v412
      %v433 = vpack.c.b16 %v413, %v413
      %v434 = vpack.c.b16 %v414, %v414
      %v435 = vpack.c.b16 %v415, %v415
      %v436 = vpack.c.b16 %v416, %v416
      %v437 = vpack.c.b16 %v417, %v417
      %v438 = vpack.c.b16 %v418, %v418
      %v439 = vpack.c.b16 %v419, %v419
      %v440 = vpack.c.b16 %v420, %v420
      %v441 = vpack.c.b16 %v421, %v421
      %v442 = vpack.c.b16 %v422, %v422
      %v443 = vpack.c.b16 %v423, %v423
      %v444 = vpack.c.b16 %v424, %v424
      %v445 = vpack.c.b16 %v425, %v425
      %vm446 = vsmask.f32 7424
      %v448 = vshrl.u32 %v366, 16
      %v450 = vshll.u32 %v366, 16
      %v452 = vrot.slane %v450, 1
      %v453 = vor.u32 %v448, %v452
      %v455 = vshll.u32 %v426, 16
      %v457 = vrot.slane %v455, 1
      %v458 = vsel %vm446, %v453, %v457
      %v460 = vshrl.u32 %v367, 16
      %v462 = vshll.u32 %v367, 16
      %v464 = vrot.slane %v462, 1
      %v465 = vor.u32 %v460, %v464
      %v467 = vshll.u32 %v427, 16
      %v469 = vrot.slane %v467, 1
      %v470 = vsel %vm446, %v465, %v469
      %v472 = vshrl.u32 %v368, 16
      %v474 = vshll.u32 %v368, 16
      %v476 = vrot.slane %v474, 1
      %v477 = vor.u32 %v472, %v476
      %v479 = vshll.u32 %v428, 16
      %v481 = vrot.slane %v479, 1
      %v482 = vsel %vm446, %v477, %v481
      %v484 = vshrl.u32 %v369, 16
      %v486 = vshll.u32 %v369, 16
      %v488 = vrot.slane %v486, 1
      %v489 = vor.u32 %v484, %v488
      %v491 = vshll.u32 %v429, 16
      %v493 = vrot.slane %v491, 1
      %v494 = vsel %vm446, %v489, %v493
      %v496 = vshrl.u32 %v370, 16
      %v498 = vshll.u32 %v370, 16
      %v500 = vrot.slane %v498, 1
      %v501 = vor.u32 %v496, %v500
      %v503 = vshll.u32 %v430, 16
      %v505 = vrot.slane %v503, 1
      %v506 = vsel %vm446, %v501, %v505
      %v508 = vshrl.u32 %v371, 16
      %v510 = vshll.u32 %v371, 16
      %v512 = vrot.slane %v510, 1
      %v513 = vor.u32 %v508, %v512
      %v515 = vshll.u32 %v431, 16
      %v517 = vrot.slane %v515, 1
      %v518 = vsel %vm446, %v513, %v517
      %v520 = vshrl.u32 %v372, 16
      %v522 = vshll.u32 %v372, 16
      %v524 = vrot.slane %v522, 1
      %v525 = vor.u32 %v520, %v524
      %v527 = vshll.u32 %v432, 16
      %v529 = vrot.slane %v527, 1
      %v530 = vsel %vm446, %v525, %v529
      %v532 = vshrl.u32 %v373, 16
      %v534 = vshll.u32 %v373, 16
      %v536 = vrot.slane %v534, 1
      %v537 = vor.u32 %v532, %v536
      %v539 = vshll.u32 %v433, 16
      %v541 = vrot.slane %v539, 1
      %v542 = vsel %vm446, %v537, %v541
      %v544 = vshrl.u32 %v374, 16
      %v546 = vshll.u32 %v374, 16
      %v548 = vrot.slane %v546, 1
      %v549 = vor.u32 %v544, %v548
      %v551 = vshll.u32 %v434, 16
      %v553 = vrot.slane %v551, 1
      %v554 = vsel %vm446, %v549, %v553
      %v556 = vshrl.u32 %v375, 16
      %v558 = vshll.u32 %v375, 16
      %v560 = vrot.slane %v558, 1
      %v561 = vor.u32 %v556, %v560
      %v563 = vshll.u32 %v435, 16
      %v565 = vrot.slane %v563, 1
      %v566 = vsel %vm446, %v561, %v565
      %v568 = vshrl.u32 %v376, 16
      %v570 = vshll.u32 %v376, 16
      %v572 = vrot.slane %v570, 1
      %v573 = vor.u32 %v568, %v572
      %v575 = vshll.u32 %v436, 16
      %v577 = vrot.slane %v575, 1
      %v578 = vsel %vm446, %v573, %v577
      %v580 = vshrl.u32 %v377, 16
      %v582 = vshll.u32 %v377, 16
      %v584 = vrot.slane %v582, 1
      %v585 = vor.u32 %v580, %v584
      %v587 = vshll.u32 %v437, 16
      %v589 = vrot.slane %v587, 1
      %v590 = vsel %vm446, %v585, %v589
      %v592 = vshrl.u32 %v378, 16
      %v594 = vshll.u32 %v378, 16
      %v596 = vrot.slane %v594, 1
      %v597 = vor.u32 %v592, %v596
      %v599 = vshll.u32 %v438, 16
      %v601 = vrot.slane %v599, 1
      %v602 = vsel %vm446, %v597, %v601
      %v604 = vshrl.u32 %v379, 16
      %v606 = vshll.u32 %v379, 16
      %v608 = vrot.slane %v606, 1
      %v609 = vor.u32 %v604, %v608
      %v611 = vshll.u32 %v439, 16
      %v613 = vrot.slane %v611, 1
      %v614 = vsel %vm446, %v609, %v613
      %v616 = vshrl.u32 %v380, 16
      %v618 = vshll.u32 %v380, 16
      %v620 = vrot.slane %v618, 1
      %v621 = vor.u32 %v616, %v620
      %v623 = vshll.u32 %v440, 16
      %v625 = vrot.slane %v623, 1
      %v626 = vsel %vm446, %v621, %v625
      %v628 = vshrl.u32 %v381, 16
      %v630 = vshll.u32 %v381, 16
      %v632 = vrot.slane %v630, 1
      %v633 = vor.u32 %v628, %v632
      %v635 = vshll.u32 %v441, 16
      %v637 = vrot.slane %v635, 1
      %v638 = vsel %vm446, %v633, %v637
      %v640 = vshrl.u32 %v382, 16
      %v642 = vshll.u32 %v382, 16
      %v644 = vrot.slane %v642, 1
      %v645 = vor.u32 %v640, %v644
      %v647 = vshll.u32 %v442, 16
      %v649 = vrot.slane %v647, 1
      %v650 = vsel %vm446, %v645, %v649
      %v652 = vshrl.u32 %v383, 16
      %v654 = vshll.u32 %v383, 16
      %v656 = vrot.slane %v654, 1
      %v657 = vor.u32 %v652, %v656
      %v659 = vshll.u32 %v443, 16
      %v661 = vrot.slane %v659, 1
      %v662 = vsel %vm446, %v657, %v661
      %v664 = vshrl.u32 %v384, 16
      %v666 = vshll.u32 %v384, 16
      %v668 = vrot.slane %v666, 1
      %v669 = vor.u32 %v664, %v668
      %v671 = vshll.u32 %v444, 16
      %v673 = vrot.slane %v671, 1
      %v674 = vsel %vm446, %v669, %v673
      %v676 = vshrl.u32 %v385, 16
      %v678 = vshll.u32 %v385, 16
      %v680 = vrot.slane %v678, 1
      %v681 = vor.u32 %v676, %v680
      %v683 = vshll.u32 %v445, 16
      %v685 = vrot.slane %v683, 1
      %v686 = vsel %vm446, %v681, %v685
      %687 = vrot.lane.b32.xlu0 %v458, 8
      %v688 = vpop.permute.xlu0 %687
      %689 = vrot.lane.b32.xlu0 %v470, 8
      %v690 = vpop.permute.xlu0 %689
      %691 = vrot.lane.b32.xlu0 %v482, 8
      %v692 = vpop.permute.xlu0 %691
      %693 = vrot.lane.b32.xlu0 %v494, 8
      %v694 = vpop.permute.xlu0 %693
      %695 = vrot.lane.b32.xlu0 %v506, 8
      %v696 = vpop.permute.xlu0 %695
      %697 = vrot.lane.b32.xlu0 %v518, 8
      %v698 = vpop.permute.xlu0 %697
      %699 = vrot.lane.b32.xlu0 %v530, 8
      %v700 = vpop.permute.xlu0 %699
      %701 = vrot.lane.b32.xlu0 %v542, 8
      %v702 = vpop.permute.xlu0 %701
      %703 = vrot.lane.b32.xlu0 %v554, 8
      %v704 = vpop.permute.xlu0 %703
      %705 = vrot.lane.b32.xlu0 %v566, 8
      %v706 = vpop.permute.xlu0 %705
      %707 = vrot.lane.b32.xlu0 %v578, 8
      %v708 = vpop.permute.xlu0 %707
      %709 = vrot.lane.b32.xlu0 %v590, 8
      %v710 = vpop.permute.xlu0 %709
      %711 = vrot.lane.b32.xlu0 %v602, 8
      %v712 = vpop.permute.xlu0 %711
      %713 = vrot.lane.b32.xlu0 %v614, 8
      %v714 = vpop.permute.xlu0 %713
      %715 = vrot.lane.b32.xlu0 %v626, 8
      %v716 = vpop.permute.xlu0 %715
      %717 = vrot.lane.b32.xlu0 %v638, 8
      %v718 = vpop.permute.xlu0 %717
      %719 = vrot.lane.b32.xlu0 %v650, 8
      %v720 = vpop.permute.xlu0 %719
      %721 = vrot.lane.b32.xlu0 %v662, 8
      %v722 = vpop.permute.xlu0 %721
      %723 = vrot.lane.b32.xlu0 %v674, 8
      %v724 = vpop.permute.xlu0 %723
      %725 = vrot.lane.b32.xlu0 %v686, 8
      %v726 = vpop.permute.xlu0 %725
      %vm727 = vcmask 1046528
      %v728 = vrot.slane %v366, 1
      %v729 = vrot.slane %v426, 1
      %v730 = vsel %vm727, %v728, %v729
      %v731 = vrot.slane %v367, 1
      %v732 = vrot.slane %v427, 1
      %v733 = vsel %vm727, %v731, %v732
      %v734 = vrot.slane %v368, 1
      %v735 = vrot.slane %v428, 1
      %v736 = vsel %vm727, %v734, %v735
      %v737 = vrot.slane %v369, 1
      %v738 = vrot.slane %v429, 1
      %v739 = vsel %vm727, %v737, %v738
      %v740 = vrot.slane %v370, 1
      %v741 = vrot.slane %v430, 1
      %v742 = vsel %vm727, %v740, %v741
      %v743 = vrot.slane %v371, 1
      %v744 = vrot.slane %v431, 1
      %v745 = vsel %vm727, %v743, %v744
      %v746 = vrot.slane %v372, 1
      %v747 = vrot.slane %v432, 1
      %v748 = vsel %vm727, %v746, %v747
      %v749 = vrot.slane %v373, 1
      %v750 = vrot.slane %v433, 1
      %v751 = vsel %vm727, %v749, %v750
      %v752 = vrot.slane %v374, 1
      %v753 = vrot.slane %v434, 1
      %v754 = vsel %vm727, %v752, %v753
      %v755 = vrot.slane %v375, 1
      %v756 = vrot.slane %v435, 1
      %v757 = vsel %vm727, %v755, %v756
      %v758 = vrot.slane %v376, 1
      %v759 = vrot.slane %v436, 1
      %v760 = vsel %vm727, %v758, %v759
      %v761 = vrot.slane %v377, 1
      %v762 = vrot.slane %v437, 1
      %v763 = vsel %vm727, %v761, %v762
      %v764 = vrot.slane %v378, 1
      %v765 = vrot.slane %v438, 1
      %v766 = vsel %vm727, %v764, %v765
      %v767 = vrot.slane %v379, 1
      %v768 = vrot.slane %v439, 1
      %v769 = vsel %vm727, %v767, %v768
      %v770 = vrot.slane %v380, 1
      %v771 = vrot.slane %v440, 1
      %v772 = vsel %vm727, %v770, %v771
      %v773 = vrot.slane %v381, 1
      %v774 = vrot.slane %v441, 1
      %v775 = vsel %vm727, %v773, %v774
      %v776 = vrot.slane %v382, 1
      %v777 = vrot.slane %v442, 1
      %v778 = vsel %vm727, %v776, %v777
      %v779 = vrot.slane %v383, 1
      %v780 = vrot.slane %v443, 1
      %v781 = vsel %vm727, %v779, %v780
      %v782 = vrot.slane %v384, 1
      %v783 = vrot.slane %v444, 1
      %v784 = vsel %vm727, %v782, %v783
      %v785 = vrot.slane %v385, 1
      %v786 = vrot.slane %v445, 1
      %v787 = vsel %vm727, %v785, %v786
      %788 = vrot.lane.b32.xlu0 %v730, 16
      %v789 = vpop.permute.xlu0 %788
      %790 = vrot.lane.b32.xlu0 %v733, 16
      %v791 = vpop.permute.xlu0 %790
      %792 = vrot.lane.b32.xlu0 %v736, 16
      %v793 = vpop.permute.xlu0 %792
      %794 = vrot.lane.b32.xlu0 %v739, 16
      %v795 = vpop.permute.xlu0 %794
      %796 = vrot.lane.b32.xlu0 %v742, 16
      %v797 = vpop.permute.xlu0 %796
      %798 = vrot.lane.b32.xlu0 %v745, 16
      %v799 = vpop.permute.xlu0 %798
      %800 = vrot.lane.b32.xlu0 %v748, 16
      %v801 = vpop.permute.xlu0 %800
      %802 = vrot.lane.b32.xlu0 %v751, 16
      %v803 = vpop.permute.xlu0 %802
      %804 = vrot.lane.b32.xlu0 %v754, 16
      %v805 = vpop.permute.xlu0 %804
      %806 = vrot.lane.b32.xlu0 %v757, 16
      %v807 = vpop.permute.xlu0 %806
      %808 = vrot.lane.b32.xlu0 %v760, 16
      %v809 = vpop.permute.xlu0 %808
      %810 = vrot.lane.b32.xlu0 %v763, 16
      %v811 = vpop.permute.xlu0 %810
      %812 = vrot.lane.b32.xlu0 %v766, 16
      %v813 = vpop.permute.xlu0 %812
      %814 = vrot.lane.b32.xlu0 %v769, 16
      %v815 = vpop.permute.xlu0 %814
      %816 = vrot.lane.b32.xlu0 %v772, 16
      %v817 = vpop.permute.xlu0 %816
      %818 = vrot.lane.b32.xlu0 %v775, 16
      %v819 = vpop.permute.xlu0 %818
      %820 = vrot.lane.b32.xlu0 %v778, 16
      %v821 = vpop.permute.xlu0 %820
      %822 = vrot.lane.b32.xlu0 %v781, 16
      %v823 = vpop.permute.xlu0 %822
      %824 = vrot.lane.b32.xlu0 %v784, 16
      %v825 = vpop.permute.xlu0 %824
      %826 = vrot.lane.b32.xlu0 %v787, 16
      %v827 = vpop.permute.xlu0 %826
      %vm828 = vcmask 64512
      %v830 = vsel %vm828, %v366, %v688
      %v832 = vsel %vm828, %v367, %v690
      %v834 = vsel %vm828, %v368, %v692
      %v836 = vsel %vm828, %v369, %v694
      %v838 = vsel %vm828, %v370, %v696
      %v840 = vsel %vm828, %v371, %v698
      %v842 = vsel %vm828, %v372, %v700
      %v844 = vsel %vm828, %v373, %v702
      %v846 = vsel %vm828, %v374, %v704
      %v848 = vsel %vm828, %v375, %v706
      %v850 = vsel %vm828, %v376, %v708
      %v852 = vsel %vm828, %v377, %v710
      %v854 = vsel %vm828, %v378, %v712
      %v856 = vsel %vm828, %v379, %v714
      %v858 = vsel %vm828, %v380, %v716
      %v860 = vsel %vm828, %v381, %v718
      %v862 = vsel %vm828, %v382, %v720
      %v864 = vsel %vm828, %v383, %v722
      %v866 = vsel %vm828, %v384, %v724
      %v868 = vsel %vm828, %v385, %v726
      %vm869 = vcmask 130048
      %v871 = vsel %vm869, %v830, %v789
      %v873 = vsel %vm869, %v832, %v791
      %v875 = vsel %vm869, %v834, %v793
      %v877 = vsel %vm869, %v836, %v795
      %v879 = vsel %vm869, %v838, %v797
      %v881 = vsel %vm869, %v840, %v799
      %v883 = vsel %vm869, %v842, %v801
      %v885 = vsel %vm869, %v844, %v803
      %v887 = vsel %vm869, %v846, %v805
      %v889 = vsel %vm869, %v848, %v807
      %v891 = vsel %vm869, %v850, %v809
      %v893 = vsel %vm869, %v852, %v811
      %v895 = vsel %vm869, %v854, %v813
      %v897 = vsel %vm869, %v856, %v815
      %v899 = vsel %vm869, %v858, %v817
      %v901 = vsel %vm869, %v860, %v819
      %v903 = vsel %vm869, %v862, %v821
      %v905 = vsel %vm869, %v864, %v823
      %v907 = vsel %vm869, %v866, %v825
      %v909 = vsel %vm869, %v868, %v827
      %v910 = vld [vmem:[%s1] sm:$0xf]
      %v911 = vld [vmem:[%s1 + $0x4] sm:$0xf]
      %v912 = vld [vmem:[%s1 + $0x8] sm:$0xf]
      %v916 = vunpack.c.l.b16 %v910
      %v917 = vunpack.c.l.b16 %v911
      %v918 = vunpack.c.l.b16 %v912
      %v919 = vpack.c.b16 %v917, %v916
      %v920 = vpack.c.b16 %v918, %v918
      %vm922 = vcmask 195584
      %v923 = vsel %vm922, %v871, 0
      %v925 = vsel %vm922, %v873, 0
      %v927 = vsel %vm922, %v875, 0
      %v929 = vsel %vm922, %v877, 0
      %v931 = vsel %vm922, %v879, 0
      %v933 = vsel %vm922, %v881, 0
      %v935 = vsel %vm922, %v883, 0
      %v937 = vsel %vm922, %v885, 0
      %v939 = vsel %vm922, %v887, 0
      %v941 = vsel %vm922, %v889, 0
      %v943 = vsel %vm922, %v891, 0
      %v945 = vsel %vm922, %v893, 0
      %v947 = vsel %vm922, %v895, 0
      %v949 = vsel %vm922, %v897, 0
      %v951 = vsel %vm922, %v899, 0
      %v953 = vsel %vm922, %v901, 0
      %v955 = vsel %vm922, %v903, 0
      %v957 = vsel %vm922, %v905, 0
      %vm959 = vcmask 1043456
      %v961 = vsel %vm959, %v920, 0
      %963 = vmatprep.subr.bf16.mxu0 0
      %964 = vmatpush1.bf16.msra.mxu0 %v919
      %965 = vmatprep.subr.bf16.mxu0 0
      %966 = vmatpush1.bf16.msra.mxu0 %v961
      %967 = vmatprep.subr.bf16.mxu0 0
      %968 = vmatpush1.bf16.msra.mxu0 0
      %969 = vmatprep.subr.bf16.mxu0 0
      %970 = vmatpush1.bf16.msra.mxu0 0
      %971 = vmatprep.subr.bf16.mxu0 0
      %972 = vmatpush1.bf16.msra.mxu0 0
      %973 = vmatprep.subr.bf16.mxu0 0
      %974 = vmatpush1.bf16.msra.mxu0 0
      %975 = vmatprep.subr.bf16.mxu0 0
      %976 = vmatpush1.bf16.msra.mxu0 0
      %977 = vmatprep.subr.bf16.mxu0 0
      %978 = vmatpush1.bf16.msra.mxu0 0
      %979 = vmatprep.subr.bf16.mxu0 0
      %980 = vmatpush1.bf16.msra.mxu0 0
      %981 = vmatprep.subr.bf16.mxu0 0
      %982 = vmatpush1.bf16.msra.mxu0 0
      %983 = vmatprep.subr.bf16.mxu0 0
      %984 = vmatpush1.bf16.msra.mxu0 0
      %985 = vmatprep.subr.bf16.mxu0 0
      %986 = vmatpush1.bf16.msra.mxu0 0
      %987 = vmatprep.subr.bf16.mxu0 0
      %988 = vmatpush1.bf16.msra.mxu0 0
      %989 = vmatprep.subr.bf16.mxu0 0
      %990 = vmatpush1.bf16.msra.mxu0 0
      %991 = vmatprep.subr.bf16.mxu0 0
      %992 = vmatpush1.bf16.msra.mxu0 0
      %993 = vmatprep.subr.bf16.mxu0 0
      %994 = vmatpush1.bf16.msra.mxu0 0
      %995 = vmatprep.mubr.bf16.mxu0 0
      %996 = vmatmul.mubr.bf16.gmra.mrb[0].mxu0 %v923
      %v997 = vpop.f32.mrb[0].mxu0
      %v998 = vadd.f32 0.0, %v997
      %v999 = vpop.f32.mrb[0].mxu0
      %v1000 = vpop.f32.mrb[0].mxu0
      %v1001 = vadd.f32 0.0, %v1000
      %v1002 = vpop.f32.mrb[0].mxu0
      %1003 = vmatprep.mubr.bf16.mxu0 0
      %1004 = vmatmul.mubr.bf16.gmra.mrb[0].mxu0 %v925
      %v1005 = vpop.f32.mrb[0].mxu0
      %v1006 = vadd.f32 0.0, %v1005
      %v1007 = vpop.f32.mrb[0].mxu0
      %v1008 = vpop.f32.mrb[0].mxu0
      %v1009 = vadd.f32 0.0, %v1008
      %v1010 = vpop.f32.mrb[0].mxu0
      %1011 = vmatprep.mubr.bf16.mxu0 0
      %1012 = vmatmul.mubr.bf16.gmra.mrb[0].mxu0 %v927
      %v1013 = vpop.f32.mrb[0].mxu0
      %v1014 = vadd.f32 0.0, %v1013
      %v1015 = vpop.f32.mrb[0].mxu0
      %v1016 = vpop.f32.mrb[0].mxu0
      %v1017 = vadd.f32 0.0, %v1016
      %v1018 = vpop.f32.mrb[0].mxu0
      %1019 = vmatprep.mubr.bf16.mxu0 0
      %1020 = vmatmul.mubr.bf16.gmra.mrb[0].mxu0 %v929
      %v1021 = vpop.f32.mrb[0].mxu0
      %v1022 = vadd.f32 0.0, %v1021
      %v1023 = vpop.f32.mrb[0].mxu0
      %v1024 = vpop.f32.mrb[0].mxu0
      %v1025 = vadd.f32 0.0, %v1024
      %v1026 = vpop.f32.mrb[0].mxu0
      %1027 = vmatprep.mubr.bf16.mxu0 0
      %1028 = vmatmul.mubr.bf16.gmra.mrb[0].mxu0 %v931
      %v1029 = vpop.f32.mrb[0].mxu0
      %v1030 = vadd.f32 0.0, %v1029
      %v1031 = vpop.f32.mrb[0].mxu0
      %v1032 = vpop.f32.mrb[0].mxu0
      %v1033 = vadd.f32 0.0, %v1032
      %v1034 = vpop.f32.mrb[0].mxu0
      %1035 = vmatprep.mubr.bf16.mxu0 0
      %1036 = vmatmul.mubr.bf16.gmra.mrb[0].mxu0 %v933
      %v1037 = vpop.f32.mrb[0].mxu0
      %v1038 = vadd.f32 0.0, %v1037
      %v1039 = vpop.f32.mrb[0].mxu0
      %v1040 = vpop.f32.mrb[0].mxu0
      %v1041 = vadd.f32 0.0, %v1040
      %v1042 = vpop.f32.mrb[0].mxu0
      %1043 = vmatprep.mubr.bf16.mxu0 0
      %1044 = vmatmul.mubr.bf16.gmra.mrb[0].mxu0 %v935
      %v1045 = vpop.f32.mrb[0].mxu0
      %v1046 = vadd.f32 0.0, %v1045
      %v1047 = vpop.f32.mrb[0].mxu0
      %v1048 = vpop.f32.mrb[0].mxu0
      %v1049 = vadd.f32 0.0, %v1048
      %v1050 = vpop.f32.mrb[0].mxu0
      %1051 = vmatprep.mubr.bf16.mxu0 0
      %1052 = vmatmul.mubr.bf16.gmra.mrb[0].mxu0 %v937
      %v1053 = vpop.f32.mrb[0].mxu0
      %v1054 = vadd.f32 0.0, %v1053
      %v1055 = vpop.f32.mrb[0].mxu0
      %v1056 = vpop.f32.mrb[0].mxu0
      %v1057 = vadd.f32 0.0, %v1056
      %v1058 = vpop.f32.mrb[0].mxu0
      %1059 = vmatprep.mubr.bf16.mxu0 0
      %1060 = vmatmul.mubr.bf16.gmra.mrb[0].mxu0 %v939
      %v1061 = vpop.f32.mrb[0].mxu0
      %v1062 = vadd.f32 0.0, %v1061
      %v1063 = vpop.f32.mrb[0].mxu0
      %v1064 = vpop.f32.mrb[0].mxu0
      %v1065 = vadd.f32 0.0, %v1064
      %v1066 = vpop.f32.mrb[0].mxu0
      %1067 = vmatprep.mubr.bf16.mxu0 0
      %1068 = vmatmul.mubr.bf16.gmra.mrb[0].mxu0 %v941
      %v1069 = vpop.f32.mrb[0].mxu0
      %v1070 = vadd.f32 0.0, %v1069
      %v1071 = vpop.f32.mrb[0].mxu0
      %v1072 = vpop.f32.mrb[0].mxu0
      %v1073 = vadd.f32 0.0, %v1072
      %v1074 = vpop.f32.mrb[0].mxu0
      %1075 = vmatprep.mubr.bf16.mxu0 0
      %1076 = vmatmul.mubr.bf16.gmra.mrb[0].mxu0 %v943
      %v1077 = vpop.f32.mrb[0].mxu0
      %v1078 = vadd.f32 0.0, %v1077
      %v1079 = vpop.f32.mrb[0].mxu0
      %v1080 = vpop.f32.mrb[0].mxu0
      %v1081 = vadd.f32 0.0, %v1080
      %v1082 = vpop.f32.mrb[0].mxu0
      %1083 = vmatprep.mubr.bf16.mxu0 0
      %1084 = vmatmul.mubr.bf16.gmra.mrb[0].mxu0 %v945
      %v1085 = vpop.f32.mrb[0].mxu0
      %v1086 = vadd.f32 0.0, %v1085
      %v1087 = vpop.f32.mrb[0].mxu0
      %v1088 = vpop.f32.mrb[0].mxu0
      %v1089 = vadd.f32 0.0, %v1088
      %v1090 = vpop.f32.mrb[0].mxu0
      %1091 = vmatprep.mubr.bf16.mxu0 0
      %1092 = vmatmul.mubr.bf16.gmra.mrb[0].mxu0 %v947
      %v1093 = vpop.f32.mrb[0].mxu0
      %v1094 = vadd.f32 0.0, %v1093
      %v1095 = vpop.f32.mrb[0].mxu0
      %v1096 = vpop.f32.mrb[0].mxu0
      %v1097 = vadd.f32 0.0, %v1096
      %v1098 = vpop.f32.mrb[0].mxu0
      %1099 = vmatprep.mubr.bf16.mxu0 0
      %1100 = vmatmul.mubr.bf16.gmra.mrb[0].mxu0 %v949
      %v1101 = vpop.f32.mrb[0].mxu0
      %v1102 = vadd.f32 0.0, %v1101
      %v1103 = vpop.f32.mrb[0].mxu0
      %v1104 = vpop.f32.mrb[0].mxu0
      %v1105 = vadd.f32 0.0, %v1104
      %v1106 = vpop.f32.mrb[0].mxu0
      %1107 = vmatprep.mubr.bf16.mxu0 0
      %1108 = vmatmul.mubr.bf16.gmra.mrb[0].mxu0 %v951
      %v1109 = vpop.f32.mrb[0].mxu0
      %v1110 = vadd.f32 0.0, %v1109
      %v1111 = vpop.f32.mrb[0].mxu0
      %v1112 = vpop.f32.mrb[0].mxu0
      %v1113 = vadd.f32 0.0, %v1112
      %v1114 = vpop.f32.mrb[0].mxu0
      %1115 = vmatprep.mubr.bf16.mxu0 0
      %1116 = vmatmul.mubr.bf16.gmra.mrb[0].mxu0 %v953
      %v1117 = vpop.f32.mrb[0].mxu0
      %v1118 = vadd.f32 0.0, %v1117
      %v1119 = vpop.f32.mrb[0].mxu0
      %v1120 = vpop.f32.mrb[0].mxu0
      %v1121 = vadd.f32 0.0, %v1120
      %v1122 = vpop.f32.mrb[0].mxu0
      %1123 = vmatprep.mubr.bf16.mxu0 0
      %1124 = vmatmul.mubr.bf16.gmra.mrb[0].mxu0 %v955
      %v1125 = vpop.f32.mrb[0].mxu0
      %v1126 = vadd.f32 0.0, %v1125
      %v1127 = vpop.f32.mrb[0].mxu0
      %v1128 = vpop.f32.mrb[0].mxu0
      %v1129 = vadd.f32 0.0, %v1128
      %v1130 = vpop.f32.mrb[0].mxu0
      %1131 = vmatprep.mubr.bf16.mxu0 0
      %1132 = vmatmul.mubr.bf16.gmra.mrb[0].mxu0 %v957
      %v1133 = vpop.f32.mrb[0].mxu0
      %v1134 = vadd.f32 0.0, %v1133
      %v1135 = vpop.f32.mrb[0].mxu0
      %v1136 = vpop.f32.mrb[0].mxu0
      %v1137 = vadd.f32 0.0, %v1136
      %v1138 = vpop.f32.mrb[0].mxu0
      %1139 = vdwg.mxu0
      %1140 = vst.msk [vmem:[#allocation3] sm:$0xff] %vm828, %v998
      %1141 = vst.msk [vmem:[#allocation3 + $0x8] sm:$0xff] %vm828, %v1001
      %1142 = vst.msk [vmem:[#allocation3 + $0x10] sm:$0xff] %vm828, %v1006
      %1143 = vst.msk [vmem:[#allocation3 + $0x18] sm:$0xff] %vm828, %v1009
      %1144 = vst.msk [vmem:[#allocation3 + $0x20] sm:$0xff] %vm828, %v1014
      %1145 = vst.msk [vmem:[#allocation3 + $0x28] sm:$0xff] %vm828, %v1017
      %1146 = vst.msk [vmem:[#allocation3 + $0x30] sm:$0xff] %vm828, %v1022
      %1147 = vst.msk [vmem:[#allocation3 + $0x38] sm:$0xff] %vm828, %v1025
      %1148 = vst.msk [vmem:[#allocation3 + $0x40] sm:$0xff] %vm828, %v1030
      %1149 = vst.msk [vmem:[#allocation3 + $0x48] sm:$0xff] %vm828, %v1033
      %1150 = vst.msk [vmem:[#allocation3 + $0x50] sm:$0xff] %vm828, %v1038
      %1151 = vst.msk [vmem:[#allocation3 + $0x58] sm:$0xff] %vm828, %v1041
      %1152 = vst.msk [vmem:[#allocation3 + $0x60] sm:$0xff] %vm828, %v1046
      %1153 = vst.msk [vmem:[#allocation3 + $0x68] sm:$0xff] %vm828, %v1049
      %1154 = vst.msk [vmem:[#allocation3 + $0x70] sm:$0xff] %vm828, %v1054
      %1155 = vst.msk [vmem:[#allocation3 + $0x78] sm:$0xff] %vm828, %v1057
      %1156 = vst.msk [vmem:[#allocation3 + $0x80] sm:$0xff] %vm828, %v1062
      %1157 = vst.msk [vmem:[#allocation3 + $0x88] sm:$0xff] %vm828, %v1065
      %1158 = vst.msk [vmem:[#allocation3 + $0x90] sm:$0xff] %vm828, %v1070
      %1159 = vst.msk [vmem:[#allocation3 + $0x98] sm:$0xff] %vm828, %v1073
      %1160 = vst.msk [vmem:[#allocation3 + $0xa0] sm:$0xff] %vm828, %v1078
      %1161 = vst.msk [vmem:[#allocation3 + $0xa8] sm:$0xff] %vm828, %v1081
      %1162 = vst.msk [vmem:[#allocation3 + $0xb0] sm:$0xff] %vm828, %v1086
      %1163 = vst.msk [vmem:[#allocation3 + $0xb8] sm:$0xff] %vm828, %v1089
      %1164 = vst.msk [vmem:[#allocation3 + $0xc0] sm:$0xff] %vm828, %v1094
      %1165 = vst.msk [vmem:[#allocation3 + $0xc8] sm:$0xff] %vm828, %v1097
      %1166 = vst.msk [vmem:[#allocation3 + $0xd0] sm:$0xff] %vm828, %v1102
      %1167 = vst.msk [vmem:[#allocation3 + $0xd8] sm:$0xff] %vm828, %v1105
      %1168 = vst.msk [vmem:[#allocation3 + $0xe0] sm:$0xff] %vm828, %v1110
      %1169 = vst.msk [vmem:[#allocation3 + $0xe8] sm:$0xff] %vm828, %v1113
      %1170 = vst.msk [vmem:[#allocation3 + $0xf0] sm:$0xff] %vm828, %v1118
      %1171 = vst.msk [vmem:[#allocation3 + $0xf8] sm:$0xff] %vm828, %v1121
      %1172 = vst.msk [vmem:[#allocation3 + $0x100] sm:$0xff] %vm828, %v1126
      %1173 = vst.msk [vmem:[#allocation3 + $0x108] sm:$0xff] %vm828, %v1129
      %1174 = vst.msk [vmem:[#allocation3 + $0x110] sm:$0xff] %vm828, %v1134
      %1175 = vst.msk [vmem:[#allocation3 + $0x118] sm:$0xff] %vm828, %v1137
      %v1176 = vld [vmem:[#allocation3] sm:$0xff]
      %v1177 = vld [vmem:[#allocation3 + $0x8] sm:$0xff]
      %v1178 = vld [vmem:[#allocation3 + $0x10] sm:$0xff]
      %v1179 = vld [vmem:[#allocation3 + $0x18] sm:$0xff]
      %v1180 = vld [vmem:[#allocation3 + $0x20] sm:$0xff]
      %v1181 = vld [vmem:[#allocation3 + $0x28] sm:$0xff]
      %v1182 = vld [vmem:[#allocation3 + $0x30] sm:$0xff]
      %v1183 = vld [vmem:[#allocation3 + $0x38] sm:$0xff]
      %v1184 = vld [vmem:[#allocation3 + $0x40] sm:$0xff]
      %v1185 = vld [vmem:[#allocation3 + $0x48] sm:$0xff]
      %v1186 = vld [vmem:[#allocation3 + $0x50] sm:$0xff]
      %v1187 = vld [vmem:[#allocation3 + $0x58] sm:$0xff]
      %v1188 = vld [vmem:[#allocation3 + $0x60] sm:$0xff]
      %v1189 = vld [vmem:[#allocation3 + $0x68] sm:$0xff]
      %v1190 = vld [vmem:[#allocation3 + $0x70] sm:$0xff]
      %v1191 = vld [vmem:[#allocation3 + $0x78] sm:$0xff]
      %v1192 = vld [vmem:[#allocation3 + $0x80] sm:$0xff]
      %v1193 = vld [vmem:[#allocation3 + $0x88] sm:$0xff]
      %v1194 = vld [vmem:[#allocation3 + $0x90] sm:$0xff]
      %v1195 = vld [vmem:[#allocation3 + $0x98] sm:$0xff]
      %v1196 = vld [vmem:[#allocation3 + $0xa0] sm:$0xff]
      %v1197 = vld [vmem:[#allocation3 + $0xa8] sm:$0xff]
      %v1198 = vld [vmem:[#allocation3 + $0xb0] sm:$0xff]
      %v1199 = vld [vmem:[#allocation3 + $0xb8] sm:$0xff]
      %v1200 = vld [vmem:[#allocation3 + $0xc0] sm:$0xff]
      %v1201 = vld [vmem:[#allocation3 + $0xc8] sm:$0xff]
      %v1202 = vld [vmem:[#allocation3 + $0xd0] sm:$0xff]
      %v1203 = vld [vmem:[#allocation3 + $0xd8] sm:$0xff]
      %v1204 = vld [vmem:[#allocation3 + $0xe0] sm:$0xff]
      %v1205 = vld [vmem:[#allocation3 + $0xe8] sm:$0xff]
      %v1206 = vld [vmem:[#allocation3 + $0xf0] sm:$0xff]
      %v1207 = vld [vmem:[#allocation3 + $0xf8] sm:$0xff]
      %v1208 = vld [vmem:[#allocation3 + $0x100] sm:$0xff]
      %v1209 = vld [vmem:[#allocation3 + $0x108] sm:$0xff]
      %v1210 = vld [vmem:[#allocation3 + $0x110] sm:$0xff]
      %v1211 = vld [vmem:[#allocation3 + $0x118] sm:$0xff]
      %s1212 = scalar_lea.vmem %s1, 12
      %v1213 = vld [vmem:[%s1212] sm:$0xf]
      %v1214 = vld [vmem:[%s1212 + $0x4] sm:$0xf]
      %v1215 = vld [vmem:[%s1212 + $0x8] sm:$0xf]
      %v1219 = vunpack.c.l.b16 %v1213
      %v1220 = vunpack.c.l.b16 %v1214
      %v1221 = vunpack.c.l.b16 %v1215
      %v1222 = vpack.c.b16 %v1220, %v1219
      %v1223 = vpack.c.b16 %v1221, %v1221
      %v1225 = vsel %vm922, %v907, 0
      %v1228 = vsel %vm959, %v1223, 0
      %1230 = vmatprep.subr.bf16.mxu0 0
      %1231 = vmatpush1.bf16.msra.mxu0 %v1222
      %1232 = vmatprep.subr.bf16.mxu0 0
      %1233 = vmatpush1.bf16.msra.mxu0 %v1228
      %1234 = vmatprep.subr.bf16.mxu0 0
      %1235 = vmatpush1.bf16.msra.mxu0 0
      %1236 = vmatprep.subr.bf16.mxu0 0
      %1237 = vmatpush1.bf16.msra.mxu0 0
      %1238 = vmatprep.subr.bf16.mxu0 0
      %1239 = vmatpush1.bf16.msra.mxu0 0
      %1240 = vmatprep.subr.bf16.mxu0 0
      %1241 = vmatpush1.bf16.msra.mxu0 0
      %1242 = vmatprep.subr.bf16.mxu0 0
      %1243 = vmatpush1.bf16.msra.mxu0 0
      %1244 = vmatprep.subr.bf16.mxu0 0
      %1245 = vmatpush1.bf16.msra.mxu0 0
      %1246 = vmatprep.subr.bf16.mxu0 0
      %1247 = vmatpush1.bf16.msra.mxu0 0
      %1248 = vmatprep.subr.bf16.mxu0 0
      %1249 = vmatpush1.bf16.msra.mxu0 0
      %1250 = vmatprep.subr.bf16.mxu0 0
      %1251 = vmatpush1.bf16.msra.mxu0 0
      %1252 = vmatprep.subr.bf16.mxu0 0
      %1253 = vmatpush1.bf16.msra.mxu0 0
      %1254 = vmatprep.subr.bf16.mxu0 0
      %1255 = vmatpush1.bf16.msra.mxu0 0
      %1256 = vmatprep.subr.bf16.mxu0 0
      %1257 = vmatpush1.bf16.msra.mxu0 0
      %1258 = vmatprep.subr.bf16.mxu0 0
      %1259 = vmatpush1.bf16.msra.mxu0 0
      %1260 = vmatprep.subr.bf16.mxu0 0
      %1261 = vmatpush1.bf16.msra.mxu0 0
      %1262 = vmatprep.mubr.bf16.mxu0 0
      %1263 = vmatmul.mubr.bf16.gmra.mrb[0].mxu0 %v925
      %v1264 = vpop.f32.mrb[0].mxu0
      %v1265 = vadd.f32 0.0, %v1264
      %v1266 = vpop.f32.mrb[0].mxu0
      %v1267 = vpop.f32.mrb[0].mxu0
      %v1268 = vadd.f32 0.0, %v1267
      %v1269 = vpop.f32.mrb[0].mxu0
      %1270 = vmatprep.mubr.bf16.mxu0 0
      %1271 = vmatmul.mubr.bf16.gmra.mrb[0].mxu0 %v927
      %v1272 = vpop.f32.mrb[0].mxu0
      %v1273 = vadd.f32 0.0, %v1272
      %v1274 = vpop.f32.mrb[0].mxu0
      %v1275 = vpop.f32.mrb[0].mxu0
      %v1276 = vadd.f32 0.0, %v1275
      %v1277 = vpop.f32.mrb[0].mxu0
      %1278 = vmatprep.mubr.bf16.mxu0 0
      %1279 = vmatmul.mubr.bf16.gmra.mrb[0].mxu0 %v929
      %v1280 = vpop.f32.mrb[0].mxu0
      %v1281 = vadd.f32 0.0, %v1280
      %v1282 = vpop.f32.mrb[0].mxu0
      %v1283 = vpop.f32.mrb[0].mxu0
      %v1284 = vadd.f32 0.0, %v1283
      %v1285 = vpop.f32.mrb[0].mxu0
      %1286 = vmatprep.mubr.bf16.mxu0 0
      %1287 = vmatmul.mubr.bf16.gmra.mrb[0].mxu0 %v931
      %v1288 = vpop.f32.mrb[0].mxu0
      %v1289 = vadd.f32 0.0, %v1288
      %v1290 = vpop.f32.mrb[0].mxu0
      %v1291 = vpop.f32.mrb[0].mxu0
      %v1292 = vadd.f32 0.0, %v1291
      %v1293 = vpop.f32.mrb[0].mxu0
      %1294 = vmatprep.mubr.bf16.mxu0 0
      %1295 = vmatmul.mubr.bf16.gmra.mrb[0].mxu0 %v933
      %v1296 = vpop.f32.mrb[0].mxu0
      %v1297 = vadd.f32 0.0, %v1296
      %v1298 = vpop.f32.mrb[0].mxu0
      %v1299 = vpop.f32.mrb[0].mxu0
      %v1300 = vadd.f32 0.0, %v1299
      %v1301 = vpop.f32.mrb[0].mxu0
      %1302 = vmatprep.mubr.bf16.mxu0 0
      %1303 = vmatmul.mubr.bf16.gmra.mrb[0].mxu0 %v935
      %v1304 = vpop.f32.mrb[0].mxu0
      %v1305 = vadd.f32 0.0, %v1304
      %v1306 = vpop.f32.mrb[0].mxu0
      %v1307 = vpop.f32.mrb[0].mxu0
      %v1308 = vadd.f32 0.0, %v1307
      %v1309 = vpop.f32.mrb[0].mxu0
      %1310 = vmatprep.mubr.bf16.mxu0 0
      %1311 = vmatmul.mubr.bf16.gmra.mrb[0].mxu0 %v937
      %v1312 = vpop.f32.mrb[0].mxu0
      %v1313 = vadd.f32 0.0, %v1312
      %v1314 = vpop.f32.mrb[0].mxu0
      %v1315 = vpop.f32.mrb[0].mxu0
      %v1316 = vadd.f32 0.0, %v1315
      %v1317 = vpop.f32.mrb[0].mxu0
      %1318 = vmatprep.mubr.bf16.mxu0 0
      %1319 = vmatmul.mubr.bf16.gmra.mrb[0].mxu0 %v939
      %v1320 = vpop.f32.mrb[0].mxu0
      %v1321 = vadd.f32 0.0, %v1320
      %v1322 = vpop.f32.mrb[0].mxu0
      %v1323 = vpop.f32.mrb[0].mxu0
      %v1324 = vadd.f32 0.0, %v1323
      %v1325 = vpop.f32.mrb[0].mxu0
      %1326 = vmatprep.mubr.bf16.mxu0 0
      %1327 = vmatmul.mubr.bf16.gmra.mrb[0].mxu0 %v941
      %v1328 = vpop.f32.mrb[0].mxu0
      %v1329 = vadd.f32 0.0, %v1328
      %v1330 = vpop.f32.mrb[0].mxu0
      %v1331 = vpop.f32.mrb[0].mxu0
      %v1332 = vadd.f32 0.0, %v1331
      %v1333 = vpop.f32.mrb[0].mxu0
      %1334 = vmatprep.mubr.bf16.mxu0 0
      %1335 = vmatmul.mubr.bf16.gmra.mrb[0].mxu0 %v943
      %v1336 = vpop.f32.mrb[0].mxu0
      %v1337 = vadd.f32 0.0, %v1336
      %v1338 = vpop.f32.mrb[0].mxu0
      %v1339 = vpop.f32.mrb[0].mxu0
      %v1340 = vadd.f32 0.0, %v1339
      %v1341 = vpop.f32.mrb[0].mxu0
      %1342 = vmatprep.mubr.bf16.mxu0 0
      %1343 = vmatmul.mubr.bf16.gmra.mrb[0].mxu0 %v945
      %v1344 = vpop.f32.mrb[0].mxu0
      %v1345 = vadd.f32 0.0, %v1344
      %v1346 = vpop.f32.mrb[0].mxu0
      %v1347 = vpop.f32.mrb[0].mxu0
      %v1348 = vadd.f32 0.0, %v1347
      %v1349 = vpop.f32.mrb[0].mxu0
      %1350 = vmatprep.mubr.bf16.mxu0 0
      %1351 = vmatmul.mubr.bf16.gmra.mrb[0].mxu0 %v947
      %v1352 = vpop.f32.mrb[0].mxu0
      %v1353 = vadd.f32 0.0, %v1352
      %v1354 = vpop.f32.mrb[0].mxu0
      %v1355 = vpop.f32.mrb[0].mxu0
      %v1356 = vadd.f32 0.0, %v1355
      %v1357 = vpop.f32.mrb[0].mxu0
      %1358 = vmatprep.mubr.bf16.mxu0 0
      %1359 = vmatmul.mubr.bf16.gmra.mrb[0].mxu0 %v949
      %v1360 = vpop.f32.mrb[0].mxu0
      %v1361 = vadd.f32 0.0, %v1360
      %v1362 = vpop.f32.mrb[0].mxu0
      %v1363 = vpop.f32.mrb[0].mxu0
      %v1364 = vadd.f32 0.0, %v1363
      %v1365 = vpop.f32.mrb[0].mxu0
      %1366 = vmatprep.mubr.bf16.mxu0 0
      %1367 = vmatmul.mubr.bf16.gmra.mrb[0].mxu0 %v951
      %v1368 = vpop.f32.mrb[0].mxu0
      %v1369 = vadd.f32 0.0, %v1368
      %v1370 = vpop.f32.mrb[0].mxu0
      %v1371 = vpop.f32.mrb[0].mxu0
      %v1372 = vadd.f32 0.0, %v1371
      %v1373 = vpop.f32.mrb[0].mxu0
      %1374 = vmatprep.mubr.bf16.mxu0 0
      %1375 = vmatmul.mubr.bf16.gmra.mrb[0].mxu0 %v953
      %v1376 = vpop.f32.mrb[0].mxu0
      %v1377 = vadd.f32 0.0, %v1376
      %v1378 = vpop.f32.mrb[0].mxu0
      %v1379 = vpop.f32.mrb[0].mxu0
      %v1380 = vadd.f32 0.0, %v1379
      %v1381 = vpop.f32.mrb[0].mxu0
      %1382 = vmatprep.mubr.bf16.mxu0 0
      %1383 = vmatmul.mubr.bf16.gmra.mrb[0].mxu0 %v955
      %v1384 = vpop.f32.mrb[0].mxu0
      %v1385 = vadd.f32 0.0, %v1384
      %v1386 = vpop.f32.mrb[0].mxu0
      %v1387 = vpop.f32.mrb[0].mxu0
      %v1388 = vadd.f32 0.0, %v1387
      %v1389 = vpop.f32.mrb[0].mxu0
      %1390 = vmatprep.mubr.bf16.mxu0 0
      %1391 = vmatmul.mubr.bf16.gmra.mrb[0].mxu0 %v957
      %v1392 = vpop.f32.mrb[0].mxu0
      %v1393 = vadd.f32 0.0, %v1392
      %v1394 = vpop.f32.mrb[0].mxu0
      %v1395 = vpop.f32.mrb[0].mxu0
      %v1396 = vadd.f32 0.0, %v1395
      %v1397 = vpop.f32.mrb[0].mxu0
      %1398 = vmatprep.mubr.bf16.mxu0 0
      %1399 = vmatmul.mubr.bf16.gmra.mrb[0].mxu0 %v1225
      %v1400 = vpop.f32.mrb[0].mxu0
      %v1401 = vadd.f32 0.0, %v1400
      %v1402 = vpop.f32.mrb[0].mxu0
      %v1403 = vpop.f32.mrb[0].mxu0
      %v1404 = vadd.f32 0.0, %v1403
      %v1405 = vpop.f32.mrb[0].mxu0
      %1406 = vdwg.mxu0
      %v1407 = vadd.f32 %v1176, %v1265
      %v1408 = vadd.f32 %v1177, %v1268
      %v1409 = vadd.f32 %v1178, %v1273
      %v1410 = vadd.f32 %v1179, %v1276
      %v1411 = vadd.f32 %v1180, %v1281
      %v1412 = vadd.f32 %v1181, %v1284
      %v1413 = vadd.f32 %v1182, %v1289
      %v1414 = vadd.f32 %v1183, %v1292
      %v1415 = vadd.f32 %v1184, %v1297
      %v1416 = vadd.f32 %v1185, %v1300
      %v1417 = vadd.f32 %v1186, %v1305
      %v1418 = vadd.f32 %v1187, %v1308
      %v1419 = vadd.f32 %v1188, %v1313
      %v1420 = vadd.f32 %v1189, %v1316
      %v1421 = vadd.f32 %v1190, %v1321
      %v1422 = vadd.f32 %v1191, %v1324
      %v1423 = vadd.f32 %v1192, %v1329
      %v1424 = vadd.f32 %v1193, %v1332
      %v1425 = vadd.f32 %v1194, %v1337
      %v1426 = vadd.f32 %v1195, %v1340
      %v1427 = vadd.f32 %v1196, %v1345
      %v1428 = vadd.f32 %v1197, %v1348
      %v1429 = vadd.f32 %v1198, %v1353
      %v1430 = vadd.f32 %v1199, %v1356
      %v1431 = vadd.f32 %v1200, %v1361
      %v1432 = vadd.f32 %v1201, %v1364
      %v1433 = vadd.f32 %v1202, %v1369
      %v1434 = vadd.f32 %v1203, %v1372
      %v1435 = vadd.f32 %v1204, %v1377
      %v1436 = vadd.f32 %v1205, %v1380
      %v1437 = vadd.f32 %v1206, %v1385
      %v1438 = vadd.f32 %v1207, %v1388
      %v1439 = vadd.f32 %v1208, %v1393
      %v1440 = vadd.f32 %v1209, %v1396
      %v1441 = vadd.f32 %v1210, %v1401
      %v1442 = vadd.f32 %v1211, %v1404
      %1443 = vst.msk [vmem:[#allocation3] sm:$0xff] %vm828, %v1407
      %1444 = vst.msk [vmem:[#allocation3 + $0x8] sm:$0xff] %vm828, %v1408
      %1445 = vst.msk [vmem:[#allocation3 + $0x10] sm:$0xff] %vm828, %v1409
      %1446 = vst.msk [vmem:[#allocation3 + $0x18] sm:$0xff] %vm828, %v1410
      %1447 = vst.msk [vmem:[#allocation3 + $0x20] sm:$0xff] %vm828, %v1411
      %1448 = vst.msk [vmem:[#allocation3 + $0x28] sm:$0xff] %vm828, %v1412
      %1449 = vst.msk [vmem:[#allocation3 + $0x30] sm:$0xff] %vm828, %v1413
      %1450 = vst.msk [vmem:[#allocation3 + $0x38] sm:$0xff] %vm828, %v1414
      %1451 = vst.msk [vmem:[#allocation3 + $0x40] sm:$0xff] %vm828, %v1415
      %1452 = vst.msk [vmem:[#allocation3 + $0x48] sm:$0xff] %vm828, %v1416
      %1453 = vst.msk [vmem:[#allocation3 + $0x50] sm:$0xff] %vm828, %v1417
      %1454 = vst.msk [vmem:[#allocation3 + $0x58] sm:$0xff] %vm828, %v1418
      %1455 = vst.msk [vmem:[#allocation3 + $0x60] sm:$0xff] %vm828, %v1419
      %1456 = vst.msk [vmem:[#allocation3 + $0x68] sm:$0xff] %vm828, %v1420
      %1457 = vst.msk [vmem:[#allocation3 + $0x70] sm:$0xff] %vm828, %v1421
      %1458 = vst.msk [vmem:[#allocation3 + $0x78] sm:$0xff] %vm828, %v1422
      %1459 = vst.msk [vmem:[#allocation3 + $0x80] sm:$0xff] %vm828, %v1423
      %1460 = vst.msk [vmem:[#allocation3 + $0x88] sm:$0xff] %vm828, %v1424
      %1461 = vst.msk [vmem:[#allocation3 + $0x90] sm:$0xff] %vm828, %v1425
      %1462 = vst.msk [vmem:[#allocation3 + $0x98] sm:$0xff] %vm828, %v1426
      %1463 = vst.msk [vmem:[#allocation3 + $0xa0] sm:$0xff] %vm828, %v1427
      %1464 = vst.msk [vmem:[#allocation3 + $0xa8] sm:$0xff] %vm828, %v1428
      %1465 = vst.msk [vmem:[#allocation3 + $0xb0] sm:$0xff] %vm828, %v1429
      %1466 = vst.msk [vmem:[#allocation3 + $0xb8] sm:$0xff] %vm828, %v1430
      %1467 = vst.msk [vmem:[#allocation3 + $0xc0] sm:$0xff] %vm828, %v1431
      %1468 = vst.msk [vmem:[#allocation3 + $0xc8] sm:$0xff] %vm828, %v1432
      %1469 = vst.msk [vmem:[#allocation3 + $0xd0] sm:$0xff] %vm828, %v1433
      %1470 = vst.msk [vmem:[#allocation3 + $0xd8] sm:$0xff] %vm828, %v1434
      %1471 = vst.msk [vmem:[#allocation3 + $0xe0] sm:$0xff] %vm828, %v1435
      %1472 = vst.msk [vmem:[#allocation3 + $0xe8] sm:$0xff] %vm828, %v1436
      %1473 = vst.msk [vmem:[#allocation3 + $0xf0] sm:$0xff] %vm828, %v1437
      %1474 = vst.msk [vmem:[#allocation3 + $0xf8] sm:$0xff] %vm828, %v1438
      %1475 = vst.msk [vmem:[#allocation3 + $0x100] sm:$0xff] %vm828, %v1439
      %1476 = vst.msk [vmem:[#allocation3 + $0x108] sm:$0xff] %vm828, %v1440
      %1477 = vst.msk [vmem:[#allocation3 + $0x110] sm:$0xff] %vm828, %v1441
      %1478 = vst.msk [vmem:[#allocation3 + $0x118] sm:$0xff] %vm828, %v1442
      %v1479 = vld [vmem:[#allocation3] sm:$0xff]
      %v1480 = vld [vmem:[#allocation3 + $0x8] sm:$0xff]
      %v1481 = vld [vmem:[#allocation3 + $0x10] sm:$0xff]
      %v1482 = vld [vmem:[#allocation3 + $0x18] sm:$0xff]
      %v1483 = vld [vmem:[#allocation3 + $0x20] sm:$0xff]
      %v1484 = vld [vmem:[#allocation3 + $0x28] sm:$0xff]
      %v1485 = vld [vmem:[#allocation3 + $0x30] sm:$0xff]
      %v1486 = vld [vmem:[#allocation3 + $0x38] sm:$0xff]
      %v1487 = vld [vmem:[#allocation3 + $0x40] sm:$0xff]
      %v1488 = vld [vmem:[#allocation3 + $0x48] sm:$0xff]
      %v1489 = vld [vmem:[#allocation3 + $0x50] sm:$0xff]
      %v1490 = vld [vmem:[#allocation3 + $0x58] sm:$0xff]
      %v1491 = vld [vmem:[#allocation3 + $0x60] sm:$0xff]
      %v1492 = vld [vmem:[#allocation3 + $0x68] sm:$0xff]
      %v1493 = vld [vmem:[#allocation3 + $0x70] sm:$0xff]
      %v1494 = vld [vmem:[#allocation3 + $0x78] sm:$0xff]
      %v1495 = vld [vmem:[#allocation3 + $0x80] sm:$0xff]
      %v1496 = vld [vmem:[#allocation3 + $0x88] sm:$0xff]
      %v1497 = vld [vmem:[#allocation3 + $0x90] sm:$0xff]
      %v1498 = vld [vmem:[#allocation3 + $0x98] sm:$0xff]
      %v1499 = vld [vmem:[#allocation3 + $0xa0] sm:$0xff]
      %v1500 = vld [vmem:[#allocation3 + $0xa8] sm:$0xff]
      %v1501 = vld [vmem:[#allocation3 + $0xb0] sm:$0xff]
      %v1502 = vld [vmem:[#allocation3 + $0xb8] sm:$0xff]
      %v1503 = vld [vmem:[#allocation3 + $0xc0] sm:$0xff]
      %v1504 = vld [vmem:[#allocation3 + $0xc8] sm:$0xff]
      %v1505 = vld [vmem:[#allocation3 + $0xd0] sm:$0xff]
      %v1506 = vld [vmem:[#allocation3 + $0xd8] sm:$0xff]
      %v1507 = vld [vmem:[#allocation3 + $0xe0] sm:$0xff]
      %v1508 = vld [vmem:[#allocation3 + $0xe8] sm:$0xff]
      %v1509 = vld [vmem:[#allocation3 + $0xf0] sm:$0xff]
      %v1510 = vld [vmem:[#allocation3 + $0xf8] sm:$0xff]
      %v1511 = vld [vmem:[#allocation3 + $0x100] sm:$0xff]
      %v1512 = vld [vmem:[#allocation3 + $0x108] sm:$0xff]
      %v1513 = vld [vmem:[#allocation3 + $0x110] sm:$0xff]
      %v1514 = vld [vmem:[#allocation3 + $0x118] sm:$0xff]
      %s1515 = scalar_lea.vmem %s1, 24
      %v1516 = vld [vmem:[%s1515] sm:$0xf]
      %v1517 = vld [vmem:[%s1515 + $0x4] sm:$0xf]
      %v1518 = vld [vmem:[%s1515 + $0x8] sm:$0xf]
      %v1522 = vunpack.c.l.b16 %v1516
      %v1523 = vunpack.c.l.b16 %v1517
      %v1524 = vunpack.c.l.b16 %v1518
      %v1525 = vpack.c.b16 %v1523, %v1522
      %v1526 = vpack.c.b16 %v1524, %v1524
      %v1528 = vsel %vm922, %v909, 0
      %v1531 = vsel %vm959, %v1526, 0
      %1533 = vmatprep.subr.bf16.mxu0 0
      %1534 = vmatpush1.bf16.msra.mxu0 %v1525
      %1535 = vmatprep.subr.bf16.mxu0 0
      %1536 = vmatpush1.bf16.msra.mxu0 %v1531
      %1537 = vmatprep.subr.bf16.mxu0 0
      %1538 = vmatpush1.bf16.msra.mxu0 0
      %1539 = vmatprep.subr.bf16.mxu0 0
      %1540 = vmatpush1.bf16.msra.mxu0 0
      %1541 = vmatprep.subr.bf16.mxu0 0
      %1542 = vmatpush1.bf16.msra.mxu0 0
      %1543 = vmatprep.subr.bf16.mxu0 0
      %1544 = vmatpush1.bf16.msra.mxu0 0
      %1545 = vmatprep.subr.bf16.mxu0 0
      %1546 = vmatpush1.bf16.msra.mxu0 0
      %1547 = vmatprep.subr.bf16.mxu0 0
      %1548 = vmatpush1.bf16.msra.mxu0 0
      %1549 = vmatprep.subr.bf16.mxu0 0
      %1550 = vmatpush1.bf16.msra.mxu0 0
      %1551 = vmatprep.subr.bf16.mxu0 0
      %1552 = vmatpush1.bf16.msra.mxu0 0
      %1553 = vmatprep.subr.bf16.mxu0 0
      %1554 = vmatpush1.bf16.msra.mxu0 0
      %1555 = vmatprep.subr.bf16.mxu0 0
      %1556 = vmatpush1.bf16.msra.mxu0 0
      %1557 = vmatprep.subr.bf16.mxu0 0
      %1558 = vmatpush1.bf16.msra.mxu0 0
      %1559 = vmatprep.subr.bf16.mxu0 0
      %1560 = vmatpush1.bf16.msra.mxu0 0
      %1561 = vmatprep.subr.bf16.mxu0 0
      %1562 = vmatpush1.bf16.msra.mxu0 0
      %1563 = vmatprep.subr.bf16.mxu0 0
      %1564 = vmatpush1.bf16.msra.mxu0 0
      %1565 = vmatprep.mubr.bf16.mxu0 0
      %1566 = vmatmul.mubr.bf16.gmra.mrb[0].mxu0 %v927
      %v1567 = vpop.f32.mrb[0].mxu0
      %v1568 = vadd.f32 0.0, %v1567
      %v1569 = vpop.f32.mrb[0].mxu0
      %v1570 = vpop.f32.mrb[0].mxu0
      %v1571 = vadd.f32 0.0, %v1570
      %v1572 = vpop.f32.mrb[0].mxu0
      %1573 = vmatprep.mubr.bf16.mxu0 0
      %1574 = vmatmul.mubr.bf16.gmra.mrb[0].mxu0 %v929
      %v1575 = vpop.f32.mrb[0].mxu0
      %v1576 = vadd.f32 0.0, %v1575
      %v1577 = vpop.f32.mrb[0].mxu0
      %v1578 = vpop.f32.mrb[0].mxu0
      %v1579 = vadd.f32 0.0, %v1578
      %v1580 = vpop.f32.mrb[0].mxu0
      %1581 = vmatprep.mubr.bf16.mxu0 0
      %1582 = vmatmul.mubr.bf16.gmra.mrb[0].mxu0 %v931
      %v1583 = vpop.f32.mrb[0].mxu0
      %v1584 = vadd.f32 0.0, %v1583
      %v1585 = vpop.f32.mrb[0].mxu0
      %v1586 = vpop.f32.mrb[0].mxu0
      %v1587 = vadd.f32 0.0, %v1586
      %v1588 = vpop.f32.mrb[0].mxu0
      %1589 = vmatprep.mubr.bf16.mxu0 0
      %1590 = vmatmul.mubr.bf16.gmra.mrb[0].mxu0 %v933
      %v1591 = vpop.f32.mrb[0].mxu0
      %v1592 = vadd.f32 0.0, %v1591
      %v1593 = vpop.f32.mrb[0].mxu0
      %v1594 = vpop.f32.mrb[0].mxu0
      %v1595 = vadd.f32 0.0, %v1594
      %v1596 = vpop.f32.mrb[0].mxu0
      %1597 = vmatprep.mubr.bf16.mxu0 0
      %1598 = vmatmul.mubr.bf16.gmra.mrb[0].mxu0 %v935
      %v1599 = vpop.f32.mrb[0].mxu0
      %v1600 = vadd.f32 0.0, %v1599
      %v1601 = vpop.f32.mrb[0].mxu0
      %v1602 = vpop.f32.mrb[0].mxu0
      %v1603 = vadd.f32 0.0, %v1602
      %v1604 = vpop.f32.mrb[0].mxu0
      %1605 = vmatprep.mubr.bf16.mxu0 0
      %1606 = vmatmul.mubr.bf16.gmra.mrb[0].mxu0 %v937
      %v1607 = vpop.f32.mrb[0].mxu0
      %v1608 = vadd.f32 0.0, %v1607
      %v1609 = vpop.f32.mrb[0].mxu0
      %v1610 = vpop.f32.mrb[0].mxu0
      %v1611 = vadd.f32 0.0, %v1610
      %v1612 = vpop.f32.mrb[0].mxu0
      %1613 = vmatprep.mubr.bf16.mxu0 0
      %1614 = vmatmul.mubr.bf16.gmra.mrb[0].mxu0 %v939
      %v1615 = vpop.f32.mrb[0].mxu0
      %v1616 = vadd.f32 0.0, %v1615
      %v1617 = vpop.f32.mrb[0].mxu0
      %v1618 = vpop.f32.mrb[0].mxu0
      %v1619 = vadd.f32 0.0, %v1618
      %v1620 = vpop.f32.mrb[0].mxu0
      %1621 = vmatprep.mubr.bf16.mxu0 0
      %1622 = vmatmul.mubr.bf16.gmra.mrb[0].mxu0 %v941
      %v1623 = vpop.f32.mrb[0].mxu0
      %v1624 = vadd.f32 0.0, %v1623
      %v1625 = vpop.f32.mrb[0].mxu0
      %v1626 = vpop.f32.mrb[0].mxu0
      %v1627 = vadd.f32 0.0, %v1626
      %v1628 = vpop.f32.mrb[0].mxu0
      %1629 = vmatprep.mubr.bf16.mxu0 0
      %1630 = vmatmul.mubr.bf16.gmra.mrb[0].mxu0 %v943
      %v1631 = vpop.f32.mrb[0].mxu0
      %v1632 = vadd.f32 0.0, %v1631
      %v1633 = vpop.f32.mrb[0].mxu0
      %v1634 = vpop.f32.mrb[0].mxu0
      %v1635 = vadd.f32 0.0, %v1634
      %v1636 = vpop.f32.mrb[0].mxu0
      %1637 = vmatprep.mubr.bf16.mxu0 0
      %1638 = vmatmul.mubr.bf16.gmra.mrb[0].mxu0 %v945
      %v1639 = vpop.f32.mrb[0].mxu0
      %v1640 = vadd.f32 0.0, %v1639
      %v1641 = vpop.f32.mrb[0].mxu0
      %v1642 = vpop.f32.mrb[0].mxu0
      %v1643 = vadd.f32 0.0, %v1642
      %v1644 = vpop.f32.mrb[0].mxu0
      %1645 = vmatprep.mubr.bf16.mxu0 0
      %1646 = vmatmul.mubr.bf16.gmra.mrb[0].mxu0 %v947
      %v1647 = vpop.f32.mrb[0].mxu0
      %v1648 = vadd.f32 0.0, %v1647
      %v1649 = vpop.f32.mrb[0].mxu0
      %v1650 = vpop.f32.mrb[0].mxu0
      %v1651 = vadd.f32 0.0, %v1650
      %v1652 = vpop.f32.mrb[0].mxu0
      %1653 = vmatprep.mubr.bf16.mxu0 0
      %1654 = vmatmul.mubr.bf16.gmra.mrb[0].mxu0 %v949
      %v1655 = vpop.f32.mrb[0].mxu0
      %v1656 = vadd.f32 0.0, %v1655
      %v1657 = vpop.f32.mrb[0].mxu0
      %v1658 = vpop.f32.mrb[0].mxu0
      %v1659 = vadd.f32 0.0, %v1658
      %v1660 = vpop.f32.mrb[0].mxu0
      %1661 = vmatprep.mubr.bf16.mxu0 0
      %1662 = vmatmul.mubr.bf16.gmra.mrb[0].mxu0 %v951
      %v1663 = vpop.f32.mrb[0].mxu0
      %v1664 = vadd.f32 0.0, %v1663
      %v1665 = vpop.f32.mrb[0].mxu0
      %v1666 = vpop.f32.mrb[0].mxu0
      %v1667 = vadd.f32 0.0, %v1666
      %v1668 = vpop.f32.mrb[0].mxu0
      %1669 = vmatprep.mubr.bf16.mxu0 0
      %1670 = vmatmul.mubr.bf16.gmra.mrb[0].mxu0 %v953
      %v1671 = vpop.f32.mrb[0].mxu0
      %v1672 = vadd.f32 0.0, %v1671
      %v1673 = vpop.f32.mrb[0].mxu0
      %v1674 = vpop.f32.mrb[0].mxu0
      %v1675 = vadd.f32 0.0, %v1674
      %v1676 = vpop.f32.mrb[0].mxu0
      %1677 = vmatprep.mubr.bf16.mxu0 0
      %1678 = vmatmul.mubr.bf16.gmra.mrb[0].mxu0 %v955
      %v1679 = vpop.f32.mrb[0].mxu0
      %v1680 = vadd.f32 0.0, %v1679
      %v1681 = vpop.f32.mrb[0].mxu0
      %v1682 = vpop.f32.mrb[0].mxu0
      %v1683 = vadd.f32 0.0, %v1682
      %v1684 = vpop.f32.mrb[0].mxu0
      %1685 = vmatprep.mubr.bf16.mxu0 0
      %1686 = vmatmul.mubr.bf16.gmra.mrb[0].mxu0 %v957
      %v1687 = vpop.f32.mrb[0].mxu0
      %v1688 = vadd.f32 0.0, %v1687
      %v1689 = vpop.f32.mrb[0].mxu0
      %v1690 = vpop.f32.mrb[0].mxu0
      %v1691 = vadd.f32 0.0, %v1690
      %v1692 = vpop.f32.mrb[0].mxu0
      %1693 = vmatprep.mubr.bf16.mxu0 0
      %1694 = vmatmul.mubr.bf16.gmra.mrb[0].mxu0 %v1225
      %v1695 = vpop.f32.mrb[0].mxu0
      %v1696 = vadd.f32 0.0, %v1695
      %v1697 = vpop.f32.mrb[0].mxu0
      %v1698 = vpop.f32.mrb[0].mxu0
      %v1699 = vadd.f32 0.0, %v1698
      %v1700 = vpop.f32.mrb[0].mxu0
      %1701 = vmatprep.mubr.bf16.mxu0 0
      %1702 = vmatmul.mubr.bf16.gmra.mrb[0].mxu0 %v1528
      %v1703 = vpop.f32.mrb[0].mxu0
      %v1704 = vadd.f32 0.0, %v1703
      %v1705 = vpop.f32.mrb[0].mxu0
      %v1706 = vpop.f32.mrb[0].mxu0
      %v1707 = vadd.f32 0.0, %v1706
      %v1708 = vpop.f32.mrb[0].mxu0
      %1709 = vdwg.mxu0
      %v1710 = vadd.f32 %v1479, %v1568
      %v1711 = vadd.f32 %v1480, %v1571
      %v1712 = vadd.f32 %v1481, %v1576
      %v1713 = vadd.f32 %v1482, %v1579
      %v1714 = vadd.f32 %v1483, %v1584
      %v1715 = vadd.f32 %v1484, %v1587
      %v1716 = vadd.f32 %v1485, %v1592
      %v1717 = vadd.f32 %v1486, %v1595
      %v1718 = vadd.f32 %v1487, %v1600
      %v1719 = vadd.f32 %v1488, %v1603
      %v1720 = vadd.f32 %v1489, %v1608
      %v1721 = vadd.f32 %v1490, %v1611
      %v1722 = vadd.f32 %v1491, %v1616
      %v1723 = vadd.f32 %v1492, %v1619
      %v1724 = vadd.f32 %v1493, %v1624
      %v1725 = vadd.f32 %v1494, %v1627
      %v1726 = vadd.f32 %v1495, %v1632
      %v1727 = vadd.f32 %v1496, %v1635
      %v1728 = vadd.f32 %v1497, %v1640
      %v1729 = vadd.f32 %v1498, %v1643
      %v1730 = vadd.f32 %v1499, %v1648
      %v1731 = vadd.f32 %v1500, %v1651
      %v1732 = vadd.f32 %v1501, %v1656
      %v1733 = vadd.f32 %v1502, %v1659
      %v1734 = vadd.f32 %v1503, %v1664
      %v1735 = vadd.f32 %v1504, %v1667
      %v1736 = vadd.f32 %v1505, %v1672
      %v1737 = vadd.f32 %v1506, %v1675
      %v1738 = vadd.f32 %v1507, %v1680
      %v1739 = vadd.f32 %v1508, %v1683
      %v1740 = vadd.f32 %v1509, %v1688
      %v1741 = vadd.f32 %v1510, %v1691
      %v1742 = vadd.f32 %v1511, %v1696
      %v1743 = vadd.f32 %v1512, %v1699
      %v1744 = vadd.f32 %v1513, %v1704
      %v1745 = vadd.f32 %v1514, %v1707
      %1746 = vst.msk [vmem:[#allocation3] sm:$0xff] %vm828, %v1710
      %1747 = vst.msk [vmem:[#allocation3 + $0x8] sm:$0xff] %vm828, %v1711
      %1748 = vst.msk [vmem:[#allocation3 + $0x10] sm:$0xff] %vm828, %v1712
      %1749 = vst.msk [vmem:[#allocation3 + $0x18] sm:$0xff] %vm828, %v1713
      %1750 = vst.msk [vmem:[#allocation3 + $0x20] sm:$0xff] %vm828, %v1714
      %1751 = vst.msk [vmem:[#allocation3 + $0x28] sm:$0xff] %vm828, %v1715
      %1752 = vst.msk [vmem:[#allocation3 + $0x30] sm:$0xff] %vm828, %v1716
      %1753 = vst.msk [vmem:[#allocation3 + $0x38] sm:$0xff] %vm828, %v1717
      %1754 = vst.msk [vmem:[#allocation3 + $0x40] sm:$0xff] %vm828, %v1718
      %1755 = vst.msk [vmem:[#allocation3 + $0x48] sm:$0xff] %vm828, %v1719
      %1756 = vst.msk [vmem:[#allocation3 + $0x50] sm:$0xff] %vm828, %v1720
      %1757 = vst.msk [vmem:[#allocation3 + $0x58] sm:$0xff] %vm828, %v1721
      %1758 = vst.msk [vmem:[#allocation3 + $0x60] sm:$0xff] %vm828, %v1722
      %1759 = vst.msk [vmem:[#allocation3 + $0x68] sm:$0xff] %vm828, %v1723
      %1760 = vst.msk [vmem:[#allocation3 + $0x70] sm:$0xff] %vm828, %v1724
      %1761 = vst.msk [vmem:[#allocation3 + $0x78] sm:$0xff] %vm828, %v1725
      %1762 = vst.msk [vmem:[#allocation3 + $0x80] sm:$0xff] %vm828, %v1726
      %1763 = vst.msk [vmem:[#allocation3 + $0x88] sm:$0xff] %vm828, %v1727
      %1764 = vst.msk [vmem:[#allocation3 + $0x90] sm:$0xff] %vm828, %v1728
      %1765 = vst.msk [vmem:[#allocation3 + $0x98] sm:$0xff] %vm828, %v1729
      %1766 = vst.msk [vmem:[#allocation3 + $0xa0] sm:$0xff] %vm828, %v1730
      %1767 = vst.msk [vmem:[#allocation3 + $0xa8] sm:$0xff] %vm828, %v1731
      %1768 = vst.msk [vmem:[#allocation3 + $0xb0] sm:$0xff] %vm828, %v1732
      %1769 = vst.msk [vmem:[#allocation3 + $0xb8] sm:$0xff] %vm828, %v1733
      %1770 = vst.msk [vmem:[#allocation3 + $0xc0] sm:$0xff] %vm828, %v1734
      %1771 = vst.msk [vmem:[#allocation3 + $0xc8] sm:$0xff] %vm828, %v1735
      %1772 = vst.msk [vmem:[#allocation3 + $0xd0] sm:$0xff] %vm828, %v1736
      %1773 = vst.msk [vmem:[#allocation3 + $0xd8] sm:$0xff] %vm828, %v1737
      %1774 = vst.msk [vmem:[#allocation3 + $0xe0] sm:$0xff] %vm828, %v1738
      %1775 = vst.msk [vmem:[#allocation3 + $0xe8] sm:$0xff] %vm828, %v1739
      %1776 = vst.msk [vmem:[#allocation3 + $0xf0] sm:$0xff] %vm828, %v1740
      %1777 = vst.msk [vmem:[#allocation3 + $0xf8] sm:$0xff] %vm828, %v1741
      %1778 = vst.msk [vmem:[#allocation3 + $0x100] sm:$0xff] %vm828, %v1742
      %1779 = vst.msk [vmem:[#allocation3 + $0x108] sm:$0xff] %vm828, %v1743
      %1780 = vst.msk [vmem:[#allocation3 + $0x110] sm:$0xff] %vm828, %v1744
      %1781 = vst.msk [vmem:[#allocation3 + $0x118] sm:$0xff] %vm828, %v1745
      %v1782 = vld [vmem:[#allocation3] sm:$0xff]
      %v1783 = vld [vmem:[#allocation3 + $0x8] sm:$0xff]
      %v1784 = vld [vmem:[#allocation3 + $0x10] sm:$0xff]
      %v1785 = vld [vmem:[#allocation3 + $0x18] sm:$0xff]
      %v1786 = vld [vmem:[#allocation3 + $0x20] sm:$0xff]
      %v1787 = vld [vmem:[#allocation3 + $0x28] sm:$0xff]
      %v1788 = vld [vmem:[#allocation3 + $0x30] sm:$0xff]
      %v1789 = vld [vmem:[#allocation3 + $0x38] sm:$0xff]
      %v1790 = vld [vmem:[#allocation3 + $0x40] sm:$0xff]
      %v1791 = vld [vmem:[#allocation3 + $0x48] sm:$0xff]
      %v1792 = vld [vmem:[#allocation3 + $0x50] sm:$0xff]
      %v1793 = vld [vmem:[#allocation3 + $0x58] sm:$0xff]
      %v1794 = vld [vmem:[#allocation3 + $0x60] sm:$0xff]
      %v1795 = vld [vmem:[#allocation3 + $0x68] sm:$0xff]
      %v1796 = vld [vmem:[#allocation3 + $0x70] sm:$0xff]
      %v1797 = vld [vmem:[#allocation3 + $0x78] sm:$0xff]
      %v1798 = vld [vmem:[#allocation3 + $0x80] sm:$0xff]
      %v1799 = vld [vmem:[#allocation3 + $0x88] sm:$0xff]
      %v1800 = vld [vmem:[#allocation3 + $0x90] sm:$0xff]
      %v1801 = vld [vmem:[#allocation3 + $0x98] sm:$0xff]
      %v1802 = vld [vmem:[#allocation3 + $0xa0] sm:$0xff]
      %v1803 = vld [vmem:[#allocation3 + $0xa8] sm:$0xff]
      %v1804 = vld [vmem:[#allocation3 + $0xb0] sm:$0xff]
      %v1805 = vld [vmem:[#allocation3 + $0xb8] sm:$0xff]
      %v1806 = vld [vmem:[#allocation3 + $0xc0] sm:$0xff]
      %v1807 = vld [vmem:[#allocation3 + $0xc8] sm:$0xff]
      %v1808 = vld [vmem:[#allocation3 + $0xd0] sm:$0xff]
      %v1809 = vld [vmem:[#allocation3 + $0xd8] sm:$0xff]
      %v1810 = vld [vmem:[#allocation3 + $0xe0] sm:$0xff]
      %v1811 = vld [vmem:[#allocation3 + $0xe8] sm:$0xff]
      %v1812 = vld [vmem:[#allocation3 + $0xf0] sm:$0xff]
      %v1813 = vld [vmem:[#allocation3 + $0xf8] sm:$0xff]
      %v1814 = vld [vmem:[#allocation3 + $0x100] sm:$0xff]
      %v1815 = vld [vmem:[#allocation3 + $0x108] sm:$0xff]
      %v1816 = vld [vmem:[#allocation3 + $0x110] sm:$0xff]
      %v1817 = vld [vmem:[#allocation3 + $0x118] sm:$0xff]
      %v1818 = vld [vmem:[%s2] sm:$0x1]
      %v1820 = vlaneseq
      %v1821 = vshrl.u32 %v1820, 7
      %v1822 = vsub.s32 0, %v1821
      %v1823 = vrot.slane %v1818, %v1822
      %v1825 = vadd.f32 %v1782, %v1823
      %v1826 = vadd.f32 %v1783, %v1823
      %v1827 = vadd.f32 %v1784, %v1823
      %v1828 = vadd.f32 %v1785, %v1823
      %v1829 = vadd.f32 %v1786, %v1823
      %v1830 = vadd.f32 %v1787, %v1823
      %v1831 = vadd.f32 %v1788, %v1823
      %v1832 = vadd.f32 %v1789, %v1823
      %v1833 = vadd.f32 %v1790, %v1823
      %v1834 = vadd.f32 %v1791, %v1823
      %v1835 = vadd.f32 %v1792, %v1823
      %v1836 = vadd.f32 %v1793, %v1823
      %v1837 = vadd.f32 %v1794, %v1823
      %v1838 = vadd.f32 %v1795, %v1823
      %v1839 = vadd.f32 %v1796, %v1823
      %v1840 = vadd.f32 %v1797, %v1823
      %v1841 = vadd.f32 %v1798, %v1823
      %v1842 = vadd.f32 %v1799, %v1823
      %v1843 = vadd.f32 %v1800, %v1823
      %v1844 = vadd.f32 %v1801, %v1823
      %v1845 = vadd.f32 %v1802, %v1823
      %v1846 = vadd.f32 %v1803, %v1823
      %v1847 = vadd.f32 %v1804, %v1823
      %v1848 = vadd.f32 %v1805, %v1823
      %v1849 = vadd.f32 %v1806, %v1823
      %v1850 = vadd.f32 %v1807, %v1823
      %v1851 = vadd.f32 %v1808, %v1823
      %v1852 = vadd.f32 %v1809, %v1823
      %v1853 = vadd.f32 %v1810, %v1823
      %v1854 = vadd.f32 %v1811, %v1823
      %v1855 = vadd.f32 %v1812, %v1823
      %v1856 = vadd.f32 %v1813, %v1823
      %v1857 = vadd.f32 %v1814, %v1823
      %v1858 = vadd.f32 %v1815, %v1823
      %v1859 = vadd.f32 %v1816, %v1823
      %v1860 = vadd.f32 %v1817, %v1823
      %v1861 = vmax.f32 %v1825, 0.0
      %v1862 = vmax.f32 %v1826, 0.0
      %v1863 = vmax.f32 %v1827, 0.0
      %v1864 = vmax.f32 %v1828, 0.0
      %v1865 = vmax.f32 %v1829, 0.0
      %v1866 = vmax.f32 %v1830, 0.0
      %v1867 = vmax.f32 %v1831, 0.0
      %v1868 = vmax.f32 %v1832, 0.0
      %v1869 = vmax.f32 %v1833, 0.0
      %v1870 = vmax.f32 %v1834, 0.0
      %v1871 = vmax.f32 %v1835, 0.0
      %v1872 = vmax.f32 %v1836, 0.0
      %v1873 = vmax.f32 %v1837, 0.0
      %v1874 = vmax.f32 %v1838, 0.0
      %v1875 = vmax.f32 %v1839, 0.0
      %v1876 = vmax.f32 %v1840, 0.0
      %v1877 = vmax.f32 %v1841, 0.0
      %v1878 = vmax.f32 %v1842, 0.0
      %v1879 = vmax.f32 %v1843, 0.0
      %v1880 = vmax.f32 %v1844, 0.0
      %v1881 = vmax.f32 %v1845, 0.0
      %v1882 = vmax.f32 %v1846, 0.0
      %v1883 = vmax.f32 %v1847, 0.0
      %v1884 = vmax.f32 %v1848, 0.0
      %v1885 = vmax.f32 %v1849, 0.0
      %v1886 = vmax.f32 %v1850, 0.0
      %v1887 = vmax.f32 %v1851, 0.0
      %v1888 = vmax.f32 %v1852, 0.0
      %v1889 = vmax.f32 %v1853, 0.0
      %v1890 = vmax.f32 %v1854, 0.0
      %v1891 = vmax.f32 %v1855, 0.0
      %v1892 = vmax.f32 %v1856, 0.0
      %v1893 = vmax.f32 %v1857, 0.0
      %v1894 = vmax.f32 %v1858, 0.0
      %v1895 = vmax.f32 %v1859, 0.0
      %v1896 = vmax.f32 %v1860, 0.0
      %v1897 = vsel 0, %v1861, 0.0
      %v1898 = vsel 0, %v1862, 0.0
      %v1899 = vsel 1, %v1863, 0.0
      %v1900 = vsel 1, %v1864, 0.0
      %v1901 = vsel 1, %v1865, 0.0
      %v1902 = vsel 1, %v1866, 0.0
      %v1903 = vsel 1, %v1867, 0.0
      %v1904 = vsel 1, %v1868, 0.0
      %v1905 = vsel 1, %v1869, 0.0
      %v1906 = vsel 1, %v1870, 0.0
      %v1907 = vsel 1, %v1871, 0.0
      %v1908 = vsel 1, %v1872, 0.0
      %v1909 = vsel 1, %v1873, 0.0
      %v1910 = vsel 1, %v1874, 0.0
      %v1911 = vsel 1, %v1875, 0.0
      %v1912 = vsel 1, %v1876, 0.0
      %v1913 = vsel 1, %v1877, 0.0
      %v1914 = vsel 1, %v1878, 0.0
      %v1915 = vsel 1, %v1879, 0.0
      %v1916 = vsel 1, %v1880, 0.0
      %v1917 = vsel 1, %v1881, 0.0
      %v1918 = vsel 1, %v1882, 0.0
      %v1919 = vsel 1, %v1883, 0.0
      %v1920 = vsel 1, %v1884, 0.0
      %v1921 = vsel 1, %v1885, 0.0
      %v1922 = vsel 1, %v1886, 0.0
      %v1923 = vsel 1, %v1887, 0.0
      %v1924 = vsel 1, %v1888, 0.0
      %v1925 = vsel 1, %v1889, 0.0
      %v1926 = vsel 1, %v1890, 0.0
      %v1927 = vsel 1, %v1891, 0.0
      %v1928 = vsel 1, %v1892, 0.0
      %v1929 = vsel 1, %v1893, 0.0
      %v1930 = vsel 1, %v1894, 0.0
      %v1931 = vsel 0, %v1895, 0.0
      %v1932 = vsel 0, %v1896, 0.0
      %vm1933 = vcmask 57344
      %vm1934 = vsmask.f32 256
      %vm1935 = vmand %vm1933, %vm1934
      %v1936 = vld [vmem:[#allocation2] sm:$0x1]
      %v1937 = vsel %vm1935, 0, %v1936
      %1938 = vst [vmem:[#allocation2] sm:$0x1] %v1937
      %v1939 = vld [vmem:[#allocation2 + $0xc] sm:$0x1]
      %v1940 = vsel %vm1935, 0, %v1939
      %1941 = vst [vmem:[#allocation2 + $0xc] sm:$0x1] %v1940
      %v1942 = vld [vmem:[#allocation2 + $0x18] sm:$0x1]
      %v1943 = vsel %vm1935, 0, %v1942
      %1944 = vst [vmem:[#allocation2 + $0x18] sm:$0x1] %v1943
      %v1945 = vld [vmem:[#allocation2 + $0x24] sm:$0x1]
      %v1946 = vsel %vm1935, 0, %v1945
      %1947 = vst [vmem:[#allocation2 + $0x24] sm:$0x1] %v1946
      %v1948 = vld [vmem:[#allocation2 + $0x30] sm:$0x1]
      %v1949 = vsel %vm1935, 0, %v1948
      %1950 = vst [vmem:[#allocation2 + $0x30] sm:$0x1] %v1949
      %v1951 = vld [vmem:[#allocation2 + $0x3c] sm:$0x1]
      %v1952 = vsel %vm1935, 0, %v1951
      %1953 = vst [vmem:[#allocation2 + $0x3c] sm:$0x1] %v1952
      %v1954 = vld [vmem:[#allocation2 + $0x48] sm:$0x1]
      %v1955 = vsel %vm1935, 0, %v1954
      %1956 = vst [vmem:[#allocation2 + $0x48] sm:$0x1] %v1955
      %v1957 = vld [vmem:[#allocation2 + $0x54] sm:$0x1]
      %v1958 = vsel %vm1935, 0, %v1957
      %1959 = vst [vmem:[#allocation2 + $0x54] sm:$0x1] %v1958
      %v1960 = vld [vmem:[#allocation2 + $0x60] sm:$0x1]
      %v1961 = vsel %vm1935, 0, %v1960
      %1962 = vst [vmem:[#allocation2 + $0x60] sm:$0x1] %v1961
      %v1963 = vld [vmem:[#allocation2 + $0x6c] sm:$0x1]
      %v1964 = vsel %vm1935, 0, %v1963
      %1965 = vst [vmem:[#allocation2 + $0x6c] sm:$0x1] %v1964
      %v1966 = vld [vmem:[#allocation2 + $0x78] sm:$0x1]
      %v1967 = vsel %vm1935, 0, %v1966
      %1968 = vst [vmem:[#allocation2 + $0x78] sm:$0x1] %v1967
      %v1969 = vld [vmem:[#allocation2 + $0x84] sm:$0x1]
      %v1970 = vsel %vm1935, 0, %v1969
      %1971 = vst [vmem:[#allocation2 + $0x84] sm:$0x1] %v1970
      %v1972 = vld [vmem:[#allocation2 + $0x90] sm:$0x1]
      %v1973 = vsel %vm1935, 0, %v1972
      %1974 = vst [vmem:[#allocation2 + $0x90] sm:$0x1] %v1973
      %v1975 = vld [vmem:[#allocation2 + $0x9c] sm:$0x1]
      %v1976 = vsel %vm1935, 0, %v1975
      %1977 = vst [vmem:[#allocation2 + $0x9c] sm:$0x1] %v1976
      %v1978 = vld [vmem:[#allocation2 + $0xa8] sm:$0x1]
      %v1979 = vsel %vm1935, 0, %v1978
      %1980 = vst [vmem:[#allocation2 + $0xa8] sm:$0x1] %v1979
      %v1981 = vld [vmem:[#allocation2 + $0xb4] sm:$0x1]
      %v1982 = vsel %vm1935, 0, %v1981
      %1983 = vst [vmem:[#allocation2 + $0xb4] sm:$0x1] %v1982
      %v1984 = vld [vmem:[#allocation2 + $0xc0] sm:$0x1]
      %v1985 = vsel %vm1935, 0, %v1984
      %1986 = vst [vmem:[#allocation2 + $0xc0] sm:$0x1] %v1985
      %v1987 = vld [vmem:[#allocation2 + $0xcc] sm:$0x1]
      %v1988 = vsel %vm1935, 0, %v1987
      %1989 = vst [vmem:[#allocation2 + $0xcc] sm:$0x1] %v1988
      %vm1990 = vsmask.f32 7938
      %vm1991 = vmand %vm1933, %vm1990
      %v1992 = vld [vmem:[#allocation2 + $0x8] sm:$0x1]
      %v1993 = vsel %vm1991, 0, %v1992
      %1994 = vst [vmem:[#allocation2 + $0x8] sm:$0x1] %v1993
      %v1995 = vld [vmem:[#allocation2 + $0x14] sm:$0x1]
      %v1996 = vsel %vm1991, 0, %v1995
      %1997 = vst [vmem:[#allocation2 + $0x14] sm:$0x1] %v1996
      %v1998 = vld [vmem:[#allocation2 + $0x20] sm:$0x1]
      %v1999 = vsel %vm1991, 0, %v1998
      %2000 = vst [vmem:[#allocation2 + $0x20] sm:$0x1] %v1999
      %v2001 = vld [vmem:[#allocation2 + $0x2c] sm:$0x1]
      %v2002 = vsel %vm1991, 0, %v2001
      %2003 = vst [vmem:[#allocation2 + $0x2c] sm:$0x1] %v2002
      %v2004 = vld [vmem:[#allocation2 + $0x38] sm:$0x1]
      %v2005 = vsel %vm1991, 0, %v2004
      %2006 = vst [vmem:[#allocation2 + $0x38] sm:$0x1] %v2005
      %v2007 = vld [vmem:[#allocation2 + $0x44] sm:$0x1]
      %v2008 = vsel %vm1991, 0, %v2007
      %2009 = vst [vmem:[#allocation2 + $0x44] sm:$0x1] %v2008
      %v2010 = vld [vmem:[#allocation2 + $0x50] sm:$0x1]
      %v2011 = vsel %vm1991, 0, %v2010
      %2012 = vst [vmem:[#allocation2 + $0x50] sm:$0x1] %v2011
      %v2013 = vld [vmem:[#allocation2 + $0x5c] sm:$0x1]
      %v2014 = vsel %vm1991, 0, %v2013
      %2015 = vst [vmem:[#allocation2 + $0x5c] sm:$0x1] %v2014
      %v2016 = vld [vmem:[#allocation2 + $0x68] sm:$0x1]
      %v2017 = vsel %vm1991, 0, %v2016
      %2018 = vst [vmem:[#allocation2 + $0x68] sm:$0x1] %v2017
      %v2019 = vld [vmem:[#allocation2 + $0x74] sm:$0x1]
      %v2020 = vsel %vm1991, 0, %v2019
      %2021 = vst [vmem:[#allocation2 + $0x74] sm:$0x1] %v2020
      %v2022 = vld [vmem:[#allocation2 + $0x80] sm:$0x1]
      %v2023 = vsel %vm1991, 0, %v2022
      %2024 = vst [vmem:[#allocation2 + $0x80] sm:$0x1] %v2023
      %v2025 = vld [vmem:[#allocation2 + $0x8c] sm:$0x1]
      %v2026 = vsel %vm1991, 0, %v2025
      %2027 = vst [vmem:[#allocation2 + $0x8c] sm:$0x1] %v2026
      %v2028 = vld [vmem:[#allocation2 + $0x98] sm:$0x1]
      %v2029 = vsel %vm1991, 0, %v2028
      %2030 = vst [vmem:[#allocation2 + $0x98] sm:$0x1] %v2029
      %v2031 = vld [vmem:[#allocation2 + $0xa4] sm:$0x1]
      %v2032 = vsel %vm1991, 0, %v2031
      %2033 = vst [vmem:[#allocation2 + $0xa4] sm:$0x1] %v2032
      %v2034 = vld [vmem:[#allocation2 + $0xb0] sm:$0x1]
      %v2035 = vsel %vm1991, 0, %v2034
      %2036 = vst [vmem:[#allocation2 + $0xb0] sm:$0x1] %v2035
      %v2037 = vld [vmem:[#allocation2 + $0xbc] sm:$0x1]
      %v2038 = vsel %vm1991, 0, %v2037
      %2039 = vst [vmem:[#allocation2 + $0xbc] sm:$0x1] %v2038
      %v2040 = vld [vmem:[#allocation2 + $0xc8] sm:$0x1]
      %v2041 = vsel %vm1991, 0, %v2040
      %2042 = vst [vmem:[#allocation2 + $0xc8] sm:$0x1] %v2041
      %v2043 = vld [vmem:[#allocation2 + $0xd4] sm:$0x1]
      %v2044 = vsel %vm1991, 0, %v2043
      %2045 = vst [vmem:[#allocation2 + $0xd4] sm:$0x1] %v2044
      %v2046 = vpack.c.bf16 %v1898, %v1897
      %v2047 = vpack.c.bf16 %v1900, %v1899
      %v2048 = vpack.c.bf16 %v1902, %v1901
      %v2049 = vpack.c.bf16 %v1904, %v1903
      %v2050 = vpack.c.bf16 %v1906, %v1905
      %v2051 = vpack.c.bf16 %v1908, %v1907
      %v2052 = vpack.c.bf16 %v1910, %v1909
      %v2053 = vpack.c.bf16 %v1912, %v1911
      %v2054 = vpack.c.bf16 %v1914, %v1913
      %v2055 = vpack.c.bf16 %v1916, %v1915
      %v2056 = vpack.c.bf16 %v1918, %v1917
      %v2057 = vpack.c.bf16 %v1920, %v1919
      %v2058 = vpack.c.bf16 %v1922, %v1921
      %v2059 = vpack.c.bf16 %v1924, %v1923
      %v2060 = vpack.c.bf16 %v1926, %v1925
      %v2061 = vpack.c.bf16 %v1928, %v1927
      %v2062 = vpack.c.bf16 %v1930, %v1929
      %v2063 = vpack.c.bf16 %v1932, %v1931
      %v2082 = vunpack.c.l.b16 %v2046
      %v2083 = vunpack.c.h.b16 %v2046
      %v2084 = vunpack.c.l.b16 %v2047
      %v2085 = vunpack.c.h.b16 %v2047
      %v2086 = vunpack.c.l.b16 %v2048
      %v2087 = vunpack.c.h.b16 %v2048
      %v2088 = vunpack.c.l.b16 %v2049
      %v2089 = vunpack.c.h.b16 %v2049
      %v2090 = vunpack.c.l.b16 %v2050
      %v2091 = vunpack.c.h.b16 %v2050
      %v2092 = vunpack.c.l.b16 %v2051
      %v2093 = vunpack.c.h.b16 %v2051
      %v2094 = vunpack.c.l.b16 %v2052
      %v2095 = vunpack.c.h.b16 %v2052
      %v2096 = vunpack.c.l.b16 %v2053
      %v2097 = vunpack.c.h.b16 %v2053
      %v2098 = vunpack.c.l.b16 %v2054
      %v2099 = vunpack.c.h.b16 %v2054
      %v2100 = vunpack.c.l.b16 %v2055
      %v2101 = vunpack.c.h.b16 %v2055
      %v2102 = vunpack.c.l.b16 %v2056
      %v2103 = vunpack.c.h.b16 %v2056
      %v2104 = vunpack.c.l.b16 %v2057
      %v2105 = vunpack.c.h.b16 %v2057
      %v2106 = vunpack.c.l.b16 %v2058
      %v2107 = vunpack.c.h.b16 %v2058
      %v2108 = vunpack.c.l.b16 %v2059
      %v2109 = vunpack.c.h.b16 %v2059
      %v2110 = vunpack.c.l.b16 %v2060
      %v2111 = vunpack.c.h.b16 %v2060
      %v2112 = vunpack.c.l.b16 %v2061
      %v2113 = vunpack.c.h.b16 %v2061
      %v2114 = vunpack.c.l.b16 %v2062
      %v2115 = vunpack.c.h.b16 %v2062
      %v2116 = vunpack.c.l.b16 %v2063
      %v2117 = vunpack.c.h.b16 %v2063
      %v2118 = vpack.c.b16 %v2082, %v2082
      %v2119 = vpack.c.b16 %v2083, %v2083
      %v2120 = vpack.c.b16 %v2084, %v2084
      %v2121 = vpack.c.b16 %v2085, %v2085
      %v2122 = vpack.c.b16 %v2086, %v2086
      %v2123 = vpack.c.b16 %v2087, %v2087
      %v2124 = vpack.c.b16 %v2088, %v2088
      %v2125 = vpack.c.b16 %v2089, %v2089
      %v2126 = vpack.c.b16 %v2090, %v2090
      %v2127 = vpack.c.b16 %v2091, %v2091
      %v2128 = vpack.c.b16 %v2092, %v2092
      %v2129 = vpack.c.b16 %v2093, %v2093
      %v2130 = vpack.c.b16 %v2094, %v2094
      %v2131 = vpack.c.b16 %v2095, %v2095
      %v2132 = vpack.c.b16 %v2096, %v2096
      %v2133 = vpack.c.b16 %v2097, %v2097
      %v2134 = vpack.c.b16 %v2098, %v2098
      %v2135 = vpack.c.b16 %v2099, %v2099
      %v2136 = vpack.c.b16 %v2100, %v2100
      %v2137 = vpack.c.b16 %v2101, %v2101
      %v2138 = vpack.c.b16 %v2102, %v2102
      %v2139 = vpack.c.b16 %v2103, %v2103
      %v2140 = vpack.c.b16 %v2104, %v2104
      %v2141 = vpack.c.b16 %v2105, %v2105
      %v2142 = vpack.c.b16 %v2106, %v2106
      %v2143 = vpack.c.b16 %v2107, %v2107
      %v2144 = vpack.c.b16 %v2108, %v2108
      %v2145 = vpack.c.b16 %v2109, %v2109
      %v2146 = vpack.c.b16 %v2110, %v2110
      %v2147 = vpack.c.b16 %v2111, %v2111
      %v2148 = vpack.c.b16 %v2112, %v2112
      %v2149 = vpack.c.b16 %v2113, %v2113
      %v2150 = vpack.c.b16 %v2114, %v2114
      %v2151 = vpack.c.b16 %v2115, %v2115
      %v2152 = vpack.c.b16 %v2116, %v2116
      %v2153 = vpack.c.b16 %v2117, %v2117
      %vm2154 = vsmask.f32 4368
      %vm2155 = vmor %vm1934, %vm2154
      %v2157 = vshrl.u32 %v2118, 16
      %v2159 = vrot.slane %v2157, 7
      %v2160 = vshll.u32 %v2118, 16
      %v2162 = vor.u32 %v2159, %v2160
      %v2163 = vrot.slane %v2159, 4
      %v2165 = vshrl.u32 %v2119, 16
      %v2167 = vrot.slane %v2165, 7
      %v2168 = vshll.u32 %v2119, 16
      %v2170 = vor.u32 %v2167, %v2168
      %v2171 = vsel %vm2155, %v2163, %v2170
      %v2172 = vrot.slane %v2167, 4
      %v2174 = vshrl.u32 %v2120, 16
      %v2176 = vrot.slane %v2174, 7
      %v2177 = vshll.u32 %v2120, 16
      %v2179 = vor.u32 %v2176, %v2177
      %v2180 = vrot.slane %v2176, 4
      %v2182 = vshrl.u32 %v2121, 16
      %v2184 = vrot.slane %v2182, 7
      %v2185 = vshll.u32 %v2121, 16
      %v2187 = vor.u32 %v2184, %v2185
      %v2188 = vsel %vm2155, %v2180, %v2187
      %v2189 = vrot.slane %v2184, 4
      %v2191 = vshrl.u32 %v2122, 16
      %v2193 = vrot.slane %v2191, 7
      %v2194 = vshll.u32 %v2122, 16
      %v2196 = vor.u32 %v2193, %v2194
      %v2197 = vrot.slane %v2193, 4
      %v2199 = vshrl.u32 %v2123, 16
      %v2201 = vrot.slane %v2199, 7
      %v2202 = vshll.u32 %v2123, 16
      %v2204 = vor.u32 %v2201, %v2202
      %v2205 = vsel %vm2155, %v2197, %v2204
      %v2206 = vrot.slane %v2201, 4
      %v2208 = vshrl.u32 %v2124, 16
      %v2210 = vrot.slane %v2208, 7
      %v2211 = vshll.u32 %v2124, 16
      %v2213 = vor.u32 %v2210, %v2211
      %v2214 = vrot.slane %v2210, 4
      %v2216 = vshrl.u32 %v2125, 16
      %v2218 = vrot.slane %v2216, 7
      %v2219 = vshll.u32 %v2125, 16
      %v2221 = vor.u32 %v2218, %v2219
      %v2222 = vsel %vm2155, %v2214, %v2221
      %v2223 = vrot.slane %v2218, 4
      %v2225 = vshrl.u32 %v2126, 16
      %v2227 = vrot.slane %v2225, 7
      %v2228 = vshll.u32 %v2126, 16
      %v2230 = vor.u32 %v2227, %v2228
      %v2231 = vrot.slane %v2227, 4
      %v2233 = vshrl.u32 %v2127, 16
      %v2235 = vrot.slane %v2233, 7
      %v2236 = vshll.u32 %v2127, 16
      %v2238 = vor.u32 %v2235, %v2236
      %v2239 = vsel %vm2155, %v2231, %v2238
      %v2240 = vrot.slane %v2235, 4
      %v2242 = vshrl.u32 %v2128, 16
      %v2244 = vrot.slane %v2242, 7
      %v2245 = vshll.u32 %v2128, 16
      %v2247 = vor.u32 %v2244, %v2245
      %v2248 = vrot.slane %v2244, 4
      %v2250 = vshrl.u32 %v2129, 16
      %v2252 = vrot.slane %v2250, 7
      %v2253 = vshll.u32 %v2129, 16
      %v2255 = vor.u32 %v2252, %v2253
      %v2256 = vsel %vm2155, %v2248, %v2255
      %v2257 = vrot.slane %v2252, 4
      %v2259 = vshrl.u32 %v2130, 16
      %v2261 = vrot.slane %v2259, 7
      %v2262 = vshll.u32 %v2130, 16
      %v2264 = vor.u32 %v2261, %v2262
      %v2265 = vrot.slane %v2261, 4
      %v2267 = vshrl.u32 %v2131, 16
      %v2269 = vrot.slane %v2267, 7
      %v2270 = vshll.u32 %v2131, 16
      %v2272 = vor.u32 %v2269, %v2270
      %v2273 = vsel %vm2155, %v2265, %v2272
      %v2274 = vrot.slane %v2269, 4
      %v2276 = vshrl.u32 %v2132, 16
      %v2278 = vrot.slane %v2276, 7
      %v2279 = vshll.u32 %v2132, 16
      %v2281 = vor.u32 %v2278, %v2279
      %v2282 = vrot.slane %v2278, 4
      %v2284 = vshrl.u32 %v2133, 16
      %v2286 = vrot.slane %v2284, 7
      %v2287 = vshll.u32 %v2133, 16
      %v2289 = vor.u32 %v2286, %v2287
      %v2290 = vsel %vm2155, %v2282, %v2289
      %v2291 = vrot.slane %v2286, 4
      %v2293 = vshrl.u32 %v2134, 16
      %v2295 = vrot.slane %v2293, 7
      %v2296 = vshll.u32 %v2134, 16
      %v2298 = vor.u32 %v2295, %v2296
      %v2299 = vrot.slane %v2295, 4
      %v2301 = vshrl.u32 %v2135, 16
      %v2303 = vrot.slane %v2301, 7
      %v2304 = vshll.u32 %v2135, 16
      %v2306 = vor.u32 %v2303, %v2304
      %v2307 = vsel %vm2155, %v2299, %v2306
      %v2308 = vrot.slane %v2303, 4
      %v2310 = vshrl.u32 %v2136, 16
      %v2312 = vrot.slane %v2310, 7
      %v2313 = vshll.u32 %v2136, 16
      %v2315 = vor.u32 %v2312, %v2313
      %v2316 = vrot.slane %v2312, 4
      %v2318 = vshrl.u32 %v2137, 16
      %v2320 = vrot.slane %v2318, 7
      %v2321 = vshll.u32 %v2137, 16
      %v2323 = vor.u32 %v2320, %v2321
      %v2324 = vsel %vm2155, %v2316, %v2323
      %v2325 = vrot.slane %v2320, 4
      %v2327 = vshrl.u32 %v2138, 16
      %v2329 = vrot.slane %v2327, 7
      %v2330 = vshll.u32 %v2138, 16
      %v2332 = vor.u32 %v2329, %v2330
      %v2333 = vrot.slane %v2329, 4
      %v2335 = vshrl.u32 %v2139, 16
      %v2337 = vrot.slane %v2335, 7
      %v2338 = vshll.u32 %v2139, 16
      %v2340 = vor.u32 %v2337, %v2338
      %v2341 = vsel %vm2155, %v2333, %v2340
      %v2342 = vrot.slane %v2337, 4
      %v2344 = vshrl.u32 %v2140, 16
      %v2346 = vrot.slane %v2344, 7
      %v2347 = vshll.u32 %v2140, 16
      %v2349 = vor.u32 %v2346, %v2347
      %v2350 = vrot.slane %v2346, 4
      %v2352 = vshrl.u32 %v2141, 16
      %v2354 = vrot.slane %v2352, 7
      %v2355 = vshll.u32 %v2141, 16
      %v2357 = vor.u32 %v2354, %v2355
      %v2358 = vsel %vm2155, %v2350, %v2357
      %v2359 = vrot.slane %v2354, 4
      %v2361 = vshrl.u32 %v2142, 16
      %v2363 = vrot.slane %v2361, 7
      %v2364 = vshll.u32 %v2142, 16
      %v2366 = vor.u32 %v2363, %v2364
      %v2367 = vrot.slane %v2363, 4
      %v2369 = vshrl.u32 %v2143, 16
      %v2371 = vrot.slane %v2369, 7
      %v2372 = vshll.u32 %v2143, 16
      %v2374 = vor.u32 %v2371, %v2372
      %v2375 = vsel %vm2155, %v2367, %v2374
      %v2376 = vrot.slane %v2371, 4
      %v2378 = vshrl.u32 %v2144, 16
      %v2380 = vrot.slane %v2378, 7
      %v2381 = vshll.u32 %v2144, 16
      %v2383 = vor.u32 %v2380, %v2381
      %v2384 = vrot.slane %v2380, 4
      %v2386 = vshrl.u32 %v2145, 16
      %v2388 = vrot.slane %v2386, 7
      %v2389 = vshll.u32 %v2145, 16
      %v2391 = vor.u32 %v2388, %v2389
      %v2392 = vsel %vm2155, %v2384, %v2391
      %v2393 = vrot.slane %v2388, 4
      %v2395 = vshrl.u32 %v2146, 16
      %v2397 = vrot.slane %v2395, 7
      %v2398 = vshll.u32 %v2146, 16
      %v2400 = vor.u32 %v2397, %v2398
      %v2401 = vrot.slane %v2397, 4
      %v2403 = vshrl.u32 %v2147, 16
      %v2405 = vrot.slane %v2403, 7
      %v2406 = vshll.u32 %v2147, 16
      %v2408 = vor.u32 %v2405, %v2406
      %v2409 = vsel %vm2155, %v2401, %v2408
      %v2410 = vrot.slane %v2405, 4
      %v2412 = vshrl.u32 %v2148, 16
      %v2414 = vrot.slane %v2412, 7
      %v2415 = vshll.u32 %v2148, 16
      %v2417 = vor.u32 %v2414, %v2415
      %v2418 = vrot.slane %v2414, 4
      %v2420 = vshrl.u32 %v2149, 16
      %v2422 = vrot.slane %v2420, 7
      %v2423 = vshll.u32 %v2149, 16
      %v2425 = vor.u32 %v2422, %v2423
      %v2426 = vsel %vm2155, %v2418, %v2425
      %v2427 = vrot.slane %v2422, 4
      %v2429 = vshrl.u32 %v2150, 16
      %v2431 = vrot.slane %v2429, 7
      %v2432 = vshll.u32 %v2150, 16
      %v2434 = vor.u32 %v2431, %v2432
      %v2435 = vrot.slane %v2431, 4
      %v2437 = vshrl.u32 %v2151, 16
      %v2439 = vrot.slane %v2437, 7
      %v2440 = vshll.u32 %v2151, 16
      %v2442 = vor.u32 %v2439, %v2440
      %v2443 = vsel %vm2155, %v2435, %v2442
      %v2444 = vrot.slane %v2439, 4
      %v2446 = vshrl.u32 %v2152, 16
      %v2448 = vrot.slane %v2446, 7
      %v2449 = vshll.u32 %v2152, 16
      %v2451 = vor.u32 %v2448, %v2449
      %v2452 = vrot.slane %v2448, 4
      %v2454 = vshrl.u32 %v2153, 16
      %v2456 = vrot.slane %v2454, 7
      %v2457 = vshll.u32 %v2153, 16
      %v2459 = vor.u32 %v2456, %v2457
      %v2460 = vsel %vm2155, %v2452, %v2459
      %v2461 = vrot.slane %v2456, 4
      %vm2516 = vcmask 60416
      %vm2517 = vmand %vm2516, %vm1990
      %v2518 = vld [vmem:[#allocation2] sm:$0xf]
      %v2519 = vsel %vm2517, %v2162, %v2518
      %2520 = vst [vmem:[#allocation2] sm:$0xf] %v2519
      %vm2521 = vcmask 60416
      %2522 = vst.msk [vmem:[#allocation2 + $0x4] sm:$0xf] %vm2521, %v2171
      %v2523 = vld [vmem:[#allocation2 + $0x8] sm:$0x1]
      %v2524 = vsel %vm1935, %v2172, %v2523
      %2525 = vst [vmem:[#allocation2 + $0x8] sm:$0x1] %v2524
      %v2526 = vld [vmem:[#allocation2 + $0xc] sm:$0xf]
      %v2527 = vsel %vm2517, %v2179, %v2526
      %2528 = vst [vmem:[#allocation2 + $0xc] sm:$0xf] %v2527
      %2529 = vst.msk [vmem:[#allocation2 + $0x10] sm:$0xf] %vm2521, %v2188
      %v2530 = vld [vmem:[#allocation2 + $0x14] sm:$0x1]
      %v2531 = vsel %vm1935, %v2189, %v2530
      %2532 = vst [vmem:[#allocation2 + $0x14] sm:$0x1] %v2531
      %v2533 = vld [vmem:[#allocation2 + $0x18] sm:$0xf]
      %v2534 = vsel %vm2517, %v2196, %v2533
      %2535 = vst [vmem:[#allocation2 + $0x18] sm:$0xf] %v2534
      %2536 = vst.msk [vmem:[#allocation2 + $0x1c] sm:$0xf] %vm2521, %v2205
      %v2537 = vld [vmem:[#allocation2 + $0x20] sm:$0x1]
      %v2538 = vsel %vm1935, %v2206, %v2537
      %2539 = vst [vmem:[#allocation2 + $0x20] sm:$0x1] %v2538
      %v2540 = vld [vmem:[#allocation2 + $0x24] sm:$0xf]
      %v2541 = vsel %vm2517, %v2213, %v2540
      %2542 = vst [vmem:[#allocation2 + $0x24] sm:$0xf] %v2541
      %2543 = vst.msk [vmem:[#allocation2 + $0x28] sm:$0xf] %vm2521, %v2222
      %v2544 = vld [vmem:[#allocation2 + $0x2c] sm:$0x1]
      %v2545 = vsel %vm1935, %v2223, %v2544
      %2546 = vst [vmem:[#allocation2 + $0x2c] sm:$0x1] %v2545
      %v2547 = vld [vmem:[#allocation2 + $0x30] sm:$0xf]
      %v2548 = vsel %vm2517, %v2230, %v2547
      %2549 = vst [vmem:[#allocation2 + $0x30] sm:$0xf] %v2548
      %2550 = vst.msk [vmem:[#allocation2 + $0x34] sm:$0xf] %vm2521, %v2239
      %v2551 = vld [vmem:[#allocation2 + $0x38] sm:$0x1]
      %v2552 = vsel %vm1935, %v2240, %v2551
      %2553 = vst [vmem:[#allocation2 + $0x38] sm:$0x1] %v2552
      %v2554 = vld [vmem:[#allocation2 + $0x3c] sm:$0xf]
      %v2555 = vsel %vm2517, %v2247, %v2554
      %2556 = vst [vmem:[#allocation2 + $0x3c] sm:$0xf] %v2555
      %2557 = vst.msk [vmem:[#allocation2 + $0x40] sm:$0xf] %vm2521, %v2256
      %v2558 = vld [vmem:[#allocation2 + $0x44] sm:$0x1]
      %v2559 = vsel %vm1935, %v2257, %v2558
      %2560 = vst [vmem:[#allocation2 + $0x44] sm:$0x1] %v2559
      %v2561 = vld [vmem:[#allocation2 + $0x48] sm:$0xf]
      %v2562 = vsel %vm2517, %v2264, %v2561
      %2563 = vst [vmem:[#allocation2 + $0x48] sm:$0xf] %v2562
      %2564 = vst.msk [vmem:[#allocation2 + $0x4c] sm:$0xf] %vm2521, %v2273
      %v2565 = vld [vmem:[#allocation2 + $0x50] sm:$0x1]
      %v2566 = vsel %vm1935, %v2274, %v2565
      %2567 = vst [vmem:[#allocation2 + $0x50] sm:$0x1] %v2566
      %v2568 = vld [vmem:[#allocation2 + $0x54] sm:$0xf]
      %v2569 = vsel %vm2517, %v2281, %v2568
      %2570 = vst [vmem:[#allocation2 + $0x54] sm:$0xf] %v2569
      %2571 = vst.msk [vmem:[#allocation2 + $0x58] sm:$0xf] %vm2521, %v2290
      %v2572 = vld [vmem:[#allocation2 + $0x5c] sm:$0x1]
      %v2573 = vsel %vm1935, %v2291, %v2572
      %2574 = vst [vmem:[#allocation2 + $0x5c] sm:$0x1] %v2573
      %v2575 = vld [vmem:[#allocation2 + $0x60] sm:$0xf]
      %v2576 = vsel %vm2517, %v2298, %v2575
      %2577 = vst [vmem:[#allocation2 + $0x60] sm:$0xf] %v2576
      %2578 = vst.msk [vmem:[#allocation2 + $0x64] sm:$0xf] %vm2521, %v2307
      %v2579 = vld [vmem:[#allocation2 + $0x68] sm:$0x1]
      %v2580 = vsel %vm1935, %v2308, %v2579
      %2581 = vst [vmem:[#allocation2 + $0x68] sm:$0x1] %v2580
      %v2582 = vld [vmem:[#allocation2 + $0x6c] sm:$0xf]
      %v2583 = vsel %vm2517, %v2315, %v2582
      %2584 = vst [vmem:[#allocation2 + $0x6c] sm:$0xf] %v2583
      %2585 = vst.msk [vmem:[#allocation2 + $0x70] sm:$0xf] %vm2521, %v2324
      %v2586 = vld [vmem:[#allocation2 + $0x74] sm:$0x1]
      %v2587 = vsel %vm1935, %v2325, %v2586
      %2588 = vst [vmem:[#allocation2 + $0x74] sm:$0x1] %v2587
      %v2589 = vld [vmem:[#allocation2 + $0x78] sm:$0xf]
      %v2590 = vsel %vm2517, %v2332, %v2589
      %2591 = vst [vmem:[#allocation2 + $0x78] sm:$0xf] %v2590
      %2592 = vst.msk [vmem:[#allocation2 + $0x7c] sm:$0xf] %vm2521, %v2341
      %v2593 = vld [vmem:[#allocation2 + $0x80] sm:$0x1]
      %v2594 = vsel %vm1935, %v2342, %v2593
      %2595 = vst [vmem:[#allocation2 + $0x80] sm:$0x1] %v2594
      %v2596 = vld [vmem:[#allocation2 + $0x84] sm:$0xf]
      %v2597 = vsel %vm2517, %v2349, %v2596
      %2598 = vst [vmem:[#allocation2 + $0x84] sm:$0xf] %v2597
      %2599 = vst.msk [vmem:[#allocation2 + $0x88] sm:$0xf] %vm2521, %v2358
      %v2600 = vld [vmem:[#allocation2 + $0x8c] sm:$0x1]
      %v2601 = vsel %vm1935, %v2359, %v2600
      %2602 = vst [vmem:[#allocation2 + $0x8c] sm:$0x1] %v2601
      %v2603 = vld [vmem:[#allocation2 + $0x90] sm:$0xf]
      %v2604 = vsel %vm2517, %v2366, %v2603
      %2605 = vst [vmem:[#allocation2 + $0x90] sm:$0xf] %v2604
      %2606 = vst.msk [vmem:[#allocation2 + $0x94] sm:$0xf] %vm2521, %v2375
      %v2607 = vld [vmem:[#allocation2 + $0x98] sm:$0x1]
      %v2608 = vsel %vm1935, %v2376, %v2607
      %2609 = vst [vmem:[#allocation2 + $0x98] sm:$0x1] %v2608
      %v2610 = vld [vmem:[#allocation2 + $0x9c] sm:$0xf]
      %v2611 = vsel %vm2517, %v2383, %v2610
      %2612 = vst [vmem:[#allocation2 + $0x9c] sm:$0xf] %v2611
      %2613 = vst.msk [vmem:[#allocation2 + $0xa0] sm:$0xf] %vm2521, %v2392
      %v2614 = vld [vmem:[#allocation2 + $0xa4] sm:$0x1]
      %v2615 = vsel %vm1935, %v2393, %v2614
      %2616 = vst [vmem:[#allocation2 + $0xa4] sm:$0x1] %v2615
      %v2617 = vld [vmem:[#allocation2 + $0xa8] sm:$0xf]
      %v2618 = vsel %vm2517, %v2400, %v2617
      %2619 = vst [vmem:[#allocation2 + $0xa8] sm:$0xf] %v2618
      %2620 = vst.msk [vmem:[#allocation2 + $0xac] sm:$0xf] %vm2521, %v2409
      %v2621 = vld [vmem:[#allocation2 + $0xb0] sm:$0x1]
      %v2622 = vsel %vm1935, %v2410, %v2621
      %2623 = vst [vmem:[#allocation2 + $0xb0] sm:$0x1] %v2622
      %v2624 = vld [vmem:[#allocation2 + $0xb4] sm:$0xf]
      %v2625 = vsel %vm2517, %v2417, %v2624
      %2626 = vst [vmem:[#allocation2 + $0xb4] sm:$0xf] %v2625
      %2627 = vst.msk [vmem:[#allocation2 + $0xb8] sm:$0xf] %vm2521, %v2426
      %v2628 = vld [vmem:[#allocation2 + $0xbc] sm:$0x1]
      %v2629 = vsel %vm1935, %v2427, %v2628
      %2630 = vst [vmem:[#allocation2 + $0xbc] sm:$0x1] %v2629
      %v2631 = vld [vmem:[#allocation2 + $0xc0] sm:$0xf]
      %v2632 = vsel %vm2517, %v2434, %v2631
      %2633 = vst [vmem:[#allocation2 + $0xc0] sm:$0xf] %v2632
      %2634 = vst.msk [vmem:[#allocation2 + $0xc4] sm:$0xf] %vm2521, %v2443
      %v2635 = vld [vmem:[#allocation2 + $0xc8] sm:$0x1]
      %v2636 = vsel %vm1935, %v2444, %v2635
      %2637 = vst [vmem:[#allocation2 + $0xc8] sm:$0x1] %v2636
      %v2638 = vld [vmem:[#allocation2 + $0xcc] sm:$0xf]
      %v2639 = vsel %vm2517, %v2451, %v2638
      %2640 = vst [vmem:[#allocation2 + $0xcc] sm:$0xf] %v2639
      %2641 = vst.msk [vmem:[#allocation2 + $0xd0] sm:$0xf] %vm2521, %v2460
      %v2642 = vld [vmem:[#allocation2 + $0xd4] sm:$0x1]
      %v2643 = vsel %vm1935, %v2461, %v2642
      %2644 = vst [vmem:[#allocation2 + $0xd4] sm:$0x1] %v2643
      %v2645 = vld [vmem:[#allocation2] sm:$0xf]
      %v2646 = vld [vmem:[#allocation2 + $0x4] sm:$0xf]
      %v2647 = vld [vmem:[#allocation2 + $0x8] sm:$0x1]
      %v2648 = vld [vmem:[#allocation2 + $0xc] sm:$0xf]
      %v2649 = vld [vmem:[#allocation2 + $0x10] sm:$0xf]
      %v2650 = vld [vmem:[#allocation2 + $0x14] sm:$0x1]
      %v2651 = vld [vmem:[#allocation2 + $0x18] sm:$0xf]
      %v2652 = vld [vmem:[#allocation2 + $0x1c] sm:$0xf]
      %v2653 = vld [vmem:[#allocation2 + $0x20] sm:$0x1]
      %v2654 = vld [vmem:[#allocation2 + $0x24] sm:$0xf]
      %v2655 = vld [vmem:[#allocation2 + $0x28] sm:$0xf]
      %v2656 = vld [vmem:[#allocation2 + $0x2c] sm:$0x1]
      %v2657 = vld [vmem:[#allocation2 + $0x30] sm:$0xf]
      %v2658 = vld [vmem:[#allocation2 + $0x34] sm:$0xf]
      %v2659 = vld [vmem:[#allocation2 + $0x38] sm:$0x1]
      %v2660 = vld [vmem:[#allocation2 + $0x3c] sm:$0xf]
      %v2661 = vld [vmem:[#allocation2 + $0x40] sm:$0xf]
      %v2662 = vld [vmem:[#allocation2 + $0x44] sm:$0x1]
      %v2663 = vld [vmem:[#allocation2 + $0x48] sm:$0xf]
      %v2664 = vld [vmem:[#allocation2 + $0x4c] sm:$0xf]
      %v2665 = vld [vmem:[#allocation2 + $0x50] sm:$0x1]
      %v2666 = vld [vmem:[#allocation2 + $0x54] sm:$0xf]
      %v2667 = vld [vmem:[#allocation2 + $0x58] sm:$0xf]
      %v2668 = vld [vmem:[#allocation2 + $0x5c] sm:$0x1]
      %v2669 = vld [vmem:[#allocation2 + $0x60] sm:$0xf]
      %v2670 = vld [vmem:[#allocation2 + $0x64] sm:$0xf]
      %v2671 = vld [vmem:[#allocation2 + $0x68] sm:$0x1]
      %v2672 = vld [vmem:[#allocation2 + $0x6c] sm:$0xf]
      %v2673 = vld [vmem:[#allocation2 + $0x70] sm:$0xf]
      %v2674 = vld [vmem:[#allocation2 + $0x74] sm:$0x1]
      %v2675 = vld [vmem:[#allocation2 + $0x78] sm:$0xf]
      %v2676 = vld [vmem:[#allocation2 + $0x7c] sm:$0xf]
      %v2677 = vld [vmem:[#allocation2 + $0x80] sm:$0x1]
      %v2678 = vld [vmem:[#allocation2 + $0x84] sm:$0xf]
      %v2679 = vld [vmem:[#allocation2 + $0x88] sm:$0xf]
      %v2680 = vld [vmem:[#allocation2 + $0x8c] sm:$0x1]
      %v2681 = vld [vmem:[#allocation2 + $0x90] sm:$0xf]
      %v2682 = vld [vmem:[#allocation2 + $0x94] sm:$0xf]
      %v2683 = vld [vmem:[#allocation2 + $0x98] sm:$0x1]
      %v2684 = vld [vmem:[#allocation2 + $0x9c] sm:$0xf]
      %v2685 = vld [vmem:[#allocation2 + $0xa0] sm:$0xf]
      %v2686 = vld [vmem:[#allocation2 + $0xa4] sm:$0x1]
      %v2687 = vld [vmem:[#allocation2 + $0xa8] sm:$0xf]
      %v2688 = vld [vmem:[#allocation2 + $0xac] sm:$0xf]
      %v2689 = vld [vmem:[#allocation2 + $0xb0] sm:$0x1]
      %v2690 = vld [vmem:[#allocation2 + $0xb4] sm:$0xf]
      %v2691 = vld [vmem:[#allocation2 + $0xb8] sm:$0xf]
      %v2692 = vld [vmem:[#allocation2 + $0xbc] sm:$0x1]
      %v2693 = vld [vmem:[#allocation2 + $0xc0] sm:$0xf]
      %v2694 = vld [vmem:[#allocation2 + $0xc4] sm:$0xf]
      %v2695 = vld [vmem:[#allocation2 + $0xc8] sm:$0x1]
      %v2696 = vld [vmem:[#allocation2 + $0xcc] sm:$0xf]
      %v2697 = vld [vmem:[#allocation2 + $0xd0] sm:$0xf]
      %v2698 = vld [vmem:[#allocation2 + $0xd4] sm:$0x1]
      %v2735 = vunpack.c.l.b16 %v2645
      %v2736 = vunpack.c.l.b16 %v2646
      %v2737 = vunpack.c.l.b16 %v2648
      %v2738 = vunpack.c.l.b16 %v2649
      %v2739 = vunpack.c.l.b16 %v2651
      %v2740 = vunpack.c.l.b16 %v2652
      %v2741 = vunpack.c.l.b16 %v2654
      %v2742 = vunpack.c.l.b16 %v2655
      %v2743 = vunpack.c.l.b16 %v2657
      %v2744 = vunpack.c.l.b16 %v2658
      %v2745 = vunpack.c.l.b16 %v2660
      %v2746 = vunpack.c.l.b16 %v2661
      %v2747 = vunpack.c.l.b16 %v2663
      %v2748 = vunpack.c.l.b16 %v2664
      %v2749 = vunpack.c.l.b16 %v2666
      %v2750 = vunpack.c.l.b16 %v2667
      %v2751 = vunpack.c.l.b16 %v2669
      %v2752 = vunpack.c.l.b16 %v2670
      %v2753 = vunpack.c.l.b16 %v2672
      %v2754 = vunpack.c.l.b16 %v2673
      %v2755 = vunpack.c.l.b16 %v2675
      %v2756 = vunpack.c.l.b16 %v2676
      %v2757 = vunpack.c.l.b16 %v2678
      %v2758 = vunpack.c.l.b16 %v2679
      %v2759 = vunpack.c.l.b16 %v2681
      %v2760 = vunpack.c.l.b16 %v2682
      %v2761 = vunpack.c.l.b16 %v2684
      %v2762 = vunpack.c.l.b16 %v2685
      %v2763 = vunpack.c.l.b16 %v2687
      %v2764 = vunpack.c.l.b16 %v2688
      %v2765 = vunpack.c.l.b16 %v2690
      %v2766 = vunpack.c.l.b16 %v2691
      %v2767 = vunpack.c.l.b16 %v2693
      %v2768 = vunpack.c.l.b16 %v2694
      %v2769 = vunpack.c.l.b16 %v2696
      %v2770 = vunpack.c.l.b16 %v2697
      %v2771 = vpack.c.b16 %v2736, %v2735
      %v2772 = vpack.c.b16 %v2738, %v2737
      %v2773 = vpack.c.b16 %v2740, %v2739
      %v2774 = vpack.c.b16 %v2742, %v2741
      %v2775 = vpack.c.b16 %v2744, %v2743
      %v2776 = vpack.c.b16 %v2746, %v2745
      %v2777 = vpack.c.b16 %v2748, %v2747
      %v2778 = vpack.c.b16 %v2750, %v2749
      %v2779 = vpack.c.b16 %v2752, %v2751
      %v2780 = vpack.c.b16 %v2754, %v2753
      %v2781 = vpack.c.b16 %v2756, %v2755
      %v2782 = vpack.c.b16 %v2758, %v2757
      %v2783 = vpack.c.b16 %v2760, %v2759
      %v2784 = vpack.c.b16 %v2762, %v2761
      %v2785 = vpack.c.b16 %v2764, %v2763
      %v2786 = vpack.c.b16 %v2766, %v2765
      %v2787 = vpack.c.b16 %v2768, %v2767
      %v2788 = vpack.c.b16 %v2770, %v2769
      %v2807 = vunpack.c.l.b16 %v2647
      %v2808 = vunpack.c.l.b16 %v2650
      %v2809 = vunpack.c.l.b16 %v2653
      %v2810 = vunpack.c.l.b16 %v2656
      %v2811 = vunpack.c.l.b16 %v2659
      %v2812 = vunpack.c.l.b16 %v2662
      %v2813 = vunpack.c.l.b16 %v2665
      %v2814 = vunpack.c.l.b16 %v2668
      %v2815 = vunpack.c.l.b16 %v2671
      %v2816 = vunpack.c.l.b16 %v2674
      %v2817 = vunpack.c.l.b16 %v2677
      %v2818 = vunpack.c.l.b16 %v2680
      %v2819 = vunpack.c.l.b16 %v2683
      %v2820 = vunpack.c.l.b16 %v2686
      %v2821 = vunpack.c.l.b16 %v2689
      %v2822 = vunpack.c.l.b16 %v2692
      %v2823 = vunpack.c.l.b16 %v2695
      %v2824 = vunpack.c.l.b16 %v2698
      %v2825 = vpack.c.b16 %v2807, %v2807
      %v2826 = vpack.c.b16 %v2808, %v2808
      %v2827 = vpack.c.b16 %v2809, %v2809
      %v2828 = vpack.c.b16 %v2810, %v2810
      %v2829 = vpack.c.b16 %v2811, %v2811
      %v2830 = vpack.c.b16 %v2812, %v2812
      %v2831 = vpack.c.b16 %v2813, %v2813
      %v2832 = vpack.c.b16 %v2814, %v2814
      %v2833 = vpack.c.b16 %v2815, %v2815
      %v2834 = vpack.c.b16 %v2816, %v2816
      %v2835 = vpack.c.b16 %v2817, %v2817
      %v2836 = vpack.c.b16 %v2818, %v2818
      %v2837 = vpack.c.b16 %v2819, %v2819
      %v2838 = vpack.c.b16 %v2820, %v2820
      %v2839 = vpack.c.b16 %v2821, %v2821
      %v2840 = vpack.c.b16 %v2822, %v2822
      %v2841 = vpack.c.b16 %v2823, %v2823
      %v2842 = vpack.c.b16 %v2824, %v2824
      %v2844 = vshrl.u32 %v2771, 16
      %v2846 = vshll.u32 %v2771, 16
      %v2848 = vrot.slane %v2846, 1
      %v2849 = vor.u32 %v2844, %v2848
      %v2851 = vshll.u32 %v2825, 16
      %v2853 = vrot.slane %v2851, 1
      %v2854 = vsel %vm446, %v2849, %v2853
      %v2856 = vshrl.u32 %v2772, 16
      %v2858 = vshll.u32 %v2772, 16
      %v2860 = vrot.slane %v2858, 1
      %v2861 = vor.u32 %v2856, %v2860
      %v2863 = vshll.u32 %v2826, 16
      %v2865 = vrot.slane %v2863, 1
      %v2866 = vsel %vm446, %v2861, %v2865
      %v2868 = vshrl.u32 %v2773, 16
      %v2870 = vshll.u32 %v2773, 16
      %v2872 = vrot.slane %v2870, 1
      %v2873 = vor.u32 %v2868, %v2872
      %v2875 = vshll.u32 %v2827, 16
      %v2877 = vrot.slane %v2875, 1
      %v2878 = vsel %vm446, %v2873, %v2877
      %v2880 = vshrl.u32 %v2774, 16
      %v2882 = vshll.u32 %v2774, 16
      %v2884 = vrot.slane %v2882, 1
      %v2885 = vor.u32 %v2880, %v2884
      %v2887 = vshll.u32 %v2828, 16
      %v2889 = vrot.slane %v2887, 1
      %v2890 = vsel %vm446, %v2885, %v2889
      %v2892 = vshrl.u32 %v2775, 16
      %v2894 = vshll.u32 %v2775, 16
      %v2896 = vrot.slane %v2894, 1
      %v2897 = vor.u32 %v2892, %v2896
      %v2899 = vshll.u32 %v2829, 16
      %v2901 = vrot.slane %v2899, 1
      %v2902 = vsel %vm446, %v2897, %v2901
      %v2904 = vshrl.u32 %v2776, 16
      %v2906 = vshll.u32 %v2776, 16
      %v2908 = vrot.slane %v2906, 1
      %v2909 = vor.u32 %v2904, %v2908
      %v2911 = vshll.u32 %v2830, 16
      %v2913 = vrot.slane %v2911, 1
      %v2914 = vsel %vm446, %v2909, %v2913
      %v2916 = vshrl.u32 %v2777, 16
      %v2918 = vshll.u32 %v2777, 16
      %v2920 = vrot.slane %v2918, 1
      %v2921 = vor.u32 %v2916, %v2920
      %v2923 = vshll.u32 %v2831, 16
      %v2925 = vrot.slane %v2923, 1
      %v2926 = vsel %vm446, %v2921, %v2925
      %v2928 = vshrl.u32 %v2778, 16
      %v2930 = vshll.u32 %v2778, 16
      %v2932 = vrot.slane %v2930, 1
      %v2933 = vor.u32 %v2928, %v2932
      %v2935 = vshll.u32 %v2832, 16
      %v2937 = vrot.slane %v2935, 1
      %v2938 = vsel %vm446, %v2933, %v2937
      %v2940 = vshrl.u32 %v2779, 16
      %v2942 = vshll.u32 %v2779, 16
      %v2944 = vrot.slane %v2942, 1
      %v2945 = vor.u32 %v2940, %v2944
      %v2947 = vshll.u32 %v2833, 16
      %v2949 = vrot.slane %v2947, 1
      %v2950 = vsel %vm446, %v2945, %v2949
      %v2952 = vshrl.u32 %v2780, 16
      %v2954 = vshll.u32 %v2780, 16
      %v2956 = vrot.slane %v2954, 1
      %v2957 = vor.u32 %v2952, %v2956
      %v2959 = vshll.u32 %v2834, 16
      %v2961 = vrot.slane %v2959, 1
      %v2962 = vsel %vm446, %v2957, %v2961
      %v2964 = vshrl.u32 %v2781, 16
      %v2966 = vshll.u32 %v2781, 16
      %v2968 = vrot.slane %v2966, 1
      %v2969 = vor.u32 %v2964, %v2968
      %v2971 = vshll.u32 %v2835, 16
      %v2973 = vrot.slane %v2971, 1
      %v2974 = vsel %vm446, %v2969, %v2973
      %v2976 = vshrl.u32 %v2782, 16
      %v2978 = vshll.u32 %v2782, 16
      %v2980 = vrot.slane %v2978, 1
      %v2981 = vor.u32 %v2976, %v2980
      %v2983 = vshll.u32 %v2836, 16
      %v2985 = vrot.slane %v2983, 1
      %v2986 = vsel %vm446, %v2981, %v2985
      %v2988 = vshrl.u32 %v2783, 16
      %v2990 = vshll.u32 %v2783, 16
      %v2992 = vrot.slane %v2990, 1
      %v2993 = vor.u32 %v2988, %v2992
      %v2995 = vshll.u32 %v2837, 16
      %v2997 = vrot.slane %v2995, 1
      %v2998 = vsel %vm446, %v2993, %v2997
      %v3000 = vshrl.u32 %v2784, 16
      %v3002 = vshll.u32 %v2784, 16
      %v3004 = vrot.slane %v3002, 1
      %v3005 = vor.u32 %v3000, %v3004
      %v3007 = vshll.u32 %v2838, 16
      %v3009 = vrot.slane %v3007, 1
      %v3010 = vsel %vm446, %v3005, %v3009
      %v3012 = vshrl.u32 %v2785, 16
      %v3014 = vshll.u32 %v2785, 16
      %v3016 = vrot.slane %v3014, 1
      %v3017 = vor.u32 %v3012, %v3016
      %v3019 = vshll.u32 %v2839, 16
      %v3021 = vrot.slane %v3019, 1
      %v3022 = vsel %vm446, %v3017, %v3021
      %v3024 = vshrl.u32 %v2786, 16
      %v3026 = vshll.u32 %v2786, 16
      %v3028 = vrot.slane %v3026, 1
      %v3029 = vor.u32 %v3024, %v3028
      %v3031 = vshll.u32 %v2840, 16
      %v3033 = vrot.slane %v3031, 1
      %v3034 = vsel %vm446, %v3029, %v3033
      %v3036 = vshrl.u32 %v2787, 16
      %v3038 = vshll.u32 %v2787, 16
      %v3040 = vrot.slane %v3038, 1
      %v3041 = vor.u32 %v3036, %v3040
      %v3043 = vshll.u32 %v2841, 16
      %v3045 = vrot.slane %v3043, 1
      %v3046 = vsel %vm446, %v3041, %v3045
      %v3048 = vshrl.u32 %v2788, 16
      %v3050 = vshll.u32 %v2788, 16
      %v3052 = vrot.slane %v3050, 1
      %v3053 = vor.u32 %v3048, %v3052
      %v3055 = vshll.u32 %v2842, 16
      %v3057 = vrot.slane %v3055, 1
      %v3058 = vsel %vm446, %v3053, %v3057
      %3059 = vrot.lane.b32.xlu0 %v2854, 8
      %v3060 = vpop.permute.xlu0 %3059
      %3061 = vrot.lane.b32.xlu0 %v2866, 8
      %v3062 = vpop.permute.xlu0 %3061
      %3063 = vrot.lane.b32.xlu0 %v2878, 8
      %v3064 = vpop.permute.xlu0 %3063
      %3065 = vrot.lane.b32.xlu0 %v2890, 8
      %v3066 = vpop.permute.xlu0 %3065
      %3067 = vrot.lane.b32.xlu0 %v2902, 8
      %v3068 = vpop.permute.xlu0 %3067
      %3069 = vrot.lane.b32.xlu0 %v2914, 8
      %v3070 = vpop.permute.xlu0 %3069
      %3071 = vrot.lane.b32.xlu0 %v2926, 8
      %v3072 = vpop.permute.xlu0 %3071
      %3073 = vrot.lane.b32.xlu0 %v2938, 8
      %v3074 = vpop.permute.xlu0 %3073
      %3075 = vrot.lane.b32.xlu0 %v2950, 8
      %v3076 = vpop.permute.xlu0 %3075
      %3077 = vrot.lane.b32.xlu0 %v2962, 8
      %v3078 = vpop.permute.xlu0 %3077
      %3079 = vrot.lane.b32.xlu0 %v2974, 8
      %v3080 = vpop.permute.xlu0 %3079
      %3081 = vrot.lane.b32.xlu0 %v2986, 8
      %v3082 = vpop.permute.xlu0 %3081
      %3083 = vrot.lane.b32.xlu0 %v2998, 8
      %v3084 = vpop.permute.xlu0 %3083
      %3085 = vrot.lane.b32.xlu0 %v3010, 8
      %v3086 = vpop.permute.xlu0 %3085
      %3087 = vrot.lane.b32.xlu0 %v3022, 8
      %v3088 = vpop.permute.xlu0 %3087
      %3089 = vrot.lane.b32.xlu0 %v3034, 8
      %v3090 = vpop.permute.xlu0 %3089
      %3091 = vrot.lane.b32.xlu0 %v3046, 8
      %v3092 = vpop.permute.xlu0 %3091
      %3093 = vrot.lane.b32.xlu0 %v3058, 8
      %v3094 = vpop.permute.xlu0 %3093
      %v3095 = vrot.slane %v2771, 1
      %v3096 = vrot.slane %v2825, 1
      %v3097 = vsel %vm727, %v3095, %v3096
      %v3098 = vrot.slane %v2772, 1
      %v3099 = vrot.slane %v2826, 1
      %v3100 = vsel %vm727, %v3098, %v3099
      %v3101 = vrot.slane %v2773, 1
      %v3102 = vrot.slane %v2827, 1
      %v3103 = vsel %vm727, %v3101, %v3102
      %v3104 = vrot.slane %v2774, 1
      %v3105 = vrot.slane %v2828, 1
      %v3106 = vsel %vm727, %v3104, %v3105
      %v3107 = vrot.slane %v2775, 1
      %v3108 = vrot.slane %v2829, 1
      %v3109 = vsel %vm727, %v3107, %v3108
      %v3110 = vrot.slane %v2776, 1
      %v3111 = vrot.slane %v2830, 1
      %v3112 = vsel %vm727, %v3110, %v3111
      %v3113 = vrot.slane %v2777, 1
      %v3114 = vrot.slane %v2831, 1
      %v3115 = vsel %vm727, %v3113, %v3114
      %v3116 = vrot.slane %v2778, 1
      %v3117 = vrot.slane %v2832, 1
      %v3118 = vsel %vm727, %v3116, %v3117
      %v3119 = vrot.slane %v2779, 1
      %v3120 = vrot.slane %v2833, 1
      %v3121 = vsel %vm727, %v3119, %v3120
      %v3122 = vrot.slane %v2780, 1
      %v3123 = vrot.slane %v2834, 1
      %v3124 = vsel %vm727, %v3122, %v3123
      %v3125 = vrot.slane %v2781, 1
      %v3126 = vrot.slane %v2835, 1
      %v3127 = vsel %vm727, %v3125, %v3126
      %v3128 = vrot.slane %v2782, 1
      %v3129 = vrot.slane %v2836, 1
      %v3130 = vsel %vm727, %v3128, %v3129
      %v3131 = vrot.slane %v2783, 1
      %v3132 = vrot.slane %v2837, 1
      %v3133 = vsel %vm727, %v3131, %v3132
      %v3134 = vrot.slane %v2784, 1
      %v3135 = vrot.slane %v2838, 1
      %v3136 = vsel %vm727, %v3134, %v3135
      %v3137 = vrot.slane %v2785, 1
      %v3138 = vrot.slane %v2839, 1
      %v3139 = vsel %vm727, %v3137, %v3138
      %v3140 = vrot.slane %v2786, 1
      %v3141 = vrot.slane %v2840, 1
      %v3142 = vsel %vm727, %v3140, %v3141
      %v3143 = vrot.slane %v2787, 1
      %v3144 = vrot.slane %v2841, 1
      %v3145 = vsel %vm727, %v3143, %v3144
      %v3146 = vrot.slane %v2788, 1
      %v3147 = vrot.slane %v2842, 1
      %v3148 = vsel %vm727, %v3146, %v3147
      %3149 = vrot.lane.b32.xlu0 %v3097, 16
      %v3150 = vpop.permute.xlu0 %3149
      %3151 = vrot.lane.b32.xlu0 %v3100, 16
      %v3152 = vpop.permute.xlu0 %3151
      %3153 = vrot.lane.b32.xlu0 %v3103, 16
      %v3154 = vpop.permute.xlu0 %3153
      %3155 = vrot.lane.b32.xlu0 %v3106, 16
      %v3156 = vpop.permute.xlu0 %3155
      %3157 = vrot.lane.b32.xlu0 %v3109, 16
      %v3158 = vpop.permute.xlu0 %3157
      %3159 = vrot.lane.b32.xlu0 %v3112, 16
      %v3160 = vpop.permute.xlu0 %3159
      %3161 = vrot.lane.b32.xlu0 %v3115, 16
      %v3162 = vpop.permute.xlu0 %3161
      %3163 = vrot.lane.b32.xlu0 %v3118, 16
      %v3164 = vpop.permute.xlu0 %3163
      %3165 = vrot.lane.b32.xlu0 %v3121, 16
      %v3166 = vpop.permute.xlu0 %3165
      %3167 = vrot.lane.b32.xlu0 %v3124, 16
      %v3168 = vpop.permute.xlu0 %3167
      %3169 = vrot.lane.b32.xlu0 %v3127, 16
      %v3170 = vpop.permute.xlu0 %3169
      %3171 = vrot.lane.b32.xlu0 %v3130, 16
      %v3172 = vpop.permute.xlu0 %3171
      %3173 = vrot.lane.b32.xlu0 %v3133, 16
      %v3174 = vpop.permute.xlu0 %3173
      %3175 = vrot.lane.b32.xlu0 %v3136, 16
      %v3176 = vpop.permute.xlu0 %3175
      %3177 = vrot.lane.b32.xlu0 %v3139, 16
      %v3178 = vpop.permute.xlu0 %3177
      %3179 = vrot.lane.b32.xlu0 %v3142, 16
      %v3180 = vpop.permute.xlu0 %3179
      %3181 = vrot.lane.b32.xlu0 %v3145, 16
      %v3182 = vpop.permute.xlu0 %3181
      %3183 = vrot.lane.b32.xlu0 %v3148, 16
      %v3184 = vpop.permute.xlu0 %3183
      %v3186 = vsel %vm828, %v2771, %v3060
      %v3188 = vsel %vm828, %v2772, %v3062
      %v3190 = vsel %vm828, %v2773, %v3064
      %v3192 = vsel %vm828, %v2774, %v3066
      %v3194 = vsel %vm828, %v2775, %v3068
      %v3196 = vsel %vm828, %v2776, %v3070
      %v3198 = vsel %vm828, %v2777, %v3072
      %v3200 = vsel %vm828, %v2778, %v3074
      %v3202 = vsel %vm828, %v2779, %v3076
      %v3204 = vsel %vm828, %v2780, %v3078
      %v3206 = vsel %vm828, %v2781, %v3080
      %v3208 = vsel %vm828, %v2782, %v3082
      %v3210 = vsel %vm828, %v2783, %v3084
      %v3212 = vsel %vm828, %v2784, %v3086
      %v3214 = vsel %vm828, %v2785, %v3088
      %v3216 = vsel %vm828, %v2786, %v3090
      %v3218 = vsel %vm828, %v2787, %v3092
      %v3220 = vsel %vm828, %v2788, %v3094
      %v3222 = vsel %vm869, %v3186, %v3150
      %v3224 = vsel %vm869, %v3188, %v3152
      %v3226 = vsel %vm869, %v3190, %v3154
      %v3228 = vsel %vm869, %v3192, %v3156
      %v3230 = vsel %vm869, %v3194, %v3158
      %v3232 = vsel %vm869, %v3196, %v3160
      %v3234 = vsel %vm869, %v3198, %v3162
      %v3236 = vsel %vm869, %v3200, %v3164
      %v3238 = vsel %vm869, %v3202, %v3166
      %v3240 = vsel %vm869, %v3204, %v3168
      %v3242 = vsel %vm869, %v3206, %v3170
      %v3244 = vsel %vm869, %v3208, %v3172
      %v3246 = vsel %vm869, %v3210, %v3174
      %v3248 = vsel %vm869, %v3212, %v3176
      %v3250 = vsel %vm869, %v3214, %v3178
      %v3252 = vsel %vm869, %v3216, %v3180
      %v3254 = vsel %vm869, %v3218, %v3182
      %v3256 = vsel %vm869, %v3220, %v3184
      %v3257 = vld [vmem:[%s3] sm:$0xf]
      %v3258 = vld [vmem:[%s3 + $0x4] sm:$0xf]
      %v3259 = vld [vmem:[%s3 + $0x8] sm:$0xf]
      %v3263 = vunpack.c.l.b16 %v3257
      %v3264 = vunpack.c.l.b16 %v3258
      %v3265 = vunpack.c.l.b16 %v3259
      %v3266 = vpack.c.b16 %v3264, %v3263
      %v3267 = vpack.c.b16 %v3265, %v3265
      %v3269 = vsel %vm922, %v3222, 0
      %v3271 = vsel %vm922, %v3224, 0
      %v3273 = vsel %vm922, %v3226, 0
      %v3275 = vsel %vm922, %v3228, 0
      %v3277 = vsel %vm922, %v3230, 0
      %v3279 = vsel %vm922, %v3232, 0
      %v3281 = vsel %vm922, %v3234, 0
      %v3283 = vsel %vm922, %v3236, 0
      %v3285 = vsel %vm922, %v3238, 0
      %v3287 = vsel %vm922, %v3240, 0
      %v3289 = vsel %vm922, %v3242, 0
      %v3291 = vsel %vm922, %v3244, 0
      %v3293 = vsel %vm922, %v3246, 0
      %v3295 = vsel %vm922, %v3248, 0
      %v3297 = vsel %vm922, %v3250, 0
      %v3299 = vsel %vm922, %v3252, 0
      %v3302 = vsel %vm959, %v3267, 0
      %3304 = vmatprep.subr.bf16.mxu0 0
      %3305 = vmatpush1.bf16.msra.mxu0 %v3266
      %3306 = vmatprep.subr.bf16.mxu0 0
      %3307 = vmatpush1.bf16.msra.mxu0 %v3302
      %3308 = vmatprep.subr.bf16.mxu0 0
      %3309 = vmatpush1.bf16.msra.mxu0 0
      %3310 = vmatprep.subr.bf16.mxu0 0
      %3311 = vmatpush1.bf16.msra.mxu0 0
      %3312 = vmatprep.subr.bf16.mxu0 0
      %3313 = vmatpush1.bf16.msra.mxu0 0
      %3314 = vmatprep.subr.bf16.mxu0 0
      %3315 = vmatpush1.bf16.msra.mxu0 0
      %3316 = vmatprep.subr.bf16.mxu0 0
      %3317 = vmatpush1.bf16.msra.mxu0 0
      %3318 = vmatprep.subr.bf16.mxu0 0
      %3319 = vmatpush1.bf16.msra.mxu0 0
      %3320 = vmatprep.subr.bf16.mxu0 0
      %3321 = vmatpush1.bf16.msra.mxu0 0
      %3322 = vmatprep.subr.bf16.mxu0 0
      %3323 = vmatpush1.bf16.msra.mxu0 0
      %3324 = vmatprep.subr.bf16.mxu0 0
      %3325 = vmatpush1.bf16.msra.mxu0 0
      %3326 = vmatprep.subr.bf16.mxu0 0
      %3327 = vmatpush1.bf16.msra.mxu0 0
      %3328 = vmatprep.subr.bf16.mxu0 0
      %3329 = vmatpush1.bf16.msra.mxu0 0
      %3330 = vmatprep.subr.bf16.mxu0 0
      %3331 = vmatpush1.bf16.msra.mxu0 0
      %3332 = vmatprep.subr.bf16.mxu0 0
      %3333 = vmatpush1.bf16.msra.mxu0 0
      %3334 = vmatprep.subr.bf16.mxu0 0
      %3335 = vmatpush1.bf16.msra.mxu0 0
      %3336 = vmatprep.mubr.bf16.mxu0 0
      %3337 = vmatmul.mubr.bf16.gmra.mrb[0].mxu0 %v3269
      %v3338 = vpop.f32.mrb[0].mxu0
      %v3339 = vadd.f32 0.0, %v3338
      %v3340 = vpop.f32.mrb[0].mxu0
      %v3341 = vpop.f32.mrb[0].mxu0
      %v3342 = vadd.f32 0.0, %v3341
      %v3343 = vpop.f32.mrb[0].mxu0
      %3344 = vmatprep.mubr.bf16.mxu0 0
      %3345 = vmatmul.mubr.bf16.gmra.mrb[0].mxu0 %v3271
      %v3346 = vpop.f32.mrb[0].mxu0
      %v3347 = vadd.f32 0.0, %v3346
      %v3348 = vpop.f32.mrb[0].mxu0
      %v3349 = vpop.f32.mrb[0].mxu0
      %v3350 = vadd.f32 0.0, %v3349
      %v3351 = vpop.f32.mrb[0].mxu0
      %3352 = vmatprep.mubr.bf16.mxu0 0
      %3353 = vmatmul.mubr.bf16.gmra.mrb[0].mxu0 %v3273
      %v3354 = vpop.f32.mrb[0].mxu0
      %v3355 = vadd.f32 0.0, %v3354
      %v3356 = vpop.f32.mrb[0].mxu0
      %v3357 = vpop.f32.mrb[0].mxu0
      %v3358 = vadd.f32 0.0, %v3357
      %v3359 = vpop.f32.mrb[0].mxu0
      %3360 = vmatprep.mubr.bf16.mxu0 0
      %3361 = vmatmul.mubr.bf16.gmra.mrb[0].mxu0 %v3275
      %v3362 = vpop.f32.mrb[0].mxu0
      %v3363 = vadd.f32 0.0, %v3362
      %v3364 = vpop.f32.mrb[0].mxu0
      %v3365 = vpop.f32.mrb[0].mxu0
      %v3366 = vadd.f32 0.0, %v3365
      %v3367 = vpop.f32.mrb[0].mxu0
      %3368 = vmatprep.mubr.bf16.mxu0 0
      %3369 = vmatmul.mubr.bf16.gmra.mrb[0].mxu0 %v3277
      %v3370 = vpop.f32.mrb[0].mxu0
      %v3371 = vadd.f32 0.0, %v3370
      %v3372 = vpop.f32.mrb[0].mxu0
      %v3373 = vpop.f32.mrb[0].mxu0
      %v3374 = vadd.f32 0.0, %v3373
      %v3375 = vpop.f32.mrb[0].mxu0
      %3376 = vmatprep.mubr.bf16.mxu0 0
      %3377 = vmatmul.mubr.bf16.gmra.mrb[0].mxu0 %v3279
      %v3378 = vpop.f32.mrb[0].mxu0
      %v3379 = vadd.f32 0.0, %v3378
      %v3380 = vpop.f32.mrb[0].mxu0
      %v3381 = vpop.f32.mrb[0].mxu0
      %v3382 = vadd.f32 0.0, %v3381
      %v3383 = vpop.f32.mrb[0].mxu0
      %3384 = vmatprep.mubr.bf16.mxu0 0
      %3385 = vmatmul.mubr.bf16.gmra.mrb[0].mxu0 %v3281
      %v3386 = vpop.f32.mrb[0].mxu0
      %v3387 = vadd.f32 0.0, %v3386
      %v3388 = vpop.f32.mrb[0].mxu0
      %v3389 = vpop.f32.mrb[0].mxu0
      %v3390 = vadd.f32 0.0, %v3389
      %v3391 = vpop.f32.mrb[0].mxu0
      %3392 = vmatprep.mubr.bf16.mxu0 0
      %3393 = vmatmul.mubr.bf16.gmra.mrb[0].mxu0 %v3283
      %v3394 = vpop.f32.mrb[0].mxu0
      %v3395 = vadd.f32 0.0, %v3394
      %v3396 = vpop.f32.mrb[0].mxu0
      %v3397 = vpop.f32.mrb[0].mxu0
      %v3398 = vadd.f32 0.0, %v3397
      %v3399 = vpop.f32.mrb[0].mxu0
      %3400 = vmatprep.mubr.bf16.mxu0 0
      %3401 = vmatmul.mubr.bf16.gmra.mrb[0].mxu0 %v3285
      %v3402 = vpop.f32.mrb[0].mxu0
      %v3403 = vadd.f32 0.0, %v3402
      %v3404 = vpop.f32.mrb[0].mxu0
      %v3405 = vpop.f32.mrb[0].mxu0
      %v3406 = vadd.f32 0.0, %v3405
      %v3407 = vpop.f32.mrb[0].mxu0
      %3408 = vmatprep.mubr.bf16.mxu0 0
      %3409 = vmatmul.mubr.bf16.gmra.mrb[0].mxu0 %v3287
      %v3410 = vpop.f32.mrb[0].mxu0
      %v3411 = vadd.f32 0.0, %v3410
      %v3412 = vpop.f32.mrb[0].mxu0
      %v3413 = vpop.f32.mrb[0].mxu0
      %v3414 = vadd.f32 0.0, %v3413
      %v3415 = vpop.f32.mrb[0].mxu0
      %3416 = vmatprep.mubr.bf16.mxu0 0
      %3417 = vmatmul.mubr.bf16.gmra.mrb[0].mxu0 %v3289
      %v3418 = vpop.f32.mrb[0].mxu0
      %v3419 = vadd.f32 0.0, %v3418
      %v3420 = vpop.f32.mrb[0].mxu0
      %v3421 = vpop.f32.mrb[0].mxu0
      %v3422 = vadd.f32 0.0, %v3421
      %v3423 = vpop.f32.mrb[0].mxu0
      %3424 = vmatprep.mubr.bf16.mxu0 0
      %3425 = vmatmul.mubr.bf16.gmra.mrb[0].mxu0 %v3291
      %v3426 = vpop.f32.mrb[0].mxu0
      %v3427 = vadd.f32 0.0, %v3426
      %v3428 = vpop.f32.mrb[0].mxu0
      %v3429 = vpop.f32.mrb[0].mxu0
      %v3430 = vadd.f32 0.0, %v3429
      %v3431 = vpop.f32.mrb[0].mxu0
      %3432 = vmatprep.mubr.bf16.mxu0 0
      %3433 = vmatmul.mubr.bf16.gmra.mrb[0].mxu0 %v3293
      %v3434 = vpop.f32.mrb[0].mxu0
      %v3435 = vadd.f32 0.0, %v3434
      %v3436 = vpop.f32.mrb[0].mxu0
      %v3437 = vpop.f32.mrb[0].mxu0
      %v3438 = vadd.f32 0.0, %v3437
      %v3439 = vpop.f32.mrb[0].mxu0
      %3440 = vmatprep.mubr.bf16.mxu0 0
      %3441 = vmatmul.mubr.bf16.gmra.mrb[0].mxu0 %v3295
      %v3442 = vpop.f32.mrb[0].mxu0
      %v3443 = vadd.f32 0.0, %v3442
      %v3444 = vpop.f32.mrb[0].mxu0
      %v3445 = vpop.f32.mrb[0].mxu0
      %v3446 = vadd.f32 0.0, %v3445
      %v3447 = vpop.f32.mrb[0].mxu0
      %3448 = vmatprep.mubr.bf16.mxu0 0
      %3449 = vmatmul.mubr.bf16.gmra.mrb[0].mxu0 %v3297
      %v3450 = vpop.f32.mrb[0].mxu0
      %v3451 = vadd.f32 0.0, %v3450
      %v3452 = vpop.f32.mrb[0].mxu0
      %v3453 = vpop.f32.mrb[0].mxu0
      %v3454 = vadd.f32 0.0, %v3453
      %v3455 = vpop.f32.mrb[0].mxu0
      %3456 = vmatprep.mubr.bf16.mxu0 0
      %3457 = vmatmul.mubr.bf16.gmra.mrb[0].mxu0 %v3299
      %v3458 = vpop.f32.mrb[0].mxu0
      %v3459 = vadd.f32 0.0, %v3458
      %v3460 = vpop.f32.mrb[0].mxu0
      %v3461 = vpop.f32.mrb[0].mxu0
      %v3462 = vadd.f32 0.0, %v3461
      %v3463 = vpop.f32.mrb[0].mxu0
      %3464 = vdwg.mxu0
      %3465 = vst [vmem:[#allocation4] sm:$0xff] %v3339
      %3466 = vst [vmem:[#allocation4 + $0x8] sm:$0xff] %v3342
      %3467 = vst [vmem:[#allocation4 + $0x10] sm:$0xff] %v3347
      %3468 = vst [vmem:[#allocation4 + $0x18] sm:$0xff] %v3350
      %3469 = vst [vmem:[#allocation4 + $0x20] sm:$0xff] %v3355
      %3470 = vst [vmem:[#allocation4 + $0x28] sm:$0xff] %v3358
      %3471 = vst [vmem:[#allocation4 + $0x30] sm:$0xff] %v3363
      %3472 = vst [vmem:[#allocation4 + $0x38] sm:$0xff] %v3366
      %3473 = vst [vmem:[#allocation4 + $0x40] sm:$0xff] %v3371
      %3474 = vst [vmem:[#allocation4 + $0x48] sm:$0xff] %v3374
      %3475 = vst [vmem:[#allocation4 + $0x50] sm:$0xff] %v3379
      %3476 = vst [vmem:[#allocation4 + $0x58] sm:$0xff] %v3382
      %3477 = vst [vmem:[#allocation4 + $0x60] sm:$0xff] %v3387
      %3478 = vst [vmem:[#allocation4 + $0x68] sm:$0xff] %v3390
      %3479 = vst [vmem:[#allocation4 + $0x70] sm:$0xff] %v3395
      %3480 = vst [vmem:[#allocation4 + $0x78] sm:$0xff] %v3398
      %3481 = vst [vmem:[#allocation4 + $0x80] sm:$0xff] %v3403
      %3482 = vst [vmem:[#allocation4 + $0x88] sm:$0xff] %v3406
      %3483 = vst [vmem:[#allocation4 + $0x90] sm:$0xff] %v3411
      %3484 = vst [vmem:[#allocation4 + $0x98] sm:$0xff] %v3414
      %3485 = vst [vmem:[#allocation4 + $0xa0] sm:$0xff] %v3419
      %3486 = vst [vmem:[#allocation4 + $0xa8] sm:$0xff] %v3422
      %3487 = vst [vmem:[#allocation4 + $0xb0] sm:$0xff] %v3427
      %3488 = vst [vmem:[#allocation4 + $0xb8] sm:$0xff] %v3430
      %3489 = vst [vmem:[#allocation4 + $0xc0] sm:$0xff] %v3435
      %3490 = vst [vmem:[#allocation4 + $0xc8] sm:$0xff] %v3438
      %3491 = vst [vmem:[#allocation4 + $0xd0] sm:$0xff] %v3443
      %3492 = vst [vmem:[#allocation4 + $0xd8] sm:$0xff] %v3446
      %3493 = vst [vmem:[#allocation4 + $0xe0] sm:$0xff] %v3451
      %3494 = vst [vmem:[#allocation4 + $0xe8] sm:$0xff] %v3454
      %3495 = vst [vmem:[#allocation4 + $0xf0] sm:$0xff] %v3459
      %3496 = vst [vmem:[#allocation4 + $0xf8] sm:$0xff] %v3462
      %v3497 = vld [vmem:[#allocation4] sm:$0xff]
      %v3498 = vld [vmem:[#allocation4 + $0x8] sm:$0xff]
      %v3499 = vld [vmem:[#allocation4 + $0x10] sm:$0xff]
      %v3500 = vld [vmem:[#allocation4 + $0x18] sm:$0xff]
      %v3501 = vld [vmem:[#allocation4 + $0x20] sm:$0xff]
      %v3502 = vld [vmem:[#allocation4 + $0x28] sm:$0xff]
      %v3503 = vld [vmem:[#allocation4 + $0x30] sm:$0xff]
      %v3504 = vld [vmem:[#allocation4 + $0x38] sm:$0xff]
      %v3505 = vld [vmem:[#allocation4 + $0x40] sm:$0xff]
      %v3506 = vld [vmem:[#allocation4 + $0x48] sm:$0xff]
      %v3507 = vld [vmem:[#allocation4 + $0x50] sm:$0xff]
      %v3508 = vld [vmem:[#allocation4 + $0x58] sm:$0xff]
      %v3509 = vld [vmem:[#allocation4 + $0x60] sm:$0xff]
      %v3510 = vld [vmem:[#allocation4 + $0x68] sm:$0xff]
      %v3511 = vld [vmem:[#allocation4 + $0x70] sm:$0xff]
      %v3512 = vld [vmem:[#allocation4 + $0x78] sm:$0xff]
      %v3513 = vld [vmem:[#allocation4 + $0x80] sm:$0xff]
      %v3514 = vld [vmem:[#allocation4 + $0x88] sm:$0xff]
      %v3515 = vld [vmem:[#allocation4 + $0x90] sm:$0xff]
      %v3516 = vld [vmem:[#allocation4 + $0x98] sm:$0xff]
      %v3517 = vld [vmem:[#allocation4 + $0xa0] sm:$0xff]
      %v3518 = vld [vmem:[#allocation4 + $0xa8] sm:$0xff]
      %v3519 = vld [vmem:[#allocation4 + $0xb0] sm:$0xff]
      %v3520 = vld [vmem:[#allocation4 + $0xb8] sm:$0xff]
      %v3521 = vld [vmem:[#allocation4 + $0xc0] sm:$0xff]
      %v3522 = vld [vmem:[#allocation4 + $0xc8] sm:$0xff]
      %v3523 = vld [vmem:[#allocation4 + $0xd0] sm:$0xff]
      %v3524 = vld [vmem:[#allocation4 + $0xd8] sm:$0xff]
      %v3525 = vld [vmem:[#allocation4 + $0xe0] sm:$0xff]
      %v3526 = vld [vmem:[#allocation4 + $0xe8] sm:$0xff]
      %v3527 = vld [vmem:[#allocation4 + $0xf0] sm:$0xff]
      %v3528 = vld [vmem:[#allocation4 + $0xf8] sm:$0xff]
      %s3529 = scalar_lea.vmem %s3, 12
      %v3530 = vld [vmem:[%s3529] sm:$0xf]
      %v3531 = vld [vmem:[%s3529 + $0x4] sm:$0xf]
      %v3532 = vld [vmem:[%s3529 + $0x8] sm:$0xf]
      %v3536 = vunpack.c.l.b16 %v3530
      %v3537 = vunpack.c.l.b16 %v3531
      %v3538 = vunpack.c.l.b16 %v3532
      %v3539 = vpack.c.b16 %v3537, %v3536
      %v3540 = vpack.c.b16 %v3538, %v3538
      %v3542 = vsel %vm922, %v3254, 0
      %v3545 = vsel %vm959, %v3540, 0
      %3547 = vmatprep.subr.bf16.mxu0 0
      %3548 = vmatpush1.bf16.msra.mxu0 %v3539
      %3549 = vmatprep.subr.bf16.mxu0 0
      %3550 = vmatpush1.bf16.msra.mxu0 %v3545
      %3551 = vmatprep.subr.bf16.mxu0 0
      %3552 = vmatpush1.bf16.msra.mxu0 0
      %3553 = vmatprep.subr.bf16.mxu0 0
      %3554 = vmatpush1.bf16.msra.mxu0 0
      %3555 = vmatprep.subr.bf16.mxu0 0
      %3556 = vmatpush1.bf16.msra.mxu0 0
      %3557 = vmatprep.subr.bf16.mxu0 0
      %3558 = vmatpush1.bf16.msra.mxu0 0
      %3559 = vmatprep.subr.bf16.mxu0 0
      %3560 = vmatpush1.bf16.msra.mxu0 0
      %3561 = vmatprep.subr.bf16.mxu0 0
      %3562 = vmatpush1.bf16.msra.mxu0 0
      %3563 = vmatprep.subr.bf16.mxu0 0
      %3564 = vmatpush1.bf16.msra.mxu0 0
      %3565 = vmatprep.subr.bf16.mxu0 0
      %3566 = vmatpush1.bf16.msra.mxu0 0
      %3567 = vmatprep.subr.bf16.mxu0 0
      %3568 = vmatpush1.bf16.msra.mxu0 0
      %3569 = vmatprep.subr.bf16.mxu0 0
      %3570 = vmatpush1.bf16.msra.mxu0 0
      %3571 = vmatprep.subr.bf16.mxu0 0
      %3572 = vmatpush1.bf16.msra.mxu0 0
      %3573 = vmatprep.subr.bf16.mxu0 0
      %3574 = vmatpush1.bf16.msra.mxu0 0
      %3575 = vmatprep.subr.bf16.mxu0 0
      %3576 = vmatpush1.bf16.msra.mxu0 0
      %3577 = vmatprep.subr.bf16.mxu0 0
      %3578 = vmatpush1.bf16.msra.mxu0 0
      %3579 = vmatprep.mubr.bf16.mxu0 0
      %3580 = vmatmul.mubr.bf16.gmra.mrb[0].mxu0 %v3271
      %v3581 = vpop.f32.mrb[0].mxu0
      %v3582 = vadd.f32 0.0, %v3581
      %v3583 = vpop.f32.mrb[0].mxu0
      %v3584 = vpop.f32.mrb[0].mxu0
      %v3585 = vadd.f32 0.0, %v3584
      %v3586 = vpop.f32.mrb[0].mxu0
      %3587 = vmatprep.mubr.bf16.mxu0 0
      %3588 = vmatmul.mubr.bf16.gmra.mrb[0].mxu0 %v3273
      %v3589 = vpop.f32.mrb[0].mxu0
      %v3590 = vadd.f32 0.0, %v3589
      %v3591 = vpop.f32.mrb[0].mxu0
      %v3592 = vpop.f32.mrb[0].mxu0
      %v3593 = vadd.f32 0.0, %v3592
      %v3594 = vpop.f32.mrb[0].mxu0
      %3595 = vmatprep.mubr.bf16.mxu0 0
      %3596 = vmatmul.mubr.bf16.gmra.mrb[0].mxu0 %v3275
      %v3597 = vpop.f32.mrb[0].mxu0
      %v3598 = vadd.f32 0.0, %v3597
      %v3599 = vpop.f32.mrb[0].mxu0
      %v3600 = vpop.f32.mrb[0].mxu0
      %v3601 = vadd.f32 0.0, %v3600
      %v3602 = vpop.f32.mrb[0].mxu0
      %3603 = vmatprep.mubr.bf16.mxu0 0
      %3604 = vmatmul.mubr.bf16.gmra.mrb[0].mxu0 %v3277
      %v3605 = vpop.f32.mrb[0].mxu0
      %v3606 = vadd.f32 0.0, %v3605
      %v3607 = vpop.f32.mrb[0].mxu0
      %v3608 = vpop.f32.mrb[0].mxu0
      %v3609 = vadd.f32 0.0, %v3608
      %v3610 = vpop.f32.mrb[0].mxu0
      %3611 = vmatprep.mubr.bf16.mxu0 0
      %3612 = vmatmul.mubr.bf16.gmra.mrb[0].mxu0 %v3279
      %v3613 = vpop.f32.mrb[0].mxu0
      %v3614 = vadd.f32 0.0, %v3613
      %v3615 = vpop.f32.mrb[0].mxu0
      %v3616 = vpop.f32.mrb[0].mxu0
      %v3617 = vadd.f32 0.0, %v3616
      %v3618 = vpop.f32.mrb[0].mxu0
      %3619 = vmatprep.mubr.bf16.mxu0 0
      %3620 = vmatmul.mubr.bf16.gmra.mrb[0].mxu0 %v3281
      %v3621 = vpop.f32.mrb[0].mxu0
      %v3622 = vadd.f32 0.0, %v3621
      %v3623 = vpop.f32.mrb[0].mxu0
      %v3624 = vpop.f32.mrb[0].mxu0
      %v3625 = vadd.f32 0.0, %v3624
      %v3626 = vpop.f32.mrb[0].mxu0
      %3627 = vmatprep.mubr.bf16.mxu0 0
      %3628 = vmatmul.mubr.bf16.gmra.mrb[0].mxu0 %v3283
      %v3629 = vpop.f32.mrb[0].mxu0
      %v3630 = vadd.f32 0.0, %v3629
      %v3631 = vpop.f32.mrb[0].mxu0
      %v3632 = vpop.f32.mrb[0].mxu0
      %v3633 = vadd.f32 0.0, %v3632
      %v3634 = vpop.f32.mrb[0].mxu0
      %3635 = vmatprep.mubr.bf16.mxu0 0
      %3636 = vmatmul.mubr.bf16.gmra.mrb[0].mxu0 %v3285
      %v3637 = vpop.f32.mrb[0].mxu0
      %v3638 = vadd.f32 0.0, %v3637
      %v3639 = vpop.f32.mrb[0].mxu0
      %v3640 = vpop.f32.mrb[0].mxu0
      %v3641 = vadd.f32 0.0, %v3640
      %v3642 = vpop.f32.mrb[0].mxu0
      %3643 = vmatprep.mubr.bf16.mxu0 0
      %3644 = vmatmul.mubr.bf16.gmra.mrb[0].mxu0 %v3287
      %v3645 = vpop.f32.mrb[0].mxu0
      %v3646 = vadd.f32 0.0, %v3645
      %v3647 = vpop.f32.mrb[0].mxu0
      %v3648 = vpop.f32.mrb[0].mxu0
      %v3649 = vadd.f32 0.0, %v3648
      %v3650 = vpop.f32.mrb[0].mxu0
      %3651 = vmatprep.mubr.bf16.mxu0 0
      %3652 = vmatmul.mubr.bf16.gmra.mrb[0].mxu0 %v3289
      %v3653 = vpop.f32.mrb[0].mxu0
      %v3654 = vadd.f32 0.0, %v3653
      %v3655 = vpop.f32.mrb[0].mxu0
      %v3656 = vpop.f32.mrb[0].mxu0
      %v3657 = vadd.f32 0.0, %v3656
      %v3658 = vpop.f32.mrb[0].mxu0
      %3659 = vmatprep.mubr.bf16.mxu0 0
      %3660 = vmatmul.mubr.bf16.gmra.mrb[0].mxu0 %v3291
      %v3661 = vpop.f32.mrb[0].mxu0
      %v3662 = vadd.f32 0.0, %v3661
      %v3663 = vpop.f32.mrb[0].mxu0
      %v3664 = vpop.f32.mrb[0].mxu0
      %v3665 = vadd.f32 0.0, %v3664
      %v3666 = vpop.f32.mrb[0].mxu0
      %3667 = vmatprep.mubr.bf16.mxu0 0
      %3668 = vmatmul.mubr.bf16.gmra.mrb[0].mxu0 %v3293
      %v3669 = vpop.f32.mrb[0].mxu0
      %v3670 = vadd.f32 0.0, %v3669
      %v3671 = vpop.f32.mrb[0].mxu0
      %v3672 = vpop.f32.mrb[0].mxu0
      %v3673 = vadd.f32 0.0, %v3672
      %v3674 = vpop.f32.mrb[0].mxu0
      %3675 = vmatprep.mubr.bf16.mxu0 0
      %3676 = vmatmul.mubr.bf16.gmra.mrb[0].mxu0 %v3295
      %v3677 = vpop.f32.mrb[0].mxu0
      %v3678 = vadd.f32 0.0, %v3677
      %v3679 = vpop.f32.mrb[0].mxu0
      %v3680 = vpop.f32.mrb[0].mxu0
      %v3681 = vadd.f32 0.0, %v3680
      %v3682 = vpop.f32.mrb[0].mxu0
      %3683 = vmatprep.mubr.bf16.mxu0 0
      %3684 = vmatmul.mubr.bf16.gmra.mrb[0].mxu0 %v3297
      %v3685 = vpop.f32.mrb[0].mxu0
      %v3686 = vadd.f32 0.0, %v3685
      %v3687 = vpop.f32.mrb[0].mxu0
      %v3688 = vpop.f32.mrb[0].mxu0
      %v3689 = vadd.f32 0.0, %v3688
      %v3690 = vpop.f32.mrb[0].mxu0
      %3691 = vmatprep.mubr.bf16.mxu0 0
      %3692 = vmatmul.mubr.bf16.gmra.mrb[0].mxu0 %v3299
      %v3693 = vpop.f32.mrb[0].mxu0
      %v3694 = vadd.f32 0.0, %v3693
      %v3695 = vpop.f32.mrb[0].mxu0
      %v3696 = vpop.f32.mrb[0].mxu0
      %v3697 = vadd.f32 0.0, %v3696
      %v3698 = vpop.f32.mrb[0].mxu0
      %3699 = vmatprep.mubr.bf16.mxu0 0
      %3700 = vmatmul.mubr.bf16.gmra.mrb[0].mxu0 %v3542
      %v3701 = vpop.f32.mrb[0].mxu0
      %v3702 = vadd.f32 0.0, %v3701
      %v3703 = vpop.f32.mrb[0].mxu0
      %v3704 = vpop.f32.mrb[0].mxu0
      %v3705 = vadd.f32 0.0, %v3704
      %v3706 = vpop.f32.mrb[0].mxu0
      %3707 = vdwg.mxu0
      %v3708 = vadd.f32 %v3497, %v3582
      %v3709 = vadd.f32 %v3498, %v3585
      %v3710 = vadd.f32 %v3499, %v3590
      %v3711 = vadd.f32 %v3500, %v3593
      %v3712 = vadd.f32 %v3501, %v3598
      %v3713 = vadd.f32 %v3502, %v3601
      %v3714 = vadd.f32 %v3503, %v3606
      %v3715 = vadd.f32 %v3504, %v3609
      %v3716 = vadd.f32 %v3505, %v3614
      %v3717 = vadd.f32 %v3506, %v3617
      %v3718 = vadd.f32 %v3507, %v3622
      %v3719 = vadd.f32 %v3508, %v3625
      %v3720 = vadd.f32 %v3509, %v3630
      %v3721 = vadd.f32 %v3510, %v3633
      %v3722 = vadd.f32 %v3511, %v3638
      %v3723 = vadd.f32 %v3512, %v3641
      %v3724 = vadd.f32 %v3513, %v3646
      %v3725 = vadd.f32 %v3514, %v3649
      %v3726 = vadd.f32 %v3515, %v3654
      %v3727 = vadd.f32 %v3516, %v3657
      %v3728 = vadd.f32 %v3517, %v3662
      %v3729 = vadd.f32 %v3518, %v3665
      %v3730 = vadd.f32 %v3519, %v3670
      %v3731 = vadd.f32 %v3520, %v3673
      %v3732 = vadd.f32 %v3521, %v3678
      %v3733 = vadd.f32 %v3522, %v3681
      %v3734 = vadd.f32 %v3523, %v3686
      %v3735 = vadd.f32 %v3524, %v3689
      %v3736 = vadd.f32 %v3525, %v3694
      %v3737 = vadd.f32 %v3526, %v3697
      %v3738 = vadd.f32 %v3527, %v3702
      %v3739 = vadd.f32 %v3528, %v3705
      %3740 = vst [vmem:[#allocation4] sm:$0xff] %v3708
      %3741 = vst [vmem:[#allocation4 + $0x8] sm:$0xff] %v3709
      %3742 = vst [vmem:[#allocation4 + $0x10] sm:$0xff] %v3710
      %3743 = vst [vmem:[#allocation4 + $0x18] sm:$0xff] %v3711
      %3744 = vst [vmem:[#allocation4 + $0x20] sm:$0xff] %v3712
      %3745 = vst [vmem:[#allocation4 + $0x28] sm:$0xff] %v3713
      %3746 = vst [vmem:[#allocation4 + $0x30] sm:$0xff] %v3714
      %3747 = vst [vmem:[#allocation4 + $0x38] sm:$0xff] %v3715
      %3748 = vst [vmem:[#allocation4 + $0x40] sm:$0xff] %v3716
      %3749 = vst [vmem:[#allocation4 + $0x48] sm:$0xff] %v3717
      %3750 = vst [vmem:[#allocation4 + $0x50] sm:$0xff] %v3718
      %3751 = vst [vmem:[#allocation4 + $0x58] sm:$0xff] %v3719
      %3752 = vst [vmem:[#allocation4 + $0x60] sm:$0xff] %v3720
      %3753 = vst [vmem:[#allocation4 + $0x68] sm:$0xff] %v3721
      %3754 = vst [vmem:[#allocation4 + $0x70] sm:$0xff] %v3722
      %3755 = vst [vmem:[#allocation4 + $0x78] sm:$0xff] %v3723
      %3756 = vst [vmem:[#allocation4 + $0x80] sm:$0xff] %v3724
      %3757 = vst [vmem:[#allocation4 + $0x88] sm:$0xff] %v3725
      %3758 = vst [vmem:[#allocation4 + $0x90] sm:$0xff] %v3726
      %3759 = vst [vmem:[#allocation4 + $0x98] sm:$0xff] %v3727
      %3760 = vst [vmem:[#allocation4 + $0xa0] sm:$0xff] %v3728
      %3761 = vst [vmem:[#allocation4 + $0xa8] sm:$0xff] %v3729
      %3762 = vst [vmem:[#allocation4 + $0xb0] sm:$0xff] %v3730
      %3763 = vst [vmem:[#allocation4 + $0xb8] sm:$0xff] %v3731
      %3764 = vst [vmem:[#allocation4 + $0xc0] sm:$0xff] %v3732
      %3765 = vst [vmem:[#allocation4 + $0xc8] sm:$0xff] %v3733
      %3766 = vst [vmem:[#allocation4 + $0xd0] sm:$0xff] %v3734
      %3767 = vst [vmem:[#allocation4 + $0xd8] sm:$0xff] %v3735
      %3768 = vst [vmem:[#allocation4 + $0xe0] sm:$0xff] %v3736
      %3769 = vst [vmem:[#allocation4 + $0xe8] sm:$0xff] %v3737
      %3770 = vst [vmem:[#allocation4 + $0xf0] sm:$0xff] %v3738
      %3771 = vst [vmem:[#allocation4 + $0xf8] sm:$0xff] %v3739
      %v3772 = vld [vmem:[#allocation4] sm:$0xff]
      %v3773 = vld [vmem:[#allocation4 + $0x8] sm:$0xff]
      %v3774 = vld [vmem:[#allocation4 + $0x10] sm:$0xff]
      %v3775 = vld [vmem:[#allocation4 + $0x18] sm:$0xff]
      %v3776 = vld [vmem:[#allocation4 + $0x20] sm:$0xff]
      %v3777 = vld [vmem:[#allocation4 + $0x28] sm:$0xff]
      %v3778 = vld [vmem:[#allocation4 + $0x30] sm:$0xff]
      %v3779 = vld [vmem:[#allocation4 + $0x38] sm:$0xff]
      %v3780 = vld [vmem:[#allocation4 + $0x40] sm:$0xff]
      %v3781 = vld [vmem:[#allocation4 + $0x48] sm:$0xff]
      %v3782 = vld [vmem:[#allocation4 + $0x50] sm:$0xff]
      %v3783 = vld [vmem:[#allocation4 + $0x58] sm:$0xff]
      %v3784 = vld [vmem:[#allocation4 + $0x60] sm:$0xff]
      %v3785 = vld [vmem:[#allocation4 + $0x68] sm:$0xff]
      %v3786 = vld [vmem:[#allocation4 + $0x70] sm:$0xff]
      %v3787 = vld [vmem:[#allocation4 + $0x78] sm:$0xff]
      %v3788 = vld [vmem:[#allocation4 + $0x80] sm:$0xff]
      %v3789 = vld [vmem:[#allocation4 + $0x88] sm:$0xff]
      %v3790 = vld [vmem:[#allocation4 + $0x90] sm:$0xff]
      %v3791 = vld [vmem:[#allocation4 + $0x98] sm:$0xff]
      %v3792 = vld [vmem:[#allocation4 + $0xa0] sm:$0xff]
      %v3793 = vld [vmem:[#allocation4 + $0xa8] sm:$0xff]
      %v3794 = vld [vmem:[#allocation4 + $0xb0] sm:$0xff]
      %v3795 = vld [vmem:[#allocation4 + $0xb8] sm:$0xff]
      %v3796 = vld [vmem:[#allocation4 + $0xc0] sm:$0xff]
      %v3797 = vld [vmem:[#allocation4 + $0xc8] sm:$0xff]
      %v3798 = vld [vmem:[#allocation4 + $0xd0] sm:$0xff]
      %v3799 = vld [vmem:[#allocation4 + $0xd8] sm:$0xff]
      %v3800 = vld [vmem:[#allocation4 + $0xe0] sm:$0xff]
      %v3801 = vld [vmem:[#allocation4 + $0xe8] sm:$0xff]
      %v3802 = vld [vmem:[#allocation4 + $0xf0] sm:$0xff]
      %v3803 = vld [vmem:[#allocation4 + $0xf8] sm:$0xff]
      %s3804 = scalar_lea.vmem %s3, 24
      %v3805 = vld [vmem:[%s3804] sm:$0xf]
      %v3806 = vld [vmem:[%s3804 + $0x4] sm:$0xf]
      %v3807 = vld [vmem:[%s3804 + $0x8] sm:$0xf]
      %v3811 = vunpack.c.l.b16 %v3805
      %v3812 = vunpack.c.l.b16 %v3806
      %v3813 = vunpack.c.l.b16 %v3807
      %v3814 = vpack.c.b16 %v3812, %v3811
      %v3815 = vpack.c.b16 %v3813, %v3813
      %v3817 = vsel %vm922, %v3256, 0
      %v3820 = vsel %vm959, %v3815, 0
      %3822 = vmatprep.subr.bf16.mxu0 0
      %3823 = vmatpush1.bf16.msra.mxu0 %v3814
      %3824 = vmatprep.subr.bf16.mxu0 0
      %3825 = vmatpush1.bf16.msra.mxu0 %v3820
      %3826 = vmatprep.subr.bf16.mxu0 0
      %3827 = vmatpush1.bf16.msra.mxu0 0
      %3828 = vmatprep.subr.bf16.mxu0 0
      %3829 = vmatpush1.bf16.msra.mxu0 0
      %3830 = vmatprep.subr.bf16.mxu0 0
      %3831 = vmatpush1.bf16.msra.mxu0 0
      %3832 = vmatprep.subr.bf16.mxu0 0
      %3833 = vmatpush1.bf16.msra.mxu0 0
      %3834 = vmatprep.subr.bf16.mxu0 0
      %3835 = vmatpush1.bf16.msra.mxu0 0
      %3836 = vmatprep.subr.bf16.mxu0 0
      %3837 = vmatpush1.bf16.msra.mxu0 0
      %3838 = vmatprep.subr.bf16.mxu0 0
      %3839 = vmatpush1.bf16.msra.mxu0 0
      %3840 = vmatprep.subr.bf16.mxu0 0
      %3841 = vmatpush1.bf16.msra.mxu0 0
      %3842 = vmatprep.subr.bf16.mxu0 0
      %3843 = vmatpush1.bf16.msra.mxu0 0
      %3844 = vmatprep.subr.bf16.mxu0 0
      %3845 = vmatpush1.bf16.msra.mxu0 0
      %3846 = vmatprep.subr.bf16.mxu0 0
      %3847 = vmatpush1.bf16.msra.mxu0 0
      %3848 = vmatprep.subr.bf16.mxu0 0
      %3849 = vmatpush1.bf16.msra.mxu0 0
      %3850 = vmatprep.subr.bf16.mxu0 0
      %3851 = vmatpush1.bf16.msra.mxu0 0
      %3852 = vmatprep.subr.bf16.mxu0 0
      %3853 = vmatpush1.bf16.msra.mxu0 0
      %3854 = vmatprep.mubr.bf16.mxu0 0
      %3855 = vmatmul.mubr.bf16.gmra.mrb[0].mxu0 %v3273
      %v3856 = vpop.f32.mrb[0].mxu0
      %v3857 = vadd.f32 0.0, %v3856
      %v3858 = vpop.f32.mrb[0].mxu0
      %v3859 = vpop.f32.mrb[0].mxu0
      %v3860 = vadd.f32 0.0, %v3859
      %v3861 = vpop.f32.mrb[0].mxu0
      %3862 = vmatprep.mubr.bf16.mxu0 0
      %3863 = vmatmul.mubr.bf16.gmra.mrb[0].mxu0 %v3275
      %v3864 = vpop.f32.mrb[0].mxu0
      %v3865 = vadd.f32 0.0, %v3864
      %v3866 = vpop.f32.mrb[0].mxu0
      %v3867 = vpop.f32.mrb[0].mxu0
      %v3868 = vadd.f32 0.0, %v3867
      %v3869 = vpop.f32.mrb[0].mxu0
      %3870 = vmatprep.mubr.bf16.mxu0 0
      %3871 = vmatmul.mubr.bf16.gmra.mrb[0].mxu0 %v3277
      %v3872 = vpop.f32.mrb[0].mxu0
      %v3873 = vadd.f32 0.0, %v3872
      %v3874 = vpop.f32.mrb[0].mxu0
      %v3875 = vpop.f32.mrb[0].mxu0
      %v3876 = vadd.f32 0.0, %v3875
      %v3877 = vpop.f32.mrb[0].mxu0
      %3878 = vmatprep.mubr.bf16.mxu0 0
      %3879 = vmatmul.mubr.bf16.gmra.mrb[0].mxu0 %v3279
      %v3880 = vpop.f32.mrb[0].mxu0
      %v3881 = vadd.f32 0.0, %v3880
      %v3882 = vpop.f32.mrb[0].mxu0
      %v3883 = vpop.f32.mrb[0].mxu0
      %v3884 = vadd.f32 0.0, %v3883
      %v3885 = vpop.f32.mrb[0].mxu0
      %3886 = vmatprep.mubr.bf16.mxu0 0
      %3887 = vmatmul.mubr.bf16.gmra.mrb[0].mxu0 %v3281
      %v3888 = vpop.f32.mrb[0].mxu0
      %v3889 = vadd.f32 0.0, %v3888
      %v3890 = vpop.f32.mrb[0].mxu0
      %v3891 = vpop.f32.mrb[0].mxu0
      %v3892 = vadd.f32 0.0, %v3891
      %v3893 = vpop.f32.mrb[0].mxu0
      %3894 = vmatprep.mubr.bf16.mxu0 0
      %3895 = vmatmul.mubr.bf16.gmra.mrb[0].mxu0 %v3283
      %v3896 = vpop.f32.mrb[0].mxu0
      %v3897 = vadd.f32 0.0, %v3896
      %v3898 = vpop.f32.mrb[0].mxu0
      %v3899 = vpop.f32.mrb[0].mxu0
      %v3900 = vadd.f32 0.0, %v3899
      %v3901 = vpop.f32.mrb[0].mxu0
      %3902 = vmatprep.mubr.bf16.mxu0 0
      %3903 = vmatmul.mubr.bf16.gmra.mrb[0].mxu0 %v3285
      %v3904 = vpop.f32.mrb[0].mxu0
      %v3905 = vadd.f32 0.0, %v3904
      %v3906 = vpop.f32.mrb[0].mxu0
      %v3907 = vpop.f32.mrb[0].mxu0
      %v3908 = vadd.f32 0.0, %v3907
      %v3909 = vpop.f32.mrb[0].mxu0
      %3910 = vmatprep.mubr.bf16.mxu0 0
      %3911 = vmatmul.mubr.bf16.gmra.mrb[0].mxu0 %v3287
      %v3912 = vpop.f32.mrb[0].mxu0
      %v3913 = vadd.f32 0.0, %v3912
      %v3914 = vpop.f32.mrb[0].mxu0
      %v3915 = vpop.f32.mrb[0].mxu0
      %v3916 = vadd.f32 0.0, %v3915
      %v3917 = vpop.f32.mrb[0].mxu0
      %3918 = vmatprep.mubr.bf16.mxu0 0
      %3919 = vmatmul.mubr.bf16.gmra.mrb[0].mxu0 %v3289
      %v3920 = vpop.f32.mrb[0].mxu0
      %v3921 = vadd.f32 0.0, %v3920
      %v3922 = vpop.f32.mrb[0].mxu0
      %v3923 = vpop.f32.mrb[0].mxu0
      %v3924 = vadd.f32 0.0, %v3923
      %v3925 = vpop.f32.mrb[0].mxu0
      %3926 = vmatprep.mubr.bf16.mxu0 0
      %3927 = vmatmul.mubr.bf16.gmra.mrb[0].mxu0 %v3291
      %v3928 = vpop.f32.mrb[0].mxu0
      %v3929 = vadd.f32 0.0, %v3928
      %v3930 = vpop.f32.mrb[0].mxu0
      %v3931 = vpop.f32.mrb[0].mxu0
      %v3932 = vadd.f32 0.0, %v3931
      %v3933 = vpop.f32.mrb[0].mxu0
      %3934 = vmatprep.mubr.bf16.mxu0 0
      %3935 = vmatmul.mubr.bf16.gmra.mrb[0].mxu0 %v3293
      %v3936 = vpop.f32.mrb[0].mxu0
      %v3937 = vadd.f32 0.0, %v3936
      %v3938 = vpop.f32.mrb[0].mxu0
      %v3939 = vpop.f32.mrb[0].mxu0
      %v3940 = vadd.f32 0.0, %v3939
      %v3941 = vpop.f32.mrb[0].mxu0
      %3942 = vmatprep.mubr.bf16.mxu0 0
      %3943 = vmatmul.mubr.bf16.gmra.mrb[0].mxu0 %v3295
      %v3944 = vpop.f32.mrb[0].mxu0
      %v3945 = vadd.f32 0.0, %v3944
      %v3946 = vpop.f32.mrb[0].mxu0
      %v3947 = vpop.f32.mrb[0].mxu0
      %v3948 = vadd.f32 0.0, %v3947
      %v3949 = vpop.f32.mrb[0].mxu0
      %3950 = vmatprep.mubr.bf16.mxu0 0
      %3951 = vmatmul.mubr.bf16.gmra.mrb[0].mxu0 %v3297
      %v3952 = vpop.f32.mrb[0].mxu0
      %v3953 = vadd.f32 0.0, %v3952
      %v3954 = vpop.f32.mrb[0].mxu0
      %v3955 = vpop.f32.mrb[0].mxu0
      %v3956 = vadd.f32 0.0, %v3955
      %v3957 = vpop.f32.mrb[0].mxu0
      %3958 = vmatprep.mubr.bf16.mxu0 0
      %3959 = vmatmul.mubr.bf16.gmra.mrb[0].mxu0 %v3299
      %v3960 = vpop.f32.mrb[0].mxu0
      %v3961 = vadd.f32 0.0, %v3960
      %v3962 = vpop.f32.mrb[0].mxu0
      %v3963 = vpop.f32.mrb[0].mxu0
      %v3964 = vadd.f32 0.0, %v3963
      %v3965 = vpop.f32.mrb[0].mxu0
      %3966 = vmatprep.mubr.bf16.mxu0 0
      %3967 = vmatmul.mubr.bf16.gmra.mrb[0].mxu0 %v3542
      %v3968 = vpop.f32.mrb[0].mxu0
      %v3969 = vadd.f32 0.0, %v3968
      %v3970 = vpop.f32.mrb[0].mxu0
      %v3971 = vpop.f32.mrb[0].mxu0
      %v3972 = vadd.f32 0.0, %v3971
      %v3973 = vpop.f32.mrb[0].mxu0
      %3974 = vmatprep.mubr.bf16.mxu0 0
      %3975 = vmatmul.mubr.bf16.gmra.mrb[0].mxu0 %v3817
      %v3976 = vpop.f32.mrb[0].mxu0
      %v3977 = vadd.f32 0.0, %v3976
      %v3978 = vpop.f32.mrb[0].mxu0
      %v3979 = vpop.f32.mrb[0].mxu0
      %v3980 = vadd.f32 0.0, %v3979
      %v3981 = vpop.f32.mrb[0].mxu0
      %3982 = vdwg.mxu0
      %v3983 = vadd.f32 %v3772, %v3857
      %v3984 = vadd.f32 %v3773, %v3860
      %v3985 = vadd.f32 %v3774, %v3865
      %v3986 = vadd.f32 %v3775, %v3868
      %v3987 = vadd.f32 %v3776, %v3873
      %v3988 = vadd.f32 %v3777, %v3876
      %v3989 = vadd.f32 %v3778, %v3881
      %v3990 = vadd.f32 %v3779, %v3884
      %v3991 = vadd.f32 %v3780, %v3889
      %v3992 = vadd.f32 %v3781, %v3892
      %v3993 = vadd.f32 %v3782, %v3897
      %v3994 = vadd.f32 %v3783, %v3900
      %v3995 = vadd.f32 %v3784, %v3905
      %v3996 = vadd.f32 %v3785, %v3908
      %v3997 = vadd.f32 %v3786, %v3913
      %v3998 = vadd.f32 %v3787, %v3916
      %v3999 = vadd.f32 %v3788, %v3921
      %v4000 = vadd.f32 %v3789, %v3924
      %v4001 = vadd.f32 %v3790, %v3929
      %v4002 = vadd.f32 %v3791, %v3932
      %v4003 = vadd.f32 %v3792, %v3937
      %v4004 = vadd.f32 %v3793, %v3940
      %v4005 = vadd.f32 %v3794, %v3945
      %v4006 = vadd.f32 %v3795, %v3948
      %v4007 = vadd.f32 %v3796, %v3953
      %v4008 = vadd.f32 %v3797, %v3956
      %v4009 = vadd.f32 %v3798, %v3961
      %v4010 = vadd.f32 %v3799, %v3964
      %v4011 = vadd.f32 %v3800, %v3969
      %v4012 = vadd.f32 %v3801, %v3972
      %v4013 = vadd.f32 %v3802, %v3977
      %v4014 = vadd.f32 %v3803, %v3980
      %4015 = vst [vmem:[#allocation4] sm:$0xff] %v3983
      %4016 = vst [vmem:[#allocation4 + $0x8] sm:$0xff] %v3984
      %4017 = vst [vmem:[#allocation4 + $0x10] sm:$0xff] %v3985
      %4018 = vst [vmem:[#allocation4 + $0x18] sm:$0xff] %v3986
      %4019 = vst [vmem:[#allocation4 + $0x20] sm:$0xff] %v3987
      %4020 = vst [vmem:[#allocation4 + $0x28] sm:$0xff] %v3988
      %4021 = vst [vmem:[#allocation4 + $0x30] sm:$0xff] %v3989
      %4022 = vst [vmem:[#allocation4 + $0x38] sm:$0xff] %v3990
      %4023 = vst [vmem:[#allocation4 + $0x40] sm:$0xff] %v3991
      %4024 = vst [vmem:[#allocation4 + $0x48] sm:$0xff] %v3992
      %4025 = vst [vmem:[#allocation4 + $0x50] sm:$0xff] %v3993
      %4026 = vst [vmem:[#allocation4 + $0x58] sm:$0xff] %v3994
      %4027 = vst [vmem:[#allocation4 + $0x60] sm:$0xff] %v3995
      %4028 = vst [vmem:[#allocation4 + $0x68] sm:$0xff] %v3996
      %4029 = vst [vmem:[#allocation4 + $0x70] sm:$0xff] %v3997
      %4030 = vst [vmem:[#allocation4 + $0x78] sm:$0xff] %v3998
      %4031 = vst [vmem:[#allocation4 + $0x80] sm:$0xff] %v3999
      %4032 = vst [vmem:[#allocation4 + $0x88] sm:$0xff] %v4000
      %4033 = vst [vmem:[#allocation4 + $0x90] sm:$0xff] %v4001
      %4034 = vst [vmem:[#allocation4 + $0x98] sm:$0xff] %v4002
      %4035 = vst [vmem:[#allocation4 + $0xa0] sm:$0xff] %v4003
      %4036 = vst [vmem:[#allocation4 + $0xa8] sm:$0xff] %v4004
      %4037 = vst [vmem:[#allocation4 + $0xb0] sm:$0xff] %v4005
      %4038 = vst [vmem:[#allocation4 + $0xb8] sm:$0xff] %v4006
      %4039 = vst [vmem:[#allocation4 + $0xc0] sm:$0xff] %v4007
      %4040 = vst [vmem:[#allocation4 + $0xc8] sm:$0xff] %v4008
      %4041 = vst [vmem:[#allocation4 + $0xd0] sm:$0xff] %v4009
      %4042 = vst [vmem:[#allocation4 + $0xd8] sm:$0xff] %v4010
      %4043 = vst [vmem:[#allocation4 + $0xe0] sm:$0xff] %v4011
      %4044 = vst [vmem:[#allocation4 + $0xe8] sm:$0xff] %v4012
      %4045 = vst [vmem:[#allocation4 + $0xf0] sm:$0xff] %v4013
      %4046 = vst [vmem:[#allocation4 + $0xf8] sm:$0xff] %v4014
      %v4047 = vld [vmem:[#allocation4] sm:$0xff]
      %v4048 = vld [vmem:[#allocation4 + $0x8] sm:$0xff]
      %v4049 = vld [vmem:[#allocation4 + $0x10] sm:$0xff]
      %v4050 = vld [vmem:[#allocation4 + $0x18] sm:$0xff]
      %v4051 = vld [vmem:[#allocation4 + $0x20] sm:$0xff]
      %v4052 = vld [vmem:[#allocation4 + $0x28] sm:$0xff]
      %v4053 = vld [vmem:[#allocation4 + $0x30] sm:$0xff]
      %v4054 = vld [vmem:[#allocation4 + $0x38] sm:$0xff]
      %v4055 = vld [vmem:[#allocation4 + $0x40] sm:$0xff]
      %v4056 = vld [vmem:[#allocation4 + $0x48] sm:$0xff]
      %v4057 = vld [vmem:[#allocation4 + $0x50] sm:$0xff]
      %v4058 = vld [vmem:[#allocation4 + $0x58] sm:$0xff]
      %v4059 = vld [vmem:[#allocation4 + $0x60] sm:$0xff]
      %v4060 = vld [vmem:[#allocation4 + $0x68] sm:$0xff]
      %v4061 = vld [vmem:[#allocation4 + $0x70] sm:$0xff]
      %v4062 = vld [vmem:[#allocation4 + $0x78] sm:$0xff]
      %v4063 = vld [vmem:[#allocation4 + $0x80] sm:$0xff]
      %v4064 = vld [vmem:[#allocation4 + $0x88] sm:$0xff]
      %v4065 = vld [vmem:[#allocation4 + $0x90] sm:$0xff]
      %v4066 = vld [vmem:[#allocation4 + $0x98] sm:$0xff]
      %v4067 = vld [vmem:[#allocation4 + $0xa0] sm:$0xff]
      %v4068 = vld [vmem:[#allocation4 + $0xa8] sm:$0xff]
      %v4069 = vld [vmem:[#allocation4 + $0xb0] sm:$0xff]
      %v4070 = vld [vmem:[#allocation4 + $0xb8] sm:$0xff]
      %v4071 = vld [vmem:[#allocation4 + $0xc0] sm:$0xff]
      %v4072 = vld [vmem:[#allocation4 + $0xc8] sm:$0xff]
      %v4073 = vld [vmem:[#allocation4 + $0xd0] sm:$0xff]
      %v4074 = vld [vmem:[#allocation4 + $0xd8] sm:$0xff]
      %v4075 = vld [vmem:[#allocation4 + $0xe0] sm:$0xff]
      %v4076 = vld [vmem:[#allocation4 + $0xe8] sm:$0xff]
      %v4077 = vld [vmem:[#allocation4 + $0xf0] sm:$0xff]
      %v4078 = vld [vmem:[#allocation4 + $0xf8] sm:$0xff]
      %v4079 = vld [vmem:[%s4] sm:$0x1]
      %v4081 = vlaneseq
      %v4082 = vshrl.u32 %v4081, 7
      %v4083 = vsub.s32 0, %v4082
      %v4084 = vrot.slane %v4079, %v4083
      %v4086 = vadd.f32 %v4047, %v4084
      %v4087 = vadd.f32 %v4048, %v4084
      %v4088 = vadd.f32 %v4049, %v4084
      %v4089 = vadd.f32 %v4050, %v4084
      %v4090 = vadd.f32 %v4051, %v4084
      %v4091 = vadd.f32 %v4052, %v4084
      %v4092 = vadd.f32 %v4053, %v4084
      %v4093 = vadd.f32 %v4054, %v4084
      %v4094 = vadd.f32 %v4055, %v4084
      %v4095 = vadd.f32 %v4056, %v4084
      %v4096 = vadd.f32 %v4057, %v4084
      %v4097 = vadd.f32 %v4058, %v4084
      %v4098 = vadd.f32 %v4059, %v4084
      %v4099 = vadd.f32 %v4060, %v4084
      %v4100 = vadd.f32 %v4061, %v4084
      %v4101 = vadd.f32 %v4062, %v4084
      %v4102 = vadd.f32 %v4063, %v4084
      %v4103 = vadd.f32 %v4064, %v4084
      %v4104 = vadd.f32 %v4065, %v4084
      %v4105 = vadd.f32 %v4066, %v4084
      %v4106 = vadd.f32 %v4067, %v4084
      %v4107 = vadd.f32 %v4068, %v4084
      %v4108 = vadd.f32 %v4069, %v4084
      %v4109 = vadd.f32 %v4070, %v4084
      %v4110 = vadd.f32 %v4071, %v4084
      %v4111 = vadd.f32 %v4072, %v4084
      %v4112 = vadd.f32 %v4073, %v4084
      %v4113 = vadd.f32 %v4074, %v4084
      %v4114 = vadd.f32 %v4075, %v4084
      %v4115 = vadd.f32 %v4076, %v4084
      %v4116 = vadd.f32 %v4077, %v4084
      %v4117 = vadd.f32 %v4078, %v4084
      %v4118 = vmax.f32 %v4086, 0.0
      %v4119 = vmax.f32 %v4087, 0.0
      %v4120 = vmax.f32 %v4088, 0.0
      %v4121 = vmax.f32 %v4089, 0.0
      %v4122 = vmax.f32 %v4090, 0.0
      %v4123 = vmax.f32 %v4091, 0.0
      %v4124 = vmax.f32 %v4092, 0.0
      %v4125 = vmax.f32 %v4093, 0.0
      %v4126 = vmax.f32 %v4094, 0.0
      %v4127 = vmax.f32 %v4095, 0.0
      %v4128 = vmax.f32 %v4096, 0.0
      %v4129 = vmax.f32 %v4097, 0.0
      %v4130 = vmax.f32 %v4098, 0.0
      %v4131 = vmax.f32 %v4099, 0.0
      %v4132 = vmax.f32 %v4100, 0.0
      %v4133 = vmax.f32 %v4101, 0.0
      %v4134 = vmax.f32 %v4102, 0.0
      %v4135 = vmax.f32 %v4103, 0.0
      %v4136 = vmax.f32 %v4104, 0.0
      %v4137 = vmax.f32 %v4105, 0.0
      %v4138 = vmax.f32 %v4106, 0.0
      %v4139 = vmax.f32 %v4107, 0.0
      %v4140 = vmax.f32 %v4108, 0.0
      %v4141 = vmax.f32 %v4109, 0.0
      %v4142 = vmax.f32 %v4110, 0.0
      %v4143 = vmax.f32 %v4111, 0.0
      %v4144 = vmax.f32 %v4112, 0.0
      %v4145 = vmax.f32 %v4113, 0.0
      %v4146 = vmax.f32 %v4114, 0.0
      %v4147 = vmax.f32 %v4115, 0.0
      %v4148 = vmax.f32 %v4116, 0.0
      %v4149 = vmax.f32 %v4117, 0.0
      %4150 = vst [vmem:[%s224] sm:$0xff] %v4118
      %4151 = vst [vmem:[%s224 + $0x8] sm:$0xff] %v4119
      %4152 = vst [vmem:[%s224 + $0x10] sm:$0xff] %v4120
      %4153 = vst [vmem:[%s224 + $0x18] sm:$0xff] %v4121
      %4154 = vst [vmem:[%s224 + $0x20] sm:$0xff] %v4122
      %4155 = vst [vmem:[%s224 + $0x28] sm:$0xff] %v4123
      %4156 = vst [vmem:[%s224 + $0x30] sm:$0xff] %v4124
      %4157 = vst [vmem:[%s224 + $0x38] sm:$0xff] %v4125
      %4158 = vst [vmem:[%s224 + $0x40] sm:$0xff] %v4126
      %4159 = vst [vmem:[%s224 + $0x48] sm:$0xff] %v4127
      %4160 = vst [vmem:[%s224 + $0x50] sm:$0xff] %v4128
      %4161 = vst [vmem:[%s224 + $0x58] sm:$0xff] %v4129
      %4162 = vst [vmem:[%s224 + $0x60] sm:$0xff] %v4130
      %4163 = vst [vmem:[%s224 + $0x68] sm:$0xff] %v4131
      %4164 = vst [vmem:[%s224 + $0x70] sm:$0xff] %v4132
      %4165 = vst [vmem:[%s224 + $0x78] sm:$0xff] %v4133
      %4166 = vst [vmem:[%s224 + $0x80] sm:$0xff] %v4134
      %4167 = vst [vmem:[%s224 + $0x88] sm:$0xff] %v4135
      %4168 = vst [vmem:[%s224 + $0x90] sm:$0xff] %v4136
      %4169 = vst [vmem:[%s224 + $0x98] sm:$0xff] %v4137
      %4170 = vst [vmem:[%s224 + $0xa0] sm:$0xff] %v4138
      %4171 = vst [vmem:[%s224 + $0xa8] sm:$0xff] %v4139
      %4172 = vst [vmem:[%s224 + $0xb0] sm:$0xff] %v4140
      %4173 = vst [vmem:[%s224 + $0xb8] sm:$0xff] %v4141
      %4174 = vst [vmem:[%s224 + $0xc0] sm:$0xff] %v4142
      %4175 = vst [vmem:[%s224 + $0xc8] sm:$0xff] %v4143
      %4176 = vst [vmem:[%s224 + $0xd0] sm:$0xff] %v4144
      %4177 = vst [vmem:[%s224 + $0xd8] sm:$0xff] %v4145
      %4178 = vst [vmem:[%s224 + $0xe0] sm:$0xff] %v4146
      %4179 = vst [vmem:[%s224 + $0xe8] sm:$0xff] %v4147
      %4180 = vst [vmem:[%s224 + $0xf0] sm:$0xff] %v4148
      %4181 = vst [vmem:[%s224 + $0xf8] sm:$0xff] %v4149
      %p4182 = scmp.lt.s32.totalorder %s16, 1
      %s4183 = scalar_select %p4182, %s16, 1
      %s4184 = smul.addr %s4183, 32
      %s4185 = smul.addr %s4184, 8
      %s4186 = scalar_lea.vmem %s5, %s4185
      // Predicated region
      $region41: #{decoder_block_forward.1} parent=39 // pred_check
        %p4187 = pneg %p144
      $region42: #{decoder_block_forward.1} parent=39 // pred_check_branch
        %4189 = sbr.rel (%p4187) target = $region44
      $region43: #{decoder_block_forward.1} parent=39 // pred_region
        _
      $region44: #{decoder_block_forward.1} parent=39 // pred_fallthru
        _
    $region40: #{decoder_block_forward.1} parent=5 // pred_fallthru
      _
    %p4190 = scmp.le.s32.totalorder 2, %s11
    // Predicated region
    $region45: #{decoder_block_forward.1} parent=5 // pred_check
      %p4191 = pneg %p4190
    $region46: #{decoder_block_forward.1} parent=5 // pred_check_branch
      %4193 = sbr.rel (%p4191) target = $region48
    $region47: #{decoder_block_forward.1} parent=5 // pred_region
      %s4194 = ssub.s32 %s11, 2
      // Predicated region
      $region49: #{decoder_block_forward.1} parent=47 // pred_check
        %p4195 = pneg %p150
      $region50: #{decoder_block_forward.1} parent=47 // pred_check_branch
        %4197 = sbr.rel (%p4195) target = $region52
      $region51: #{decoder_block_forward.1} parent=47 // pred_region
        %p4198 = scmp.lt.s32.totalorder %s17, 1
        %s4199 = scalar_select %p4198, %s17, 1
        %s4200 = smul.addr %s4199, 32
        %s4201 = smul.addr %s4200, 8
        %s4202 = scalar_lea.vmem %s5, %s4201
      $region52: #{decoder_block_forward.1} parent=47 // pred_fallthru
        _
    $region48: #{decoder_block_forward.1} parent=5 // pred_fallthru
      _
  $region6: #{decoder_block_forward.1} parent=0 // loop_footer
    %s15 = sadd.s32 1, %s11
  $region7: #{decoder_block_forward.1} parent=0 // loop_footer_branch
    %10 = sbr.rel target = $region3
  $region8: #{decoder_block_forward.1} parent=0 // loop_exit
    _

</llo_original>
